<compile_context>
chip_gen: v6e
topology: v6e:2x2x1
jax: 0.10.0
libtpu: 0.0.40
codegen_flags: <defaults>
</compile_context>

<pallas_src>
import math
from functools import partial

import jax
import jax.numpy as jnp
import numpy as np
from jax.experimental import pallas as pl
from jax.experimental.pallas import tpu as pltpu

# Order in which packed parameter arrays are handed to pallas_call / the kernel.
PACKED_ORDER = [
    "ln",                                        # (8, E): g_sa,b_sa,g_eda,b_eda,g_ff,b_ff,0,0
    "wqkv_sa", "bqkv_sa", "wo_sa", "bo_sa",
    "wq_ed", "bq_ed", "wkv_ed", "bkv_ed", "wo_ed", "bo_ed",
    "w0", "b0", "w1", "b1",
]


def _decoder_kernel(bb, S, H, Dh, scale,
                    x_ref, enc_ref, mask_ref,
                    ln_ref, wqkv_sa_ref, bqkv_sa_ref, wo_sa_ref, bo_sa_ref,
                    wq_ed_ref, bq_ed_ref, wkv_ed_ref, bkv_ed_ref,
                    wo_ed_ref, bo_ed_ref, w0_ref, b0_ref, w1_ref, b1_ref,
                    out_ref):
    E = x_ref.shape[2]
    HD = H * Dh
    M = bb * S

    x = x_ref[...].reshape(M, E)                 # (M, E) f32
    enc = enc_ref[...].reshape(M, E)

    # int8 mask -> int32 once; broadcast over heads once: (bb*H, S, S) bool.
    mask_i = mask_ref[...].astype(jnp.int32)     # (bb, S, S)
    mask_bh = jnp.concatenate(
        [jnp.broadcast_to(mask_i[b][None], (H, S, S)) for b in range(bb)],
        axis=0) != 0

    ln = ln_ref[...]                             # (8, E) f32

    def layernorm(v, g_row, b_row):
        mu = jnp.mean(v, axis=-1, keepdims=True)
        c = v - mu
        var = jnp.mean(c * c, axis=-1, keepdims=True)
        return c * jax.lax.rsqrt(var + 1e-5) * ln[g_row:g_row + 1] + ln[b_row:b_row + 1]

    def bf16(v):
        return v.astype(jnp.bfloat16)

    def dense(a, w_ref, b_ref):
        # bf16 x bf16 MXU matmul, f32 accumulation; bias added in f32.
        return jnp.dot(bf16(a), w_ref[...],
                       preferred_element_type=jnp.float32) + b_ref[...]

    def to_heads(a):
        # (M, HD) -> (bb*H, S, Dh): static row/lane slices stacked on a new
        # leading axis (no lane-splitting reshape / minor-dim transpose).
        return jnp.concatenate(
            [a[b * S:(b + 1) * S, h * Dh:(h + 1) * Dh][None]
             for b in range(bb) for h in range(H)], axis=0)

    def from_heads(z):
        # (bb*H, S, Dh) -> (M, HD): lane-dense concat of head contexts, kept in
        # registers (replaces the old masked-store VMEM slab round trip).
        rows = [jnp.concatenate([z[b * H + h] for h in range(H)], axis=-1)
                for b in range(bb)]
        return jnp.concatenate(rows, axis=0)

    def attention(q2d, k2d, v2d, wo_ref, bo_ref, mask):
        # q2d/k2d/v2d: (M, HD) f32, head-major along lanes. Cast to bf16 ONCE
        # (hoisted), then one head-batched QK^T, one softmax and one batched PV
        # matmul for all bb*H heads.
        q = to_heads(bf16(q2d))
        k = to_heads(bf16(k2d))
        v = to_heads(bf16(v2d))
        s = jax.lax.dot_general(q, k, (((2,), (2,)), ((0,), (0,))),
                                preferred_element_type=jnp.float32) * scale
        if mask is not None:
            # Finite large-negative instead of -inf: fully-masked rows degrade
            # to uniform instead of NaN (documented deviation from torch).
            s = jnp.where(mask, -1e30, s)
        s = s - jnp.max(s, axis=-1, keepdims=True)
        p = jnp.exp(s)
        p = p * pl.reciprocal(jnp.sum(p, axis=-1, keepdims=True), approx=True)
        z = jax.lax.dot_general(bf16(p), v, (((2,), (1,)), ((0,), (0,))),
                                preferred_element_type=jnp.float32)   # (bb*H, S, Dh)
        ctx = bf16(from_heads(z))                                     # (M, HD) lane-dense
        return jnp.dot(ctx, wo_ref[...],
                       preferred_element_type=jnp.float32) + bo_ref[...]

    # --- masked self-attention sub-layer (AddNormSA; dropout == identity) ---
    lx = layernorm(x, 0, 1)
    qkv = dense(lx, wqkv_sa_ref, bqkv_sa_ref)                 # (M, 3*HD)
    z1 = x + attention(qkv[:, 0:HD], qkv[:, HD:2 * HD], qkv[:, 2 * HD:3 * HD],
                       wo_sa_ref, bo_sa_ref, mask_bh)

    # --- encoder-decoder attention sub-layer (AddNormEDA; no mask) ---
    lz = layernorm(z1, 2, 3)
    le = layernorm(enc, 2, 3)
    q_ed = dense(lz, wq_ed_ref, bq_ed_ref)                    # (M, HD)
    kv = dense(le, wkv_ed_ref, bkv_ed_ref)                    # (M, 2*HD)
    z2 = z1 + attention(q_ed, kv[:, 0:HD], kv[:, HD:2 * HD],
                        wo_ed_ref, bo_ed_ref, None)

    # --- position-wise feed-forward sub-layer (AddNormFF) ---
    lf = layernorm(z2, 4, 5)
    hidden = jnp.maximum(dense(lf, w0_ref, b0_ref), 0.0)
    ff = dense(hidden, w1_ref, b1_ref)

    out_ref[...] = (z2 + ff).reshape(bb, S, E).astype(out_ref.dtype)


def _batch_block(B, S):
    # Process the whole batch in one grid step (maximize M per matmul, avoid
    # the ~0.35 us/step overhead).  Only split in two when each half would
    # still have >= 256 rows (v6e/v7x MXU row depth).  At B=2, S=16 -> bb=B,
    # grid=(1,) on every chip generation (no device-kind sniffing).
    if B % 2 == 0 and (B // 2) * S >= 256:
        return B // 2
    return B


def pack_params(p):
    """Restack per-head (torch-like) params into fused, MXU-friendly arrays."""
    H, E, Dh = p["wq_sa"].shape
    HD = H * Dh
    w_dt = jnp.bfloat16

    def fuse_w(*ws):        # each (H, E, Dh) -> (E, H*Dh); concat along lanes
        return jnp.concatenate(
            [w.transpose(1, 0, 2).reshape(E, HD) for w in ws], axis=-1).astype(w_dt)

    def fuse_b(*bs):        # each (H, 1, Dh) -> (1, H*Dh)
        return jnp.concatenate(
            [b.reshape(1, HD) for b in bs], axis=-1).astype(jnp.float32)

    ln = jnp.concatenate(
        [p["g_sa"], p["b_sa"], p["g_eda"], p["b_eda"], p["g_ff"], p["b_ff"],
         jnp.zeros((2, E), jnp.float32)], axis=0)             # (8, E)

    return {
        "ln": ln,
        "wqkv_sa": fuse_w(p["wq_sa"], p["wk_sa"], p["wv_sa"]),
        "bqkv_sa": fuse_b(p["bq_sa"], p["bk_sa"], p["bv_sa"]),
        "wo_sa": p["wo_sa"].reshape(HD, E).astype(w_dt),
        "bo_sa": p["bo_sa"].astype(jnp.float32),
        "wq_ed": fuse_w(p["wq_ed"]),
        "bq_ed": fuse_b(p["bq_ed"]),
        "wkv_ed": fuse_w(p["wk_ed"], p["wv_ed"]),
        "bkv_ed": fuse_b(p["bk_ed"], p["bv_ed"]),
        "wo_ed": p["wo_ed"].reshape(HD, E).astype(w_dt),
        "bo_ed": p["bo_ed"].astype(jnp.float32),
        "w0": p["w0"].astype(w_dt), "b0": p["b0"].astype(jnp.float32),
        "w1": p["w1"].astype(w_dt), "b1": p["b1"].astype(jnp.float32),
    }


def transformer_decoder(x, enc, mask, packed, *, nrof_heads):
    B, S, E = x.shape
    HD = packed["wq_ed"].shape[1]
    Dh = HD // nrof_heads
    scale = 1.0 / math.sqrt(Dh)

    bb = _batch_block(B, S)
    grid = (B // bb,)

    mask = mask.astype(jnp.int8)     # 4x smaller mask DMA than int32

    def rep_spec(arr):
        nd = arr.ndim
        return pl.BlockSpec(arr.shape, lambda i, _nd=nd: (0,) * _nd)

    in_specs = [
        pl.BlockSpec((bb, S, E), lambda i: (i, 0, 0)),   # x
        pl.BlockSpec((bb, S, E), lambda i: (i, 0, 0)),   # encoder_out
        pl.BlockSpec((bb, S, S), lambda i: (i, 0, 0)),   # mask (int8)
    ] + [rep_spec(packed[name]) for name in PACKED_ORDER]

    kernel = partial(_decoder_kernel, bb, S, nrof_heads, Dh, scale)

    return pl.pallas_call(
        kernel,
        out_shape=jax.ShapeDtypeStruct((B, S, E), jnp.float32),
        grid_spec=pltpu.PrefetchScalarGridSpec(
            num_scalar_prefetch=0,
            grid=grid,
            in_specs=in_specs,
            out_specs=pl.BlockSpec((bb, S, E), lambda i: (i, 0, 0)),
        ),
        compiler_params=pltpu.CompilerParams(
            dimension_semantics=("parallel",),
        ),
    )(x, enc, mask, *[packed[name] for name in PACKED_ORDER])


def ref_decoder(x, enc, mask, p):
    """Pure-JAX f32 reference mirroring the PyTorch forward (dropout = identity)."""
    def ln(v, g, b):
        mu = v.mean(-1, keepdims=True)
        var = ((v - mu) ** 2).mean(-1, keepdims=True)
        return (v - mu) / jnp.sqrt(var + 1e-5) * g + b

    def attn(lq, lk, lv, wq, bq, wk, bk, wv, bv, wo, bo, m):
        q = jnp.einsum("bse,hed->bhsd", lq, wq) + bq[None]
        k = jnp.einsum("bse,hed->bhsd", lk, wk) + bk[None]
        v = jnp.einsum("bse,hed->bhsd", lv, wv) + bv[None]
        s = jnp.einsum("bhqd,bhkd->bhqk", q, k) / math.sqrt(q.shape[-1])
        if m is not None:
            s = jnp.where(m[:, None] != 0, -jnp.inf, s)
        pr = jax.nn.softmax(s, axis=-1)
        z = jnp.einsum("bhqk,bhkd->bhqd", pr, v)
        return jnp.einsum("bhqd,hde->bqe", z, wo) + bo[None]

    lx = ln(x, p["g_sa"], p["b_sa"])
    z1 = x + attn(lx, lx, lx, p["wq_sa"], p["bq_sa"], p["wk_sa"], p["bk_sa"],
                  p["wv_sa"], p["bv_sa"], p["wo_sa"], p["bo_sa"], mask)
    lz = ln(z1, p["g_eda"], p["b_eda"])
    le = ln(enc, p["g_eda"], p["b_eda"])
    z2 = z1 + attn(lz, le, le, p["wq_ed"], p["bq_ed"], p["wk_ed"], p["bk_ed"],
                   p["wv_ed"], p["bv_ed"], p["wo_ed"], p["bo_ed"], None)
    lf = ln(z2, p["g_ff"], p["b_ff"])
    hid = jnp.maximum(lf @ p["w0"] + p["b0"], 0.0)
    return z2 + hid @ p["w1"] + p["b1"]


if __name__ == "__main__":
    # Small shapes consistent with the module's forward.
    B, S, E, H, Dh, F = 2, 16, 128, 4, 32, 256

    key = jax.random.PRNGKey(0)
    keys = jax.random.split(key, 16)

    def nrm(k, shape, std):
        return (std * jax.random.normal(k, shape)).astype(jnp.float32)

    std_qkv = math.sqrt(2.0 / (E + 4 * Dh))   # SDPAttention WQ/WK/WV init
    std_wo = math.sqrt(2.0 / (E + 4 * E))     # MHAttetion WO init
    std_ff = math.sqrt(2.0 / (E + F))         # FF fc_0 / fc_1 init

    params = {
        # LayerNorm params (default torch init: weight=1, bias=0)
        "g_sa": jnp.ones((1, E), jnp.float32),  "b_sa": jnp.zeros((1, E), jnp.float32),
        "g_eda": jnp.ones((1, E), jnp.float32), "b_eda": jnp.zeros((1, E), jnp.float32),
        "g_ff": jnp.ones((1, E), jnp.float32),  "b_ff": jnp.zeros((1, E), jnp.float32),
        # Self-attention heads (input-major per-head weights)
        "wq_sa": nrm(keys[0], (H, E, Dh), std_qkv), "bq_sa": jnp.zeros((H, 1, Dh), jnp.float32),
        "wk_sa": nrm(keys[1], (H, E, Dh), std_qkv), "bk_sa": jnp.zeros((H, 1, Dh), jnp.float32),
        "wv_sa": nrm(keys[2], (H, E, Dh), std_qkv), "bv_sa": jnp.zeros((H, 1, Dh), jnp.float32),
        "wo_sa": nrm(keys[3], (H, Dh, E), std_wo),  "bo_sa": jnp.zeros((1, E), jnp.float32),
        # Encoder-decoder attention heads
        "wq_ed": nrm(keys[4], (H, E, Dh), std_qkv), "bq_ed": jnp.zeros((H, 1, Dh), jnp.float32),
        "wk_ed": nrm(keys[5], (H, E, Dh), std_qkv), "bk_ed": jnp.zeros((H, 1, Dh), jnp.float32),
        "wv_ed": nrm(keys[6], (H, E, Dh), std_qkv), "bv_ed": jnp.zeros((H, 1, Dh), jnp.float32),
        "wo_ed": nrm(keys[7], (H, Dh, E), std_wo),  "bo_ed": jnp.zeros((1, E), jnp.float32),
        # Feed-forward
        "w0": nrm(keys[8], (E, F), std_ff), "b0": jnp.zeros((1, F), jnp.float32),
        "w1": nrm(keys[9], (F, E), std_ff), "b1": jnp.zeros((1, E), jnp.float32),
    }

    x = jax.random.normal(keys[10], (B, S, E), jnp.float32)
    encoder_out = jax.random.normal(keys[11], (B, S, E), jnp.float32)
    # Causal mask (nonzero == masked position), as in scores[mask] = -inf.
    causal = (jnp.arange(S)[None, :] > jnp.arange(S)[:, None]).astype(jnp.int32)
    mask = jnp.broadcast_to(causal, (B, S, S))

    packed = pack_params(params)
    out = jax.block_until_ready(
        transformer_decoder(x, encoder_out, mask, packed, nrof_heads=H))
    ref = jax.block_until_ready(ref_decoder(x, encoder_out, mask, params))

    assert out.shape == (B, S, E)
    assert not np.any(np.isnan(np.asarray(out)))
    np.testing.assert_allclose(np.asarray(out), np.asarray(ref), rtol=5e-2, atol=5e-2)
    print("KERNEL_OK")
</pallas_src>

<mosaic_0001>
module attributes {stable_mosaic.version = 11 : i64} {
  func.func @_decoder_kernel(%arg0: i32, %arg1: memref<2x16x128xf32, #tpu.memory_space<vmem>>, %arg2: memref<2x16x128xf32, #tpu.memory_space<vmem>>, %arg3: memref<2x16x16xi8, #tpu.memory_space<vmem>>, %arg4: memref<8x128xf32, #tpu.memory_space<vmem>>, %arg5: memref<128x384xbf16, #tpu.memory_space<vmem>>, %arg6: memref<1x384xf32, #tpu.memory_space<vmem>>, %arg7: memref<128x128xbf16, #tpu.memory_space<vmem>>, %arg8: memref<1x128xf32, #tpu.memory_space<vmem>>, %arg9: memref<128x128xbf16, #tpu.memory_space<vmem>>, %arg10: memref<1x128xf32, #tpu.memory_space<vmem>>, %arg11: memref<128x256xbf16, #tpu.memory_space<vmem>>, %arg12: memref<1x256xf32, #tpu.memory_space<vmem>>, %arg13: memref<128x128xbf16, #tpu.memory_space<vmem>>, %arg14: memref<1x128xf32, #tpu.memory_space<vmem>>, %arg15: memref<128x256xbf16, #tpu.memory_space<vmem>>, %arg16: memref<1x256xf32, #tpu.memory_space<vmem>>, %arg17: memref<256x128xbf16, #tpu.memory_space<vmem>>, %arg18: memref<1x128xf32, #tpu.memory_space<vmem>>, %arg19: memref<2x16x128xf32, #tpu.memory_space<vmem>>) attributes {dimension_semantics = [#tpu.dimension_semantics<parallel>], iteration_bounds = array<i64: 1>, scalar_prefetch = 0 : i64, scratch_operands = 0 : i64, tpu.core_type = #tpu.core_type<tc>, window_params = [{transform_indices = @transform_0, window_bounds = array<i64: 2, 16, 128>}, {transform_indices = @transform_1, window_bounds = array<i64: 2, 16, 128>}, {transform_indices = @transform_2, window_bounds = array<i64: 2, 16, 16>}, {pipeline_mode = #tpu.pipeline_mode<synchronous>, transform_indices = @transform_3, window_bounds = array<i64: 8, 128>}, {pipeline_mode = #tpu.pipeline_mode<synchronous>, transform_indices = @transform_4, window_bounds = array<i64: 128, 384>}, {pipeline_mode = #tpu.pipeline_mode<synchronous>, transform_indices = @transform_5, window_bounds = array<i64: 1, 384>}, {pipeline_mode = #tpu.pipeline_mode<synchronous>, transform_indices = @transform_6, window_bounds = array<i64: 128, 128>}, {pipeline_mode = #tpu.pipeline_mode<synchronous>, transform_indices = @transform_7, window_bounds = array<i64: 1, 128>}, {pipeline_mode = #tpu.pipeline_mode<synchronous>, transform_indices = @transform_8, window_bounds = array<i64: 128, 128>}, {pipeline_mode = #tpu.pipeline_mode<synchronous>, transform_indices = @transform_9, window_bounds = array<i64: 1, 128>}, {pipeline_mode = #tpu.pipeline_mode<synchronous>, transform_indices = @transform_10, window_bounds = array<i64: 128, 256>}, {pipeline_mode = #tpu.pipeline_mode<synchronous>, transform_indices = @transform_11, window_bounds = array<i64: 1, 256>}, {pipeline_mode = #tpu.pipeline_mode<synchronous>, transform_indices = @transform_12, window_bounds = array<i64: 128, 128>}, {pipeline_mode = #tpu.pipeline_mode<synchronous>, transform_indices = @transform_13, window_bounds = array<i64: 1, 128>}, {pipeline_mode = #tpu.pipeline_mode<synchronous>, transform_indices = @transform_14, window_bounds = array<i64: 128, 256>}, {pipeline_mode = #tpu.pipeline_mode<synchronous>, transform_indices = @transform_15, window_bounds = array<i64: 1, 256>}, {pipeline_mode = #tpu.pipeline_mode<synchronous>, transform_indices = @transform_16, window_bounds = array<i64: 256, 128>}, {pipeline_mode = #tpu.pipeline_mode<synchronous>, transform_indices = @transform_17, window_bounds = array<i64: 1, 128>}, {transform_indices = @transform_18, window_bounds = array<i64: 2, 16, 128>}]} {
    %c0 = arith.constant 0 : index
    %c0_0 = arith.constant 0 : index
    %c0_1 = arith.constant 0 : index
    %0 = vector.load %arg1[%c0, %c0_0, %c0_1] : memref<2x16x128xf32, #tpu.memory_space<vmem>>, vector<2x16x128xf32>
    %1 = vector.shape_cast %0 : vector<2x16x128xf32> to vector<32x128xf32>
    %c0_2 = arith.constant 0 : index
    %c0_3 = arith.constant 0 : index
    %c0_4 = arith.constant 0 : index
    %2 = vector.load %arg2[%c0_2, %c0_3, %c0_4] : memref<2x16x128xf32, #tpu.memory_space<vmem>>, vector<2x16x128xf32>
    %3 = vector.shape_cast %2 : vector<2x16x128xf32> to vector<32x128xf32>
    %c0_5 = arith.constant 0 : index
    %c0_6 = arith.constant 0 : index
    %c0_7 = arith.constant 0 : index
    %4 = vector.load %arg3[%c0_5, %c0_6, %c0_7] : memref<2x16x16xi8, #tpu.memory_space<vmem>>, vector<2x16x16xi8>
    %5 = arith.extsi %4 : vector<2x16x16xi8> to vector<2x16x16xi32>
    %6 = vector.extract_strided_slice %5 {offsets = [0, 0, 0], sizes = [1, 16, 16], strides = [1, 1, 1]} : vector<2x16x16xi32> to vector<1x16x16xi32>
    %7 = vector.shape_cast %6 : vector<1x16x16xi32> to vector<16x16xi32>
    %8 = vector.shape_cast %7 : vector<16x16xi32> to vector<1x16x16xi32>
    %9 = vector.shape_cast %8 : vector<1x16x16xi32> to vector<1x16x16xi32>
    %10 = vector.broadcast %9 : vector<1x16x16xi32> to vector<4x16x16xi32>
    %11 = vector.extract_strided_slice %5 {offsets = [1, 0, 0], sizes = [1, 16, 16], strides = [1, 1, 1]} : vector<2x16x16xi32> to vector<1x16x16xi32>
    %12 = vector.shape_cast %11 : vector<1x16x16xi32> to vector<16x16xi32>
    %13 = vector.shape_cast %12 : vector<16x16xi32> to vector<1x16x16xi32>
    %14 = vector.shape_cast %13 : vector<1x16x16xi32> to vector<1x16x16xi32>
    %15 = vector.broadcast %14 : vector<1x16x16xi32> to vector<4x16x16xi32>
    %16 = tpu.concatenate %10, %15 in 0 : vector<4x16x16xi32>, vector<4x16x16xi32> -> vector<8x16x16xi32>
    %c0_i32 = arith.constant 0 : i32
    %17 = vector.broadcast %c0_i32 : i32 to vector<8x16x16xi32>
    %18 = arith.cmpi ne, %16, %17 : vector<8x16x16xi32>
    %c0_8 = arith.constant 0 : index
    %c0_9 = arith.constant 0 : index
    %19 = vector.load %arg4[%c0_8, %c0_9] : memref<8x128xf32, #tpu.memory_space<vmem>>, vector<8x128xf32>
    %cst = arith.constant dense<0.000000e+00> : vector<32xf32>
    %20 = vector.multi_reduction <add>, %1, %cst [1] : vector<32x128xf32> to vector<32xf32>
    %21 = vector.shape_cast %20 : vector<32xf32> to vector<32x1xf32>
    %cst_10 = arith.constant 1.280000e+02 : f32
    %22 = vector.broadcast %cst_10 : f32 to vector<32x1xf32>
    %23 = arith.divf %21, %22 : vector<32x1xf32>
    %24 = vector.broadcast %23 : vector<32x1xf32> to vector<32x128xf32>
    %25 = arith.subf %1, %24 : vector<32x128xf32>
    %26 = arith.mulf %25, %25 : vector<32x128xf32>
    %cst_11 = arith.constant dense<0.000000e+00> : vector<32xf32>
    %27 = vector.multi_reduction <add>, %26, %cst_11 [1] : vector<32x128xf32> to vector<32xf32>
    %28 = vector.shape_cast %27 : vector<32xf32> to vector<32x1xf32>
    %cst_12 = arith.constant 1.280000e+02 : f32
    %29 = vector.broadcast %cst_12 : f32 to vector<32x1xf32>
    %30 = arith.divf %28, %29 : vector<32x1xf32>
    %cst_13 = arith.constant 9.99999974E-6 : f32
    %31 = vector.broadcast %cst_13 : f32 to vector<32x1xf32>
    %32 = arith.addf %30, %31 : vector<32x1xf32>
    %33 = math.rsqrt %32 : vector<32x1xf32>
    %34 = vector.broadcast %33 : vector<32x1xf32> to vector<32x128xf32>
    %35 = arith.mulf %25, %34 : vector<32x128xf32>
    %36 = vector.extract_strided_slice %19 {offsets = [0, 0], sizes = [1, 128], strides = [1, 1]} : vector<8x128xf32> to vector<1x128xf32>
    %37 = vector.broadcast %36 : vector<1x128xf32> to vector<32x128xf32>
    %38 = arith.mulf %35, %37 : vector<32x128xf32>
    %39 = vector.extract_strided_slice %19 {offsets = [1, 0], sizes = [1, 128], strides = [1, 1]} : vector<8x128xf32> to vector<1x128xf32>
    %40 = vector.broadcast %39 : vector<1x128xf32> to vector<32x128xf32>
    %41 = arith.addf %38, %40 : vector<32x128xf32>
    %42 = arith.truncf %41 : vector<32x128xf32> to vector<32x128xbf16>
    %c0_14 = arith.constant 0 : index
    %c0_15 = arith.constant 0 : index
    %43 = vector.load %arg5[%c0_14, %c0_15] : memref<128x384xbf16, #tpu.memory_space<vmem>>, vector<128x384xbf16>
    %cst_16 = arith.constant dense<0.000000e+00> : vector<32x384xf32>
    %44 = tpu.matmul %42, %43, %cst_16 {dimension_numbers = #tpu.dot_dimension_numbers<[1], [0], [0], [1], [0, 0, 1, 1], [], []>} : vector<32x128xbf16>, vector<128x384xbf16>, vector<32x384xf32> -> vector<32x384xf32>
    %c0_17 = arith.constant 0 : index
    %c0_18 = arith.constant 0 : index
    %45 = vector.load %arg6[%c0_17, %c0_18] : memref<1x384xf32, #tpu.memory_space<vmem>>, vector<1x384xf32>
    %46 = vector.broadcast %45 : vector<1x384xf32> to vector<32x384xf32>
    %47 = arith.addf %44, %46 : vector<32x384xf32>
    %48 = vector.extract_strided_slice %47 {offsets = [0, 0], sizes = [32, 128], strides = [1, 1]} : vector<32x384xf32> to vector<32x128xf32>
    %49 = vector.extract_strided_slice %47 {offsets = [0, 128], sizes = [32, 128], strides = [1, 1]} : vector<32x384xf32> to vector<32x128xf32>
    %50 = vector.extract_strided_slice %47 {offsets = [0, 256], sizes = [32, 128], strides = [1, 1]} : vector<32x384xf32> to vector<32x128xf32>
    %51 = arith.truncf %48 : vector<32x128xf32> to vector<32x128xbf16>
    %52 = vector.extract_strided_slice %51 {offsets = [0, 0], sizes = [16, 32], strides = [1, 1]} : vector<32x128xbf16> to vector<16x32xbf16>
    %53 = vector.shape_cast %52 : vector<16x32xbf16> to vector<1x16x32xbf16>
    %54 = vector.extract_strided_slice %51 {offsets = [0, 32], sizes = [16, 32], strides = [1, 1]} : vector<32x128xbf16> to vector<16x32xbf16>
    %55 = vector.shape_cast %54 : vector<16x32xbf16> to vector<1x16x32xbf16>
    %56 = vector.extract_strided_slice %51 {offsets = [0, 64], sizes = [16, 32], strides = [1, 1]} : vector<32x128xbf16> to vector<16x32xbf16>
    %57 = vector.shape_cast %56 : vector<16x32xbf16> to vector<1x16x32xbf16>
    %58 = vector.extract_strided_slice %51 {offsets = [0, 96], sizes = [16, 32], strides = [1, 1]} : vector<32x128xbf16> to vector<16x32xbf16>
    %59 = vector.shape_cast %58 : vector<16x32xbf16> to vector<1x16x32xbf16>
    %60 = vector.extract_strided_slice %51 {offsets = [16, 0], sizes = [16, 32], strides = [1, 1]} : vector<32x128xbf16> to vector<16x32xbf16>
    %61 = vector.shape_cast %60 : vector<16x32xbf16> to vector<1x16x32xbf16>
    %62 = vector.extract_strided_slice %51 {offsets = [16, 32], sizes = [16, 32], strides = [1, 1]} : vector<32x128xbf16> to vector<16x32xbf16>
    %63 = vector.shape_cast %62 : vector<16x32xbf16> to vector<1x16x32xbf16>
    %64 = vector.extract_strided_slice %51 {offsets = [16, 64], sizes = [16, 32], strides = [1, 1]} : vector<32x128xbf16> to vector<16x32xbf16>
    %65 = vector.shape_cast %64 : vector<16x32xbf16> to vector<1x16x32xbf16>
    %66 = vector.extract_strided_slice %51 {offsets = [16, 96], sizes = [16, 32], strides = [1, 1]} : vector<32x128xbf16> to vector<16x32xbf16>
    %67 = vector.shape_cast %66 : vector<16x32xbf16> to vector<1x16x32xbf16>
    %68 = tpu.concatenate %53, %55, %57, %59, %61, %63, %65, %67 in 0 : vector<1x16x32xbf16>, vector<1x16x32xbf16>, vector<1x16x32xbf16>, vector<1x16x32xbf16>, vector<1x16x32xbf16>, vector<1x16x32xbf16>, vector<1x16x32xbf16>, vector<1x16x32xbf16> -> vector<8x16x32xbf16>
    %69 = arith.truncf %49 : vector<32x128xf32> to vector<32x128xbf16>
    %70 = vector.extract_strided_slice %69 {offsets = [0, 0], sizes = [16, 32], strides = [1, 1]} : vector<32x128xbf16> to vector<16x32xbf16>
    %71 = vector.shape_cast %70 : vector<16x32xbf16> to vector<1x16x32xbf16>
    %72 = vector.extract_strided_slice %69 {offsets = [0, 32], sizes = [16, 32], strides = [1, 1]} : vector<32x128xbf16> to vector<16x32xbf16>
    %73 = vector.shape_cast %72 : vector<16x32xbf16> to vector<1x16x32xbf16>
    %74 = vector.extract_strided_slice %69 {offsets = [0, 64], sizes = [16, 32], strides = [1, 1]} : vector<32x128xbf16> to vector<16x32xbf16>
    %75 = vector.shape_cast %74 : vector<16x32xbf16> to vector<1x16x32xbf16>
    %76 = vector.extract_strided_slice %69 {offsets = [0, 96], sizes = [16, 32], strides = [1, 1]} : vector<32x128xbf16> to vector<16x32xbf16>
    %77 = vector.shape_cast %76 : vector<16x32xbf16> to vector<1x16x32xbf16>
    %78 = vector.extract_strided_slice %69 {offsets = [16, 0], sizes = [16, 32], strides = [1, 1]} : vector<32x128xbf16> to vector<16x32xbf16>
    %79 = vector.shape_cast %78 : vector<16x32xbf16> to vector<1x16x32xbf16>
    %80 = vector.extract_strided_slice %69 {offsets = [16, 32], sizes = [16, 32], strides = [1, 1]} : vector<32x128xbf16> to vector<16x32xbf16>
    %81 = vector.shape_cast %80 : vector<16x32xbf16> to vector<1x16x32xbf16>
    %82 = vector.extract_strided_slice %69 {offsets = [16, 64], sizes = [16, 32], strides = [1, 1]} : vector<32x128xbf16> to vector<16x32xbf16>
    %83 = vector.shape_cast %82 : vector<16x32xbf16> to vector<1x16x32xbf16>
    %84 = vector.extract_strided_slice %69 {offsets = [16, 96], sizes = [16, 32], strides = [1, 1]} : vector<32x128xbf16> to vector<16x32xbf16>
    %85 = vector.shape_cast %84 : vector<16x32xbf16> to vector<1x16x32xbf16>
    %86 = tpu.concatenate %71, %73, %75, %77, %79, %81, %83, %85 in 0 : vector<1x16x32xbf16>, vector<1x16x32xbf16>, vector<1x16x32xbf16>, vector<1x16x32xbf16>, vector<1x16x32xbf16>, vector<1x16x32xbf16>, vector<1x16x32xbf16>, vector<1x16x32xbf16> -> vector<8x16x32xbf16>
    %87 = arith.truncf %50 : vector<32x128xf32> to vector<32x128xbf16>
    %88 = vector.extract_strided_slice %87 {offsets = [0, 0], sizes = [16, 32], strides = [1, 1]} : vector<32x128xbf16> to vector<16x32xbf16>
    %89 = vector.shape_cast %88 : vector<16x32xbf16> to vector<1x16x32xbf16>
    %90 = vector.extract_strided_slice %87 {offsets = [0, 32], sizes = [16, 32], strides = [1, 1]} : vector<32x128xbf16> to vector<16x32xbf16>
    %91 = vector.shape_cast %90 : vector<16x32xbf16> to vector<1x16x32xbf16>
    %92 = vector.extract_strided_slice %87 {offsets = [0, 64], sizes = [16, 32], strides = [1, 1]} : vector<32x128xbf16> to vector<16x32xbf16>
    %93 = vector.shape_cast %92 : vector<16x32xbf16> to vector<1x16x32xbf16>
    %94 = vector.extract_strided_slice %87 {offsets = [0, 96], sizes = [16, 32], strides = [1, 1]} : vector<32x128xbf16> to vector<16x32xbf16>
    %95 = vector.shape_cast %94 : vector<16x32xbf16> to vector<1x16x32xbf16>
    %96 = vector.extract_strided_slice %87 {offsets = [16, 0], sizes = [16, 32], strides = [1, 1]} : vector<32x128xbf16> to vector<16x32xbf16>
    %97 = vector.shape_cast %96 : vector<16x32xbf16> to vector<1x16x32xbf16>
    %98 = vector.extract_strided_slice %87 {offsets = [16, 32], sizes = [16, 32], strides = [1, 1]} : vector<32x128xbf16> to vector<16x32xbf16>
    %99 = vector.shape_cast %98 : vector<16x32xbf16> to vector<1x16x32xbf16>
    %100 = vector.extract_strided_slice %87 {offsets = [16, 64], sizes = [16, 32], strides = [1, 1]} : vector<32x128xbf16> to vector<16x32xbf16>
    %101 = vector.shape_cast %100 : vector<16x32xbf16> to vector<1x16x32xbf16>
    %102 = vector.extract_strided_slice %87 {offsets = [16, 96], sizes = [16, 32], strides = [1, 1]} : vector<32x128xbf16> to vector<16x32xbf16>
    %103 = vector.shape_cast %102 : vector<16x32xbf16> to vector<1x16x32xbf16>
    %104 = tpu.concatenate %89, %91, %93, %95, %97, %99, %101, %103 in 0 : vector<1x16x32xbf16>, vector<1x16x32xbf16>, vector<1x16x32xbf16>, vector<1x16x32xbf16>, vector<1x16x32xbf16>, vector<1x16x32xbf16>, vector<1x16x32xbf16>, vector<1x16x32xbf16> -> vector<8x16x32xbf16>
    %cst_19 = arith.constant dense<0.000000e+00> : vector<8x16x16xf32>
    %105 = tpu.matmul %68, %86, %cst_19 {dimension_numbers = #tpu.dot_dimension_numbers<[2], [2], [1], [1], [0, 0, 0, 1, 1, 1], [0], [0]>} : vector<8x16x32xbf16>, vector<8x16x32xbf16>, vector<8x16x16xf32> -> vector<8x16x16xf32>
    %cst_20 = arith.constant 0.176776692 : f32
    %106 = vector.broadcast %cst_20 : f32 to vector<8x16x16xf32>
    %107 = arith.mulf %105, %106 : vector<8x16x16xf32>
    %cst_21 = arith.constant -1.000000e+30 : f32
    %108 = vector.broadcast %cst_21 : f32 to vector<8x16x16xf32>
    %109 = arith.select %18, %108, %107 : vector<8x16x16xi1>, vector<8x16x16xf32>
    %cst_22 = arith.constant dense<0xFF800000> : vector<8x16xf32>
    %110 = vector.multi_reduction <maximumf>, %109, %cst_22 [2] : vector<8x16x16xf32> to vector<8x16xf32>
    %111 = vector.shape_cast %110 : vector<8x16xf32> to vector<8x16x1xf32>
    %112 = vector.broadcast %111 : vector<8x16x1xf32> to vector<8x16x16xf32>
    %113 = arith.subf %109, %112 : vector<8x16x16xf32>
    %114 = math.exp %113 : vector<8x16x16xf32>
    %cst_23 = arith.constant dense<0.000000e+00> : vector<8x16xf32>
    %115 = vector.multi_reduction <add>, %114, %cst_23 [2] : vector<8x16x16xf32> to vector<8x16xf32>
    %116 = vector.shape_cast %115 : vector<8x16xf32> to vector<8x16x1xf32>
    %117 = tpu.reciprocal %116 {approx = true} : vector<8x16x1xf32> -> vector<8x16x1xf32>
    %118 = vector.broadcast %117 : vector<8x16x1xf32> to vector<8x16x16xf32>
    %119 = arith.mulf %114, %118 : vector<8x16x16xf32>
    %120 = arith.truncf %119 : vector<8x16x16xf32> to vector<8x16x16xbf16>
    %cst_24 = arith.constant dense<0.000000e+00> : vector<8x16x32xf32>
    %121 = tpu.matmul %120, %104, %cst_24 {dimension_numbers = #tpu.dot_dimension_numbers<[2], [1], [1], [2], [0, 0, 0, 1, 1, 2], [0], [0]>} : vector<8x16x16xbf16>, vector<8x16x32xbf16>, vector<8x16x32xf32> -> vector<8x16x32xf32>
    %122 = vector.extract_strided_slice %121 {offsets = [0, 0, 0], sizes = [1, 16, 32], strides = [1, 1, 1]} : vector<8x16x32xf32> to vector<1x16x32xf32>
    %123 = vector.shape_cast %122 : vector<1x16x32xf32> to vector<16x32xf32>
    %124 = vector.extract_strided_slice %121 {offsets = [1, 0, 0], sizes = [1, 16, 32], strides = [1, 1, 1]} : vector<8x16x32xf32> to vector<1x16x32xf32>
    %125 = vector.shape_cast %124 : vector<1x16x32xf32> to vector<16x32xf32>
    %126 = vector.extract_strided_slice %121 {offsets = [2, 0, 0], sizes = [1, 16, 32], strides = [1, 1, 1]} : vector<8x16x32xf32> to vector<1x16x32xf32>
    %127 = vector.shape_cast %126 : vector<1x16x32xf32> to vector<16x32xf32>
    %128 = vector.extract_strided_slice %121 {offsets = [3, 0, 0], sizes = [1, 16, 32], strides = [1, 1, 1]} : vector<8x16x32xf32> to vector<1x16x32xf32>
    %129 = vector.shape_cast %128 : vector<1x16x32xf32> to vector<16x32xf32>
    %130 = tpu.concatenate %123, %125, %127, %129 in 1 : vector<16x32xf32>, vector<16x32xf32>, vector<16x32xf32>, vector<16x32xf32> -> vector<16x128xf32>
    %131 = vector.extract_strided_slice %121 {offsets = [4, 0, 0], sizes = [1, 16, 32], strides = [1, 1, 1]} : vector<8x16x32xf32> to vector<1x16x32xf32>
    %132 = vector.shape_cast %131 : vector<1x16x32xf32> to vector<16x32xf32>
    %133 = vector.extract_strided_slice %121 {offsets = [5, 0, 0], sizes = [1, 16, 32], strides = [1, 1, 1]} : vector<8x16x32xf32> to vector<1x16x32xf32>
    %134 = vector.shape_cast %133 : vector<1x16x32xf32> to vector<16x32xf32>
    %135 = vector.extract_strided_slice %121 {offsets = [6, 0, 0], sizes = [1, 16, 32], strides = [1, 1, 1]} : vector<8x16x32xf32> to vector<1x16x32xf32>
    %136 = vector.shape_cast %135 : vector<1x16x32xf32> to vector<16x32xf32>
    %137 = vector.extract_strided_slice %121 {offsets = [7, 0, 0], sizes = [1, 16, 32], strides = [1, 1, 1]} : vector<8x16x32xf32> to vector<1x16x32xf32>
    %138 = vector.shape_cast %137 : vector<1x16x32xf32> to vector<16x32xf32>
    %139 = tpu.concatenate %132, %134, %136, %138 in 1 : vector<16x32xf32>, vector<16x32xf32>, vector<16x32xf32>, vector<16x32xf32> -> vector<16x128xf32>
    %140 = tpu.concatenate %130, %139 in 0 : vector<16x128xf32>, vector<16x128xf32> -> vector<32x128xf32>
    %141 = arith.truncf %140 : vector<32x128xf32> to vector<32x128xbf16>
    %c0_25 = arith.constant 0 : index
    %c0_26 = arith.constant 0 : index
    %142 = vector.load %arg7[%c0_25, %c0_26] : memref<128x128xbf16, #tpu.memory_space<vmem>>, vector<128x128xbf16>
    %cst_27 = arith.constant dense<0.000000e+00> : vector<32x128xf32>
    %143 = tpu.matmul %141, %142, %cst_27 {dimension_numbers = #tpu.dot_dimension_numbers<[1], [0], [0], [1], [0, 0, 1, 1], [], []>} : vector<32x128xbf16>, vector<128x128xbf16>, vector<32x128xf32> -> vector<32x128xf32>
    %c0_28 = arith.constant 0 : index
    %c0_29 = arith.constant 0 : index
    %144 = vector.load %arg8[%c0_28, %c0_29] : memref<1x128xf32, #tpu.memory_space<vmem>>, vector<1x128xf32>
    %145 = vector.broadcast %144 : vector<1x128xf32> to vector<32x128xf32>
    %146 = arith.addf %143, %145 : vector<32x128xf32>
    %147 = arith.addf %1, %146 : vector<32x128xf32>
    %cst_30 = arith.constant dense<0.000000e+00> : vector<32xf32>
    %148 = vector.multi_reduction <add>, %147, %cst_30 [1] : vector<32x128xf32> to vector<32xf32>
    %149 = vector.shape_cast %148 : vector<32xf32> to vector<32x1xf32>
    %cst_31 = arith.constant 1.280000e+02 : f32
    %150 = vector.broadcast %cst_31 : f32 to vector<32x1xf32>
    %151 = arith.divf %149, %150 : vector<32x1xf32>
    %152 = vector.broadcast %151 : vector<32x1xf32> to vector<32x128xf32>
    %153 = arith.subf %147, %152 : vector<32x128xf32>
    %154 = arith.mulf %153, %153 : vector<32x128xf32>
    %cst_32 = arith.constant dense<0.000000e+00> : vector<32xf32>
    %155 = vector.multi_reduction <add>, %154, %cst_32 [1] : vector<32x128xf32> to vector<32xf32>
    %156 = vector.shape_cast %155 : vector<32xf32> to vector<32x1xf32>
    %cst_33 = arith.constant 1.280000e+02 : f32
    %157 = vector.broadcast %cst_33 : f32 to vector<32x1xf32>
    %158 = arith.divf %156, %157 : vector<32x1xf32>
    %cst_34 = arith.constant 9.99999974E-6 : f32
    %159 = vector.broadcast %cst_34 : f32 to vector<32x1xf32>
    %160 = arith.addf %158, %159 : vector<32x1xf32>
    %161 = math.rsqrt %160 : vector<32x1xf32>
    %162 = vector.broadcast %161 : vector<32x1xf32> to vector<32x128xf32>
    %163 = arith.mulf %153, %162 : vector<32x128xf32>
    %164 = vector.extract_strided_slice %19 {offsets = [2, 0], sizes = [1, 128], strides = [1, 1]} : vector<8x128xf32> to vector<1x128xf32>
    %165 = vector.broadcast %164 : vector<1x128xf32> to vector<32x128xf32>
    %166 = arith.mulf %163, %165 : vector<32x128xf32>
    %167 = vector.extract_strided_slice %19 {offsets = [3, 0], sizes = [1, 128], strides = [1, 1]} : vector<8x128xf32> to vector<1x128xf32>
    %168 = vector.broadcast %167 : vector<1x128xf32> to vector<32x128xf32>
    %169 = arith.addf %166, %168 : vector<32x128xf32>
    %cst_35 = arith.constant dense<0.000000e+00> : vector<32xf32>
    %170 = vector.multi_reduction <add>, %3, %cst_35 [1] : vector<32x128xf32> to vector<32xf32>
    %171 = vector.shape_cast %170 : vector<32xf32> to vector<32x1xf32>
    %cst_36 = arith.constant 1.280000e+02 : f32
    %172 = vector.broadcast %cst_36 : f32 to vector<32x1xf32>
    %173 = arith.divf %171, %172 : vector<32x1xf32>
    %174 = vector.broadcast %173 : vector<32x1xf32> to vector<32x128xf32>
    %175 = arith.subf %3, %174 : vector<32x128xf32>
    %176 = arith.mulf %175, %175 : vector<32x128xf32>
    %cst_37 = arith.constant dense<0.000000e+00> : vector<32xf32>
    %177 = vector.multi_reduction <add>, %176, %cst_37 [1] : vector<32x128xf32> to vector<32xf32>
    %178 = vector.shape_cast %177 : vector<32xf32> to vector<32x1xf32>
    %cst_38 = arith.constant 1.280000e+02 : f32
    %179 = vector.broadcast %cst_38 : f32 to vector<32x1xf32>
    %180 = arith.divf %178, %179 : vector<32x1xf32>
    %cst_39 = arith.constant 9.99999974E-6 : f32
    %181 = vector.broadcast %cst_39 : f32 to vector<32x1xf32>
    %182 = arith.addf %180, %181 : vector<32x1xf32>
    %183 = math.rsqrt %182 : vector<32x1xf32>
    %184 = vector.broadcast %183 : vector<32x1xf32> to vector<32x128xf32>
    %185 = arith.mulf %175, %184 : vector<32x128xf32>
    %186 = vector.extract_strided_slice %19 {offsets = [2, 0], sizes = [1, 128], strides = [1, 1]} : vector<8x128xf32> to vector<1x128xf32>
    %187 = vector.broadcast %186 : vector<1x128xf32> to vector<32x128xf32>
    %188 = arith.mulf %185, %187 : vector<32x128xf32>
    %189 = vector.extract_strided_slice %19 {offsets = [3, 0], sizes = [1, 128], strides = [1, 1]} : vector<8x128xf32> to vector<1x128xf32>
    %190 = vector.broadcast %189 : vector<1x128xf32> to vector<32x128xf32>
    %191 = arith.addf %188, %190 : vector<32x128xf32>
    %192 = arith.truncf %169 : vector<32x128xf32> to vector<32x128xbf16>
    %c0_40 = arith.constant 0 : index
    %c0_41 = arith.constant 0 : index
    %193 = vector.load %arg9[%c0_40, %c0_41] : memref<128x128xbf16, #tpu.memory_space<vmem>>, vector<128x128xbf16>
    %cst_42 = arith.constant dense<0.000000e+00> : vector<32x128xf32>
    %194 = tpu.matmul %192, %193, %cst_42 {dimension_numbers = #tpu.dot_dimension_numbers<[1], [0], [0], [1], [0, 0, 1, 1], [], []>} : vector<32x128xbf16>, vector<128x128xbf16>, vector<32x128xf32> -> vector<32x128xf32>
    %c0_43 = arith.constant 0 : index
    %c0_44 = arith.constant 0 : index
    %195 = vector.load %arg10[%c0_43, %c0_44] : memref<1x128xf32, #tpu.memory_space<vmem>>, vector<1x128xf32>
    %196 = vector.broadcast %195 : vector<1x128xf32> to vector<32x128xf32>
    %197 = arith.addf %194, %196 : vector<32x128xf32>
    %198 = arith.truncf %191 : vector<32x128xf32> to vector<32x128xbf16>
    %c0_45 = arith.constant 0 : index
    %c0_46 = arith.constant 0 : index
    %199 = vector.load %arg11[%c0_45, %c0_46] : memref<128x256xbf16, #tpu.memory_space<vmem>>, vector<128x256xbf16>
    %cst_47 = arith.constant dense<0.000000e+00> : vector<32x256xf32>
    %200 = tpu.matmul %198, %199, %cst_47 {dimension_numbers = #tpu.dot_dimension_numbers<[1], [0], [0], [1], [0, 0, 1, 1], [], []>} : vector<32x128xbf16>, vector<128x256xbf16>, vector<32x256xf32> -> vector<32x256xf32>
    %c0_48 = arith.constant 0 : index
    %c0_49 = arith.constant 0 : index
    %201 = vector.load %arg12[%c0_48, %c0_49] : memref<1x256xf32, #tpu.memory_space<vmem>>, vector<1x256xf32>
    %202 = vector.broadcast %201 : vector<1x256xf32> to vector<32x256xf32>
    %203 = arith.addf %200, %202 : vector<32x256xf32>
    %204 = vector.extract_strided_slice %203 {offsets = [0, 0], sizes = [32, 128], strides = [1, 1]} : vector<32x256xf32> to vector<32x128xf32>
    %205 = vector.extract_strided_slice %203 {offsets = [0, 128], sizes = [32, 128], strides = [1, 1]} : vector<32x256xf32> to vector<32x128xf32>
    %206 = arith.truncf %197 : vector<32x128xf32> to vector<32x128xbf16>
    %207 = vector.extract_strided_slice %206 {offsets = [0, 0], sizes = [16, 32], strides = [1, 1]} : vector<32x128xbf16> to vector<16x32xbf16>
    %208 = vector.shape_cast %207 : vector<16x32xbf16> to vector<1x16x32xbf16>
    %209 = vector.extract_strided_slice %206 {offsets = [0, 32], sizes = [16, 32], strides = [1, 1]} : vector<32x128xbf16> to vector<16x32xbf16>
    %210 = vector.shape_cast %209 : vector<16x32xbf16> to vector<1x16x32xbf16>
    %211 = vector.extract_strided_slice %206 {offsets = [0, 64], sizes = [16, 32], strides = [1, 1]} : vector<32x128xbf16> to vector<16x32xbf16>
    %212 = vector.shape_cast %211 : vector<16x32xbf16> to vector<1x16x32xbf16>
    %213 = vector.extract_strided_slice %206 {offsets = [0, 96], sizes = [16, 32], strides = [1, 1]} : vector<32x128xbf16> to vector<16x32xbf16>
    %214 = vector.shape_cast %213 : vector<16x32xbf16> to vector<1x16x32xbf16>
    %215 = vector.extract_strided_slice %206 {offsets = [16, 0], sizes = [16, 32], strides = [1, 1]} : vector<32x128xbf16> to vector<16x32xbf16>
    %216 = vector.shape_cast %215 : vector<16x32xbf16> to vector<1x16x32xbf16>
    %217 = vector.extract_strided_slice %206 {offsets = [16, 32], sizes = [16, 32], strides = [1, 1]} : vector<32x128xbf16> to vector<16x32xbf16>
    %218 = vector.shape_cast %217 : vector<16x32xbf16> to vector<1x16x32xbf16>
    %219 = vector.extract_strided_slice %206 {offsets = [16, 64], sizes = [16, 32], strides = [1, 1]} : vector<32x128xbf16> to vector<16x32xbf16>
    %220 = vector.shape_cast %219 : vector<16x32xbf16> to vector<1x16x32xbf16>
    %221 = vector.extract_strided_slice %206 {offsets = [16, 96], sizes = [16, 32], strides = [1, 1]} : vector<32x128xbf16> to vector<16x32xbf16>
    %222 = vector.shape_cast %221 : vector<16x32xbf16> to vector<1x16x32xbf16>
    %223 = tpu.concatenate %208, %210, %212, %214, %216, %218, %220, %222 in 0 : vector<1x16x32xbf16>, vector<1x16x32xbf16>, vector<1x16x32xbf16>, vector<1x16x32xbf16>, vector<1x16x32xbf16>, vector<1x16x32xbf16>, vector<1x16x32xbf16>, vector<1x16x32xbf16> -> vector<8x16x32xbf16>
    %224 = arith.truncf %204 : vector<32x128xf32> to vector<32x128xbf16>
    %225 = vector.extract_strided_slice %224 {offsets = [0, 0], sizes = [16, 32], strides = [1, 1]} : vector<32x128xbf16> to vector<16x32xbf16>
    %226 = vector.shape_cast %225 : vector<16x32xbf16> to vector<1x16x32xbf16>
    %227 = vector.extract_strided_slice %224 {offsets = [0, 32], sizes = [16, 32], strides = [1, 1]} : vector<32x128xbf16> to vector<16x32xbf16>
    %228 = vector.shape_cast %227 : vector<16x32xbf16> to vector<1x16x32xbf16>
    %229 = vector.extract_strided_slice %224 {offsets = [0, 64], sizes = [16, 32], strides = [1, 1]} : vector<32x128xbf16> to vector<16x32xbf16>
    %230 = vector.shape_cast %229 : vector<16x32xbf16> to vector<1x16x32xbf16>
    %231 = vector.extract_strided_slice %224 {offsets = [0, 96], sizes = [16, 32], strides = [1, 1]} : vector<32x128xbf16> to vector<16x32xbf16>
    %232 = vector.shape_cast %231 : vector<16x32xbf16> to vector<1x16x32xbf16>
    %233 = vector.extract_strided_slice %224 {offsets = [16, 0], sizes = [16, 32], strides = [1, 1]} : vector<32x128xbf16> to vector<16x32xbf16>
    %234 = vector.shape_cast %233 : vector<16x32xbf16> to vector<1x16x32xbf16>
    %235 = vector.extract_strided_slice %224 {offsets = [16, 32], sizes = [16, 32], strides = [1, 1]} : vector<32x128xbf16> to vector<16x32xbf16>
    %236 = vector.shape_cast %235 : vector<16x32xbf16> to vector<1x16x32xbf16>
    %237 = vector.extract_strided_slice %224 {offsets = [16, 64], sizes = [16, 32], strides = [1, 1]} : vector<32x128xbf16> to vector<16x32xbf16>
    %238 = vector.shape_cast %237 : vector<16x32xbf16> to vector<1x16x32xbf16>
    %239 = vector.extract_strided_slice %224 {offsets = [16, 96], sizes = [16, 32], strides = [1, 1]} : vector<32x128xbf16> to vector<16x32xbf16>
    %240 = vector.shape_cast %239 : vector<16x32xbf16> to vector<1x16x32xbf16>
    %241 = tpu.concatenate %226, %228, %230, %232, %234, %236, %238, %240 in 0 : vector<1x16x32xbf16>, vector<1x16x32xbf16>, vector<1x16x32xbf16>, vector<1x16x32xbf16>, vector<1x16x32xbf16>, vector<1x16x32xbf16>, vector<1x16x32xbf16>, vector<1x16x32xbf16> -> vector<8x16x32xbf16>
    %242 = arith.truncf %205 : vector<32x128xf32> to vector<32x128xbf16>
    %243 = vector.extract_strided_slice %242 {offsets = [0, 0], sizes = [16, 32], strides = [1, 1]} : vector<32x128xbf16> to vector<16x32xbf16>
    %244 = vector.shape_cast %243 : vector<16x32xbf16> to vector<1x16x32xbf16>
    %245 = vector.extract_strided_slice %242 {offsets = [0, 32], sizes = [16, 32], strides = [1, 1]} : vector<32x128xbf16> to vector<16x32xbf16>
    %246 = vector.shape_cast %245 : vector<16x32xbf16> to vector<1x16x32xbf16>
    %247 = vector.extract_strided_slice %242 {offsets = [0, 64], sizes = [16, 32], strides = [1, 1]} : vector<32x128xbf16> to vector<16x32xbf16>
    %248 = vector.shape_cast %247 : vector<16x32xbf16> to vector<1x16x32xbf16>
    %249 = vector.extract_strided_slice %242 {offsets = [0, 96], sizes = [16, 32], strides = [1, 1]} : vector<32x128xbf16> to vector<16x32xbf16>
    %250 = vector.shape_cast %249 : vector<16x32xbf16> to vector<1x16x32xbf16>
    %251 = vector.extract_strided_slice %242 {offsets = [16, 0], sizes = [16, 32], strides = [1, 1]} : vector<32x128xbf16> to vector<16x32xbf16>
    %252 = vector.shape_cast %251 : vector<16x32xbf16> to vector<1x16x32xbf16>
    %253 = vector.extract_strided_slice %242 {offsets = [16, 32], sizes = [16, 32], strides = [1, 1]} : vector<32x128xbf16> to vector<16x32xbf16>
    %254 = vector.shape_cast %253 : vector<16x32xbf16> to vector<1x16x32xbf16>
    %255 = vector.extract_strided_slice %242 {offsets = [16, 64], sizes = [16, 32], strides = [1, 1]} : vector<32x128xbf16> to vector<16x32xbf16>
    %256 = vector.shape_cast %255 : vector<16x32xbf16> to vector<1x16x32xbf16>
    %257 = vector.extract_strided_slice %242 {offsets = [16, 96], sizes = [16, 32], strides = [1, 1]} : vector<32x128xbf16> to vector<16x32xbf16>
    %258 = vector.shape_cast %257 : vector<16x32xbf16> to vector<1x16x32xbf16>
    %259 = tpu.concatenate %244, %246, %248, %250, %252, %254, %256, %258 in 0 : vector<1x16x32xbf16>, vector<1x16x32xbf16>, vector<1x16x32xbf16>, vector<1x16x32xbf16>, vector<1x16x32xbf16>, vector<1x16x32xbf16>, vector<1x16x32xbf16>, vector<1x16x32xbf16> -> vector<8x16x32xbf16>
    %cst_50 = arith.constant dense<0.000000e+00> : vector<8x16x16xf32>
    %260 = tpu.matmul %223, %241, %cst_50 {dimension_numbers = #tpu.dot_dimension_numbers<[2], [2], [1], [1], [0, 0, 0, 1, 1, 1], [0], [0]>} : vector<8x16x32xbf16>, vector<8x16x32xbf16>, vector<8x16x16xf32> -> vector<8x16x16xf32>
    %cst_51 = arith.constant 0.176776692 : f32
    %261 = vector.broadcast %cst_51 : f32 to vector<8x16x16xf32>
    %262 = arith.mulf %260, %261 : vector<8x16x16xf32>
    %cst_52 = arith.constant dense<0xFF800000> : vector<8x16xf32>
    %263 = vector.multi_reduction <maximumf>, %262, %cst_52 [2] : vector<8x16x16xf32> to vector<8x16xf32>
    %264 = vector.shape_cast %263 : vector<8x16xf32> to vector<8x16x1xf32>
    %265 = vector.broadcast %264 : vector<8x16x1xf32> to vector<8x16x16xf32>
    %266 = arith.subf %262, %265 : vector<8x16x16xf32>
    %267 = math.exp %266 : vector<8x16x16xf32>
    %cst_53 = arith.constant dense<0.000000e+00> : vector<8x16xf32>
    %268 = vector.multi_reduction <add>, %267, %cst_53 [2] : vector<8x16x16xf32> to vector<8x16xf32>
    %269 = vector.shape_cast %268 : vector<8x16xf32> to vector<8x16x1xf32>
    %270 = tpu.reciprocal %269 {approx = true} : vector<8x16x1xf32> -> vector<8x16x1xf32>
    %271 = vector.broadcast %270 : vector<8x16x1xf32> to vector<8x16x16xf32>
    %272 = arith.mulf %267, %271 : vector<8x16x16xf32>
    %273 = arith.truncf %272 : vector<8x16x16xf32> to vector<8x16x16xbf16>
    %cst_54 = arith.constant dense<0.000000e+00> : vector<8x16x32xf32>
    %274 = tpu.matmul %273, %259, %cst_54 {dimension_numbers = #tpu.dot_dimension_numbers<[2], [1], [1], [2], [0, 0, 0, 1, 1, 2], [0], [0]>} : vector<8x16x16xbf16>, vector<8x16x32xbf16>, vector<8x16x32xf32> -> vector<8x16x32xf32>
    %275 = vector.extract_strided_slice %274 {offsets = [0, 0, 0], sizes = [1, 16, 32], strides = [1, 1, 1]} : vector<8x16x32xf32> to vector<1x16x32xf32>
    %276 = vector.shape_cast %275 : vector<1x16x32xf32> to vector<16x32xf32>
    %277 = vector.extract_strided_slice %274 {offsets = [1, 0, 0], sizes = [1, 16, 32], strides = [1, 1, 1]} : vector<8x16x32xf32> to vector<1x16x32xf32>
    %278 = vector.shape_cast %277 : vector<1x16x32xf32> to vector<16x32xf32>
    %279 = vector.extract_strided_slice %274 {offsets = [2, 0, 0], sizes = [1, 16, 32], strides = [1, 1, 1]} : vector<8x16x32xf32> to vector<1x16x32xf32>
    %280 = vector.shape_cast %279 : vector<1x16x32xf32> to vector<16x32xf32>
    %281 = vector.extract_strided_slice %274 {offsets = [3, 0, 0], sizes = [1, 16, 32], strides = [1, 1, 1]} : vector<8x16x32xf32> to vector<1x16x32xf32>
    %282 = vector.shape_cast %281 : vector<1x16x32xf32> to vector<16x32xf32>
    %283 = tpu.concatenate %276, %278, %280, %282 in 1 : vector<16x32xf32>, vector<16x32xf32>, vector<16x32xf32>, vector<16x32xf32> -> vector<16x128xf32>
    %284 = vector.extract_strided_slice %274 {offsets = [4, 0, 0], sizes = [1, 16, 32], strides = [1, 1, 1]} : vector<8x16x32xf32> to vector<1x16x32xf32>
    %285 = vector.shape_cast %284 : vector<1x16x32xf32> to vector<16x32xf32>
    %286 = vector.extract_strided_slice %274 {offsets = [5, 0, 0], sizes = [1, 16, 32], strides = [1, 1, 1]} : vector<8x16x32xf32> to vector<1x16x32xf32>
    %287 = vector.shape_cast %286 : vector<1x16x32xf32> to vector<16x32xf32>
    %288 = vector.extract_strided_slice %274 {offsets = [6, 0, 0], sizes = [1, 16, 32], strides = [1, 1, 1]} : vector<8x16x32xf32> to vector<1x16x32xf32>
    %289 = vector.shape_cast %288 : vector<1x16x32xf32> to vector<16x32xf32>
    %290 = vector.extract_strided_slice %274 {offsets = [7, 0, 0], sizes = [1, 16, 32], strides = [1, 1, 1]} : vector<8x16x32xf32> to vector<1x16x32xf32>
    %291 = vector.shape_cast %290 : vector<1x16x32xf32> to vector<16x32xf32>
    %292 = tpu.concatenate %285, %287, %289, %291 in 1 : vector<16x32xf32>, vector<16x32xf32>, vector<16x32xf32>, vector<16x32xf32> -> vector<16x128xf32>
    %293 = tpu.concatenate %283, %292 in 0 : vector<16x128xf32>, vector<16x128xf32> -> vector<32x128xf32>
    %294 = arith.truncf %293 : vector<32x128xf32> to vector<32x128xbf16>
    %c0_55 = arith.constant 0 : index
    %c0_56 = arith.constant 0 : index
    %295 = vector.load %arg13[%c0_55, %c0_56] : memref<128x128xbf16, #tpu.memory_space<vmem>>, vector<128x128xbf16>
    %cst_57 = arith.constant dense<0.000000e+00> : vector<32x128xf32>
    %296 = tpu.matmul %294, %295, %cst_57 {dimension_numbers = #tpu.dot_dimension_numbers<[1], [0], [0], [1], [0, 0, 1, 1], [], []>} : vector<32x128xbf16>, vector<128x128xbf16>, vector<32x128xf32> -> vector<32x128xf32>
    %c0_58 = arith.constant 0 : index
    %c0_59 = arith.constant 0 : index
    %297 = vector.load %arg14[%c0_58, %c0_59] : memref<1x128xf32, #tpu.memory_space<vmem>>, vector<1x128xf32>
    %298 = vector.broadcast %297 : vector<1x128xf32> to vector<32x128xf32>
    %299 = arith.addf %296, %298 : vector<32x128xf32>
    %300 = arith.addf %147, %299 : vector<32x128xf32>
    %cst_60 = arith.constant dense<0.000000e+00> : vector<32xf32>
    %301 = vector.multi_reduction <add>, %300, %cst_60 [1] : vector<32x128xf32> to vector<32xf32>
    %302 = vector.shape_cast %301 : vector<32xf32> to vector<32x1xf32>
    %cst_61 = arith.constant 1.280000e+02 : f32
    %303 = vector.broadcast %cst_61 : f32 to vector<32x1xf32>
    %304 = arith.divf %302, %303 : vector<32x1xf32>
    %305 = vector.broadcast %304 : vector<32x1xf32> to vector<32x128xf32>
    %306 = arith.subf %300, %305 : vector<32x128xf32>
    %307 = arith.mulf %306, %306 : vector<32x128xf32>
    %cst_62 = arith.constant dense<0.000000e+00> : vector<32xf32>
    %308 = vector.multi_reduction <add>, %307, %cst_62 [1] : vector<32x128xf32> to vector<32xf32>
    %309 = vector.shape_cast %308 : vector<32xf32> to vector<32x1xf32>
    %cst_63 = arith.constant 1.280000e+02 : f32
    %310 = vector.broadcast %cst_63 : f32 to vector<32x1xf32>
    %311 = arith.divf %309, %310 : vector<32x1xf32>
    %cst_64 = arith.constant 9.99999974E-6 : f32
    %312 = vector.broadcast %cst_64 : f32 to vector<32x1xf32>
    %313 = arith.addf %311, %312 : vector<32x1xf32>
    %314 = math.rsqrt %313 : vector<32x1xf32>
    %315 = vector.broadcast %314 : vector<32x1xf32> to vector<32x128xf32>
    %316 = arith.mulf %306, %315 : vector<32x128xf32>
    %317 = vector.extract_strided_slice %19 {offsets = [4, 0], sizes = [1, 128], strides = [1, 1]} : vector<8x128xf32> to vector<1x128xf32>
    %318 = vector.broadcast %317 : vector<1x128xf32> to vector<32x128xf32>
    %319 = arith.mulf %316, %318 : vector<32x128xf32>
    %320 = vector.extract_strided_slice %19 {offsets = [5, 0], sizes = [1, 128], strides = [1, 1]} : vector<8x128xf32> to vector<1x128xf32>
    %321 = vector.broadcast %320 : vector<1x128xf32> to vector<32x128xf32>
    %322 = arith.addf %319, %321 : vector<32x128xf32>
    %323 = arith.truncf %322 : vector<32x128xf32> to vector<32x128xbf16>
    %c0_65 = arith.constant 0 : index
    %c0_66 = arith.constant 0 : index
    %324 = vector.load %arg15[%c0_65, %c0_66] : memref<128x256xbf16, #tpu.memory_space<vmem>>, vector<128x256xbf16>
    %cst_67 = arith.constant dense<0.000000e+00> : vector<32x256xf32>
    %325 = tpu.matmul %323, %324, %cst_67 {dimension_numbers = #tpu.dot_dimension_numbers<[1], [0], [0], [1], [0, 0, 1, 1], [], []>} : vector<32x128xbf16>, vector<128x256xbf16>, vector<32x256xf32> -> vector<32x256xf32>
    %c0_68 = arith.constant 0 : index
    %c0_69 = arith.constant 0 : index
    %326 = vector.load %arg16[%c0_68, %c0_69] : memref<1x256xf32, #tpu.memory_space<vmem>>, vector<1x256xf32>
    %327 = vector.broadcast %326 : vector<1x256xf32> to vector<32x256xf32>
    %328 = arith.addf %325, %327 : vector<32x256xf32>
    %cst_70 = arith.constant 0.000000e+00 : f32
    %329 = vector.broadcast %cst_70 : f32 to vector<32x256xf32>
    %330 = arith.maximumf %328, %329 : vector<32x256xf32>
    %331 = arith.truncf %330 : vector<32x256xf32> to vector<32x256xbf16>
    %c0_71 = arith.constant 0 : index
    %c0_72 = arith.constant 0 : index
    %332 = vector.load %arg17[%c0_71, %c0_72] : memref<256x128xbf16, #tpu.memory_space<vmem>>, vector<256x128xbf16>
    %cst_73 = arith.constant dense<0.000000e+00> : vector<32x128xf32>
    %333 = tpu.matmul %331, %332, %cst_73 {dimension_numbers = #tpu.dot_dimension_numbers<[1], [0], [0], [1], [0, 0, 1, 1], [], []>} : vector<32x256xbf16>, vector<256x128xbf16>, vector<32x128xf32> -> vector<32x128xf32>
    %c0_74 = arith.constant 0 : index
    %c0_75 = arith.constant 0 : index
    %334 = vector.load %arg18[%c0_74, %c0_75] : memref<1x128xf32, #tpu.memory_space<vmem>>, vector<1x128xf32>
    %335 = vector.broadcast %334 : vector<1x128xf32> to vector<32x128xf32>
    %336 = arith.addf %333, %335 : vector<32x128xf32>
    %337 = arith.addf %300, %336 : vector<32x128xf32>
    %338 = vector.shape_cast %337 : vector<32x128xf32> to vector<2x16x128xf32>
    %c0_76 = arith.constant 0 : index
    %c0_77 = arith.constant 0 : index
    %c0_78 = arith.constant 0 : index
    %339 = vector.load %arg19[%c0_76, %c0_77, %c0_78] : memref<2x16x128xf32, #tpu.memory_space<vmem>>, vector<2x16x128xf32>
    tpu.vector_store %arg19[%c0_76, %c0_77, %c0_78], %338 {strides = array<i32>} : memref<2x16x128xf32, #tpu.memory_space<vmem>>, vector<2x16x128xf32>,
    return
  }
  func.func @transform_0(%arg0: i32) -> (i32, i32, i32) {
    %c0_i32 = arith.constant 0 : i32
    %c0_i32_0 = arith.constant 0 : i32
    %c0_i32_1 = arith.constant 0 : i32
    return %arg0, %c0_i32, %c0_i32_0 : i32, i32, i32
  }
  func.func @transform_1(%arg0: i32) -> (i32, i32, i32) {
    %c0_i32 = arith.constant 0 : i32
    %c0_i32_0 = arith.constant 0 : i32
    %c0_i32_1 = arith.constant 0 : i32
    return %arg0, %c0_i32, %c0_i32_0 : i32, i32, i32
  }
  func.func @transform_2(%arg0: i32) -> (i32, i32, i32) {
    %c0_i32 = arith.constant 0 : i32
    %c0_i32_0 = arith.constant 0 : i32
    %c0_i32_1 = arith.constant 0 : i32
    return %arg0, %c0_i32, %c0_i32_0 : i32, i32, i32
  }
  func.func @transform_3(%arg0: i32) -> (i32, i32) {
    %c0_i32 = arith.constant 0 : i32
    %c0_i32_0 = arith.constant 0 : i32
    %c0_i32_1 = arith.constant 0 : i32
    return %c0_i32, %c0_i32_0 : i32, i32
  }
  func.func @transform_4(%arg0: i32) -> (i32, i32) {
    %c0_i32 = arith.constant 0 : i32
    %c0_i32_0 = arith.constant 0 : i32
    %c0_i32_1 = arith.constant 0 : i32
    return %c0_i32, %c0_i32_0 : i32, i32
  }
  func.func @transform_5(%arg0: i32) -> (i32, i32) {
    %c0_i32 = arith.constant 0 : i32
    %c0_i32_0 = arith.constant 0 : i32
    %c0_i32_1 = arith.constant 0 : i32
    return %c0_i32, %c0_i32_0 : i32, i32
  }
  func.func @transform_6(%arg0: i32) -> (i32, i32) {
    %c0_i32 = arith.constant 0 : i32
    %c0_i32_0 = arith.constant 0 : i32
    %c0_i32_1 = arith.constant 0 : i32
    return %c0_i32, %c0_i32_0 : i32, i32
  }
  func.func @transform_7(%arg0: i32) -> (i32, i32) {
    %c0_i32 = arith.constant 0 : i32
    %c0_i32_0 = arith.constant 0 : i32
    %c0_i32_1 = arith.constant 0 : i32
    return %c0_i32, %c0_i32_0 : i32, i32
  }
  func.func @transform_8(%arg0: i32) -> (i32, i32) {
    %c0_i32 = arith.constant 0 : i32
    %c0_i32_0 = arith.constant 0 : i32
    %c0_i32_1 = arith.constant 0 : i32
    return %c0_i32, %c0_i32_0 : i32, i32
  }
  func.func @transform_9(%arg0: i32) -> (i32, i32) {
    %c0_i32 = arith.constant 0 : i32
    %c0_i32_0 = arith.constant 0 : i32
    %c0_i32_1 = arith.constant 0 : i32
    return %c0_i32, %c0_i32_0 : i32, i32
  }
  func.func @transform_10(%arg0: i32) -> (i32, i32) {
    %c0_i32 = arith.constant 0 : i32
    %c0_i32_0 = arith.constant 0 : i32
    %c0_i32_1 = arith.constant 0 : i32
    return %c0_i32, %c0_i32_0 : i32, i32
  }
  func.func @transform_11(%arg0: i32) -> (i32, i32) {
    %c0_i32 = arith.constant 0 : i32
    %c0_i32_0 = arith.constant 0 : i32
    %c0_i32_1 = arith.constant 0 : i32
    return %c0_i32, %c0_i32_0 : i32, i32
  }
  func.func @transform_12(%arg0: i32) -> (i32, i32) {
    %c0_i32 = arith.constant 0 : i32
    %c0_i32_0 = arith.constant 0 : i32
    %c0_i32_1 = arith.constant 0 : i32
    return %c0_i32, %c0_i32_0 : i32, i32
  }
  func.func @transform_13(%arg0: i32) -> (i32, i32) {
    %c0_i32 = arith.constant 0 : i32
    %c0_i32_0 = arith.constant 0 : i32
    %c0_i32_1 = arith.constant 0 : i32
    return %c0_i32, %c0_i32_0 : i32, i32
  }
  func.func @transform_14(%arg0: i32) -> (i32, i32) {
    %c0_i32 = arith.constant 0 : i32
    %c0_i32_0 = arith.constant 0 : i32
    %c0_i32_1 = arith.constant 0 : i32
    return %c0_i32, %c0_i32_0 : i32, i32
  }
  func.func @transform_15(%arg0: i32) -> (i32, i32) {
    %c0_i32 = arith.constant 0 : i32
    %c0_i32_0 = arith.constant 0 : i32
    %c0_i32_1 = arith.constant 0 : i32
    return %c0_i32, %c0_i32_0 : i32, i32
  }
  func.func @transform_16(%arg0: i32) -> (i32, i32) {
    %c0_i32 = arith.constant 0 : i32
    %c0_i32_0 = arith.constant 0 : i32
    %c0_i32_1 = arith.constant 0 : i32
    return %c0_i32, %c0_i32_0 : i32, i32
  }
  func.func @transform_17(%arg0: i32) -> (i32, i32) {
    %c0_i32 = arith.constant 0 : i32
    %c0_i32_0 = arith.constant 0 : i32
    %c0_i32_1 = arith.constant 0 : i32
    return %c0_i32, %c0_i32_0 : i32, i32
  }
  func.func @transform_18(%arg0: i32) -> (i32, i32, i32) {
    %c0_i32 = arith.constant 0 : i32
    %c0_i32_0 = arith.constant 0 : i32
    %c0_i32_1 = arith.constant 0 : i32
    return %arg0, %c0_i32, %c0_i32_0 : i32, i32, i32
  }
}

</mosaic_0001>

<llo_original>
// kernel: tpu_custom_call.1
$region0: #{tpu_custom_call.1}
  #allocation0 [shape = 'u32[]', space=smem, size = 0x4, offset = 0x4, fixed_abs, tag = 'smem constant byte address 0x4 - core index']
  #allocation1 [shape = 'u32[144,128]{1,0:T(1,128)}', space=vmem, size = 0x12000, scoped, tag = 'internal scratch']
  %s0 = inlined_call_operand.hbm [shape: f32[2,16,128], index: 0, kind: input, shape index: {}]
  %s1 = inlined_call_operand.hbm [shape: f32[2,16,128], index: 1, kind: input, shape index: {}]
  %s2 = inlined_call_operand.hbm [shape: s8[2,16,16], index: 2, kind: input, shape index: {}]
  %s3 = inlined_call_operand.hbm [shape: f32[8,128], index: 3, kind: input, shape index: {}]
  %s4 = inlined_call_operand.hbm [shape: bf16[128,384], index: 4, kind: input, shape index: {}]
  %s5 = inlined_call_operand.vmem [shape: f32[1,384], index: 5, kind: input, shape index: {}]
  %s6 = inlined_call_operand.hbm [shape: bf16[128,128], index: 6, kind: input, shape index: {}]
  %s7 = inlined_call_operand.vmem [shape: f32[1,128], index: 7, kind: input, shape index: {}]
  %s8 = inlined_call_operand.hbm [shape: bf16[128,128], index: 8, kind: input, shape index: {}]
  %s9 = inlined_call_operand.vmem [shape: f32[1,128], index: 9, kind: input, shape index: {}]
  %s10 = inlined_call_operand.hbm [shape: bf16[128,256], index: 10, kind: input, shape index: {}]
  %s11 = inlined_call_operand.vmem [shape: f32[1,256], index: 11, kind: input, shape index: {}]
  %s12 = inlined_call_operand.hbm [shape: bf16[128,128], index: 12, kind: input, shape index: {}]
  %s13 = inlined_call_operand.vmem [shape: f32[1,128], index: 13, kind: input, shape index: {}]
  %s14 = inlined_call_operand.hbm [shape: bf16[128,256], index: 14, kind: input, shape index: {}]
  %s15 = inlined_call_operand.vmem [shape: f32[1,256], index: 15, kind: input, shape index: {}]
  %s16 = inlined_call_operand.hbm [shape: bf16[256,128], index: 16, kind: input, shape index: {}]
  %s17 = inlined_call_operand.vmem [shape: f32[1,128], index: 17, kind: input, shape index: {}]
  %s18 = inlined_call_operand.hbm [shape: f32[2,16,128], index: 18, kind: output, shape index: {}]
  %s19 = sld [smem:[#allocation0]]
  $region126: #{tpu_custom_call.1} parent=0
    _
  %s21 = ssub.s32 1, %s19
  %s22 = scalar_select 0, %s21, %s19
  $region1: #{tpu_custom_call.1} parent=0
    #allocation2 [shape = 'u8[16384]{0}', space=vmem, size = 0x4000, scoped, tag = 'input window, operand 0, single buffered']
    #allocation3 [shape = 's32[1]{0}', space=sflag, size = 0x4, scoped, tag = 'scoped memory for tpu_custom_call.1']
    #allocation4 [shape = 's32[1]{0}', space=sflag, size = 0x4, scoped, tag = 'scoped memory for tpu_custom_call.1']
    #allocation5 [shape = 'u8[16384]{0}', space=vmem, size = 0x4000, scoped, tag = 'input window, operand 1, single buffered']
    #allocation6 [shape = 's32[1]{0}', space=sflag, size = 0x4, scoped, tag = 'scoped memory for tpu_custom_call.1']
    #allocation7 [shape = 'u8[4096]{0}', space=vmem, size = 0x1000, scoped, tag = 'input window, operand 2, single buffered']
    #allocation8 [shape = 'u8[4096]{0}', space=vmem, size = 0x1000, scoped, tag = 'input window, operand 3, single buffered']
    #allocation9 [shape = 's32[1]{0}', space=sflag, size = 0x4, scoped, tag = 'scoped memory for tpu_custom_call.1']
    #allocation10 [shape = 'u8[98304]{0}', space=vmem, size = 0x18000, scoped, tag = 'input window, operand 4, single buffered']
    #allocation11 [shape = 'u8[32768]{0}', space=vmem, size = 0x8000, scoped, tag = 'input window, operand 6, single buffered']
    #allocation12 [shape = 's32[1]{0}', space=sflag, size = 0x4, scoped, tag = 'scoped memory for tpu_custom_call.1']
    #allocation13 [shape = 'u8[32768]{0}', space=vmem, size = 0x8000, scoped, tag = 'input window, operand 8, single buffered']
    #allocation14 [shape = 'u8[65536]{0}', space=vmem, size = 0x10000, scoped, tag = 'input window, operand 10, single buffered']
    #allocation15 [shape = 's32[1]{0}', space=sflag, size = 0x4, scoped, tag = 'scoped memory for tpu_custom_call.1']
    #allocation16 [shape = 'u8[32768]{0}', space=vmem, size = 0x8000, scoped, tag = 'input window, operand 12, single buffered']
    #allocation17 [shape = 'u8[65536]{0}', space=vmem, size = 0x10000, scoped, tag = 'input window, operand 14, single buffered']
    #allocation18 [shape = 's32[1]{0}', space=sflag, size = 0x4, scoped, tag = 'scoped memory for tpu_custom_call.1']
    #allocation19 [shape = 'u8[65536]{0}', space=vmem, size = 0x10000, scoped, tag = 'input window, operand 16, single buffered']
    #allocation20 [shape = 'u8[16384]{0}', space=vmem, size = 0x4000, scoped, tag = 'output window, operand 0, single buffered']
    %23 = vsyncpa [#allocation3], 0
    %24 = vsyncpa [#allocation6], 0
    %25 = vsyncpa [#allocation9], 0
    %26 = vsyncpa [#allocation12], 0
    %27 = vsyncpa [#allocation15], 0
    %28 = vsyncpa [#allocation18], 0
    %29 = vsyncpa [#allocation4], 0
    // Predicated region
    $region2: #{tpu_custom_call.1} parent=1 // pred_check
      _
    $region3: #{tpu_custom_call.1} parent=1 // pred_check_branch
      %31 = sbr.rel (0) target = $region5
    $region4: #{tpu_custom_call.1} parent=1 // pred_region
      %s33 = ssub.s32 512, 512
      %34 = vsyncadd [#allocation3], %s33
      %s35 = sshll.u32 [#allocation2], 4
      %s36 = int_to_ptr.vmem [resolvable:$true] %s35
      %41 = dma.hbm_to_vmem [thread:$0]  %s0, 512, %s36, [#allocation3], 128, 128, 8
    $region5: #{tpu_custom_call.1} parent=1 // pred_fallthru
      _
    // Predicated region
    $region6: #{tpu_custom_call.1} parent=1 // pred_check
      _
    $region7: #{tpu_custom_call.1} parent=1 // pred_check_branch
      %43 = sbr.rel (0) target = $region9
    $region8: #{tpu_custom_call.1} parent=1 // pred_region
      %s45 = ssub.s32 512, 512
      %46 = vsyncadd [#allocation6], %s45
      %s47 = sshll.u32 [#allocation5], 4
      %s48 = int_to_ptr.vmem [resolvable:$true] %s47
      %53 = dma.hbm_to_vmem [thread:$0]  %s1, 512, %s48, [#allocation6], 128, 128, 8
    $region9: #{tpu_custom_call.1} parent=1 // pred_fallthru
      _
    // Predicated region
    $region10: #{tpu_custom_call.1} parent=1 // pred_check
      _
    $region11: #{tpu_custom_call.1} parent=1 // pred_check_branch
      %55 = sbr.rel (0) target = $region13
    $region12: #{tpu_custom_call.1} parent=1 // pred_region
      %s57 = ssub.s32 128, 128
      %58 = vsyncadd [#allocation6], %s57
      %s59 = sshll.u32 [#allocation7], 4
      %s60 = int_to_ptr.vmem [resolvable:$true] %s59
      %65 = dma.hbm_to_vmem [thread:$0]  %s2, 128, %s60, [#allocation6], 32, 32, 2
    $region13: #{tpu_custom_call.1} parent=1 // pred_fallthru
      _
    // Predicated region
    $region14: #{tpu_custom_call.1} parent=1 // pred_check
      _
    $region15: #{tpu_custom_call.1} parent=1 // pred_check_branch
      %67 = sbr.rel (0) target = $region17
    $region16: #{tpu_custom_call.1} parent=1 // pred_region
      %s69 = ssub.s32 128, 128
      %70 = vsyncadd [#allocation9], %s69
      %s72 = sshll.u32 [#allocation8], 4
      %s73 = int_to_ptr.vmem [resolvable:$true] %s72
      %75 = dma.hbm_to_vmem [thread:$0]  %s3, 128, %s73, [#allocation9]
    $region17: #{tpu_custom_call.1} parent=1 // pred_fallthru
      _
    // Predicated region
    $region18: #{tpu_custom_call.1} parent=1 // pred_check
      _
    $region19: #{tpu_custom_call.1} parent=1 // pred_check_branch
      %77 = sbr.rel (0) target = $region21
    $region20: #{tpu_custom_call.1} parent=1 // pred_region
      %s79 = ssub.s32 3072, 3072
      %80 = vsyncadd [#allocation9], %s79
      %s81 = sshll.u32 [#allocation10], 4
      %s82 = int_to_ptr.vmem [resolvable:$true] %s81
      %87 = dma.hbm_to_vmem [thread:$0]  %s4, 3072, %s82, [#allocation9], 192, 192, 12
    $region21: #{tpu_custom_call.1} parent=1 // pred_fallthru
      _
    // Predicated region
    $region22: #{tpu_custom_call.1} parent=1 // pred_check
      _
    $region23: #{tpu_custom_call.1} parent=1 // pred_check_branch
      %89 = sbr.rel (0) target = $region25
    $region24: #{tpu_custom_call.1} parent=1 // pred_region
      _
    $region25: #{tpu_custom_call.1} parent=1 // pred_fallthru
      _
    // Predicated region
    $region26: #{tpu_custom_call.1} parent=1 // pred_check
      _
    $region27: #{tpu_custom_call.1} parent=1 // pred_check_branch
      %91 = sbr.rel (0) target = $region29
    $region28: #{tpu_custom_call.1} parent=1 // pred_region
      %s93 = ssub.s32 1024, 1024
      %94 = vsyncadd [#allocation12], %s93
      %s95 = sshll.u32 [#allocation11], 4
      %s96 = int_to_ptr.vmem [resolvable:$true] %s95
      %101 = dma.hbm_to_vmem [thread:$0]  %s6, 1024, %s96, [#allocation12], 64, 64, 4
    $region29: #{tpu_custom_call.1} parent=1 // pred_fallthru
      _
    // Predicated region
    $region30: #{tpu_custom_call.1} parent=1 // pred_check
      _
    $region31: #{tpu_custom_call.1} parent=1 // pred_check_branch
      %103 = sbr.rel (0) target = $region33
    $region32: #{tpu_custom_call.1} parent=1 // pred_region
      _
    $region33: #{tpu_custom_call.1} parent=1 // pred_fallthru
      _
    // Predicated region
    $region34: #{tpu_custom_call.1} parent=1 // pred_check
      _
    $region35: #{tpu_custom_call.1} parent=1 // pred_check_branch
      %105 = sbr.rel (0) target = $region37
    $region36: #{tpu_custom_call.1} parent=1 // pred_region
      %s107 = ssub.s32 1024, 1024
      %108 = vsyncadd [#allocation12], %s107
      %s109 = sshll.u32 [#allocation13], 4
      %s110 = int_to_ptr.vmem [resolvable:$true] %s109
      %115 = dma.hbm_to_vmem [thread:$0]  %s8, 1024, %s110, [#allocation12], 64, 64, 4
    $region37: #{tpu_custom_call.1} parent=1 // pred_fallthru
      _
    // Predicated region
    $region38: #{tpu_custom_call.1} parent=1 // pred_check
      _
    $region39: #{tpu_custom_call.1} parent=1 // pred_check_branch
      %117 = sbr.rel (0) target = $region41
    $region40: #{tpu_custom_call.1} parent=1 // pred_region
      _
    $region41: #{tpu_custom_call.1} parent=1 // pred_fallthru
      _
    // Predicated region
    $region42: #{tpu_custom_call.1} parent=1 // pred_check
      _
    $region43: #{tpu_custom_call.1} parent=1 // pred_check_branch
      %119 = sbr.rel (0) target = $region45
    $region44: #{tpu_custom_call.1} parent=1 // pred_region
      %s121 = ssub.s32 2048, 2048
      %122 = vsyncadd [#allocation15], %s121
      %s123 = sshll.u32 [#allocation14], 4
      %s124 = int_to_ptr.vmem [resolvable:$true] %s123
      %129 = dma.hbm_to_vmem [thread:$0]  %s10, 2048, %s124, [#allocation15], 128, 128, 8
    $region45: #{tpu_custom_call.1} parent=1 // pred_fallthru
      _
    // Predicated region
    $region46: #{tpu_custom_call.1} parent=1 // pred_check
      _
    $region47: #{tpu_custom_call.1} parent=1 // pred_check_branch
      %131 = sbr.rel (0) target = $region49
    $region48: #{tpu_custom_call.1} parent=1 // pred_region
      _
    $region49: #{tpu_custom_call.1} parent=1 // pred_fallthru
      _
    // Predicated region
    $region50: #{tpu_custom_call.1} parent=1 // pred_check
      _
    $region51: #{tpu_custom_call.1} parent=1 // pred_check_branch
      %133 = sbr.rel (0) target = $region53
    $region52: #{tpu_custom_call.1} parent=1 // pred_region
      %s135 = ssub.s32 1024, 1024
      %136 = vsyncadd [#allocation15], %s135
      %s137 = sshll.u32 [#allocation16], 4
      %s138 = int_to_ptr.vmem [resolvable:$true] %s137
      %143 = dma.hbm_to_vmem [thread:$0]  %s12, 1024, %s138, [#allocation15], 64, 64, 4
    $region53: #{tpu_custom_call.1} parent=1 // pred_fallthru
      _
    // Predicated region
    $region54: #{tpu_custom_call.1} parent=1 // pred_check
      _
    $region55: #{tpu_custom_call.1} parent=1 // pred_check_branch
      %145 = sbr.rel (0) target = $region57
    $region56: #{tpu_custom_call.1} parent=1 // pred_region
      _
    $region57: #{tpu_custom_call.1} parent=1 // pred_fallthru
      _
    // Predicated region
    $region58: #{tpu_custom_call.1} parent=1 // pred_check
      _
    $region59: #{tpu_custom_call.1} parent=1 // pred_check_branch
      %147 = sbr.rel (0) target = $region61
    $region60: #{tpu_custom_call.1} parent=1 // pred_region
      %s149 = ssub.s32 2048, 2048
      %150 = vsyncadd [#allocation18], %s149
      %s151 = sshll.u32 [#allocation17], 4
      %s152 = int_to_ptr.vmem [resolvable:$true] %s151
      %157 = dma.hbm_to_vmem [thread:$0]  %s14, 2048, %s152, [#allocation18], 128, 128, 8
    $region61: #{tpu_custom_call.1} parent=1 // pred_fallthru
      _
    // Predicated region
    $region62: #{tpu_custom_call.1} parent=1 // pred_check
      _
    $region63: #{tpu_custom_call.1} parent=1 // pred_check_branch
      %159 = sbr.rel (0) target = $region65
    $region64: #{tpu_custom_call.1} parent=1 // pred_region
      _
    $region65: #{tpu_custom_call.1} parent=1 // pred_fallthru
      _
    // Predicated region
    $region66: #{tpu_custom_call.1} parent=1 // pred_check
      _
    $region67: #{tpu_custom_call.1} parent=1 // pred_check_branch
      %161 = sbr.rel (0) target = $region69
    $region68: #{tpu_custom_call.1} parent=1 // pred_region
      %s163 = ssub.s32 2048, 2048
      %164 = vsyncadd [#allocation18], %s163
      %s165 = sshll.u32 [#allocation19], 4
      %s166 = int_to_ptr.vmem [resolvable:$true] %s165
      %171 = dma.hbm_to_vmem [thread:$0]  %s16, 2048, %s166, [#allocation18], 64, 64, 4
    $region69: #{tpu_custom_call.1} parent=1 // pred_fallthru
      _
    // Predicated region
    $region70: #{tpu_custom_call.1} parent=1 // pred_check
      _
    $region71: #{tpu_custom_call.1} parent=1 // pred_check_branch
      %173 = sbr.rel (0) target = $region73
    $region72: #{tpu_custom_call.1} parent=1 // pred_region
      _
    $region73: #{tpu_custom_call.1} parent=1 // pred_fallthru
      _
    // Predicated region
    $region74: #{tpu_custom_call.1} parent=1 // pred_check
      _
    $region75: #{tpu_custom_call.1} parent=1 // pred_check_branch
      %175 = sbr.rel (0) target = $region77
    $region76: #{tpu_custom_call.1} parent=1 // pred_region
      %176 = dma.done [#allocation3], 512
    $region77: #{tpu_custom_call.1} parent=1 // pred_fallthru
      _
    // Predicated region
    $region78: #{tpu_custom_call.1} parent=1 // pred_check
      _
    $region79: #{tpu_custom_call.1} parent=1 // pred_check_branch
      %178 = sbr.rel (0) target = $region81
    $region80: #{tpu_custom_call.1} parent=1 // pred_region
      %179 = dma.done [#allocation6], 512
    $region81: #{tpu_custom_call.1} parent=1 // pred_fallthru
      _
    // Predicated region
    $region82: #{tpu_custom_call.1} parent=1 // pred_check
      _
    $region83: #{tpu_custom_call.1} parent=1 // pred_check_branch
      %181 = sbr.rel (0) target = $region85
    $region84: #{tpu_custom_call.1} parent=1 // pred_region
      %182 = dma.done [#allocation6], 128
    $region85: #{tpu_custom_call.1} parent=1 // pred_fallthru
      _
    // Predicated region
    $region86: #{tpu_custom_call.1} parent=1 // pred_check
      _
    $region87: #{tpu_custom_call.1} parent=1 // pred_check_branch
      %184 = sbr.rel (0) target = $region89
    $region88: #{tpu_custom_call.1} parent=1 // pred_region
      %185 = dma.done [#allocation9], 128
    $region89: #{tpu_custom_call.1} parent=1 // pred_fallthru
      _
    // Predicated region
    $region90: #{tpu_custom_call.1} parent=1 // pred_check
      _
    $region91: #{tpu_custom_call.1} parent=1 // pred_check_branch
      %187 = sbr.rel (0) target = $region93
    $region92: #{tpu_custom_call.1} parent=1 // pred_region
      %188 = dma.done [#allocation9], 3072
    $region93: #{tpu_custom_call.1} parent=1 // pred_fallthru
      _
    // Predicated region
    $region94: #{tpu_custom_call.1} parent=1 // pred_check
      _
    $region95: #{tpu_custom_call.1} parent=1 // pred_check_branch
      %190 = sbr.rel (0) target = $region97
    $region96: #{tpu_custom_call.1} parent=1 // pred_region
      %191 = dma.done [#allocation12], 1024
    $region97: #{tpu_custom_call.1} parent=1 // pred_fallthru
      _
    // Predicated region
    $region98: #{tpu_custom_call.1} parent=1 // pred_check
      _
    $region99: #{tpu_custom_call.1} parent=1 // pred_check_branch
      %193 = sbr.rel (0) target = $region101
    $region100: #{tpu_custom_call.1} parent=1 // pred_region
      %194 = dma.done [#allocation12], 1024
    $region101: #{tpu_custom_call.1} parent=1 // pred_fallthru
      _
    // Predicated region
    $region102: #{tpu_custom_call.1} parent=1 // pred_check
      _
    $region103: #{tpu_custom_call.1} parent=1 // pred_check_branch
      %196 = sbr.rel (0) target = $region105
    $region104: #{tpu_custom_call.1} parent=1 // pred_region
      %197 = dma.done [#allocation15], 2048
    $region105: #{tpu_custom_call.1} parent=1 // pred_fallthru
      _
    // Predicated region
    $region106: #{tpu_custom_call.1} parent=1 // pred_check
      _
    $region107: #{tpu_custom_call.1} parent=1 // pred_check_branch
      %199 = sbr.rel (0) target = $region109
    $region108: #{tpu_custom_call.1} parent=1 // pred_region
      %200 = dma.done [#allocation15], 1024
    $region109: #{tpu_custom_call.1} parent=1 // pred_fallthru
      _
    // Predicated region
    $region110: #{tpu_custom_call.1} parent=1 // pred_check
      _
    $region111: #{tpu_custom_call.1} parent=1 // pred_check_branch
      %202 = sbr.rel (0) target = $region113
    $region112: #{tpu_custom_call.1} parent=1 // pred_region
      %203 = dma.done [#allocation18], 2048
    $region113: #{tpu_custom_call.1} parent=1 // pred_fallthru
      _
    // Predicated region
    $region114: #{tpu_custom_call.1} parent=1 // pred_check
      _
    $region115: #{tpu_custom_call.1} parent=1 // pred_check_branch
      %205 = sbr.rel (0) target = $region117
    $region116: #{tpu_custom_call.1} parent=1 // pred_region
      %206 = dma.done [#allocation18], 2048
    $region117: #{tpu_custom_call.1} parent=1 // pred_fallthru
      _
    %v208 = vld [vmem:[#allocation2] sm:$0xff]
    %v209 = vld [vmem:[#allocation2 + $0x8] sm:$0xff]
    %v210 = vld [vmem:[#allocation2 + $0x10] sm:$0xff]
    %v211 = vld [vmem:[#allocation2 + $0x18] sm:$0xff]
    %v212 = vld [vmem:[#allocation5] sm:$0xff]
    %v213 = vld [vmem:[#allocation5 + $0x8] sm:$0xff]
    %v214 = vld [vmem:[#allocation5 + $0x10] sm:$0xff]
    %v215 = vld [vmem:[#allocation5 + $0x18] sm:$0xff]
    %v216 = vld [vmem:[#allocation7] sm:$0x3]
    %v217 = vld [vmem:[#allocation7 + $0x2] sm:$0x3]
    %v218 = vld [vmem:[#allocation7 + $0x4] sm:$0x3]
    %v219 = vld [vmem:[#allocation7 + $0x6] sm:$0x3]
    %v220 = vunpack.c.0.s8 %v216
    %v221 = vunpack.c.0.s8 %v217
    %v222 = vunpack.c.0.s8 %v218
    %v223 = vunpack.c.0.s8 %v219
    %vm224 = vcmp.ne.s32.totalorder %v220, 0
    %vm225 = vcmp.ne.s32.totalorder %v221, 0
    %vm226 = vcmp.ne.s32.totalorder %v222, 0
    %vm227 = vcmp.ne.s32.totalorder %v223, 0
    %v228 = vld [vmem:[#allocation8] sm:$0xff]
    %229 = vadd.xlane.f32.xlu0 %v208
    %v230 = vpop.xlane.xlu0 %229
    %231 = vadd.xlane.f32.xlu0 %v209
    %v232 = vpop.xlane.xlu0 %231
    %233 = vadd.xlane.f32.xlu0 %v210
    %v234 = vpop.xlane.xlu0 %233
    %235 = vadd.xlane.f32.xlu0 %v211
    %v236 = vpop.xlane.xlu0 %235
    %v237 = vrcp.pop 128.0
    %v238 = vmul.f32 %v230, %v237
    %v239 = vmul.f32 %v232, %v237
    %v240 = vmul.f32 %v234, %v237
    %v241 = vmul.f32 %v236, %v237
    %v242 = vsub.f32 %v208, %v238
    %v243 = vsub.f32 %v209, %v239
    %v244 = vsub.f32 %v210, %v240
    %v245 = vsub.f32 %v211, %v241
    %v246 = vmul.f32 %v242, %v242
    %v247 = vmul.f32 %v243, %v243
    %v248 = vmul.f32 %v244, %v244
    %v249 = vmul.f32 %v245, %v245
    %250 = vadd.xlane.f32.xlu0 %v246
    %v251 = vpop.xlane.xlu0 %250
    %252 = vadd.xlane.f32.xlu0 %v247
    %v253 = vpop.xlane.xlu0 %252
    %254 = vadd.xlane.f32.xlu0 %v248
    %v255 = vpop.xlane.xlu0 %254
    %256 = vadd.xlane.f32.xlu0 %v249
    %v257 = vpop.xlane.xlu0 %256
    %v258 = vmul.f32 %v251, %v237
    %v259 = vmul.f32 %v253, %v237
    %v260 = vmul.f32 %v255, %v237
    %v261 = vmul.f32 %v257, %v237
    %v262 = vadd.f32 %v258, 1e-05
    %v263 = vadd.f32 %v259, 1e-05
    %v264 = vadd.f32 %v260, 1e-05
    %v265 = vadd.f32 %v261, 1e-05
    %v266 = vrsqrt.pop %v262
    %v267 = vrsqrt.pop %v263
    %v268 = vrsqrt.pop %v264
    %v269 = vrsqrt.pop %v265
    %v270 = vmul.f32 %v242, %v266
    %v271 = vmul.f32 %v243, %v267
    %v272 = vmul.f32 %v244, %v268
    %v273 = vmul.f32 %v245, %v269
    %v274 = vlaneseq
    %v275 = vshrl.u32 %v274, 7
    %v276 = vsub.s32 0, %v275
    %v277 = vrot.slane %v228, %v276
    %v278 = vmul.f32 %v270, %v277
    %v279 = vmul.f32 %v271, %v277
    %v280 = vmul.f32 %v272, %v277
    %v281 = vmul.f32 %v273, %v277
    %v282 = vlaneseq
    %v283 = vshrl.u32 %v282, 7
    %v284 = vsub.s32 1, %v283
    %v285 = vrot.slane %v228, %v284
    %v286 = vadd.f32 %v278, %v285
    %v287 = vadd.f32 %v279, %v285
    %v288 = vadd.f32 %v280, %v285
    %v289 = vadd.f32 %v281, %v285
    %v290 = vpack.c.bf16 %v287, %v286
    %v291 = vpack.c.bf16 %v289, %v288
    %v292 = vld [vmem:[#allocation10] sm:$0xff]
    %v293 = vld [vmem:[#allocation10 + $0x8] sm:$0xf]
    %v294 = vld [vmem:[#allocation10 + $0xc] sm:$0xff]
    %v295 = vld [vmem:[#allocation10 + $0x14] sm:$0xf]
    %v296 = vld [vmem:[#allocation10 + $0x18] sm:$0xff]
    %v297 = vld [vmem:[#allocation10 + $0x20] sm:$0xf]
    %v298 = vld [vmem:[#allocation10 + $0x24] sm:$0xff]
    %v299 = vld [vmem:[#allocation10 + $0x2c] sm:$0xf]
    %v300 = vld [vmem:[#allocation10 + $0x30] sm:$0xff]
    %v301 = vld [vmem:[#allocation10 + $0x38] sm:$0xf]
    %v302 = vld [vmem:[#allocation10 + $0x3c] sm:$0xff]
    %v303 = vld [vmem:[#allocation10 + $0x44] sm:$0xf]
    %v304 = vld [vmem:[#allocation10 + $0x48] sm:$0xff]
    %v305 = vld [vmem:[#allocation10 + $0x50] sm:$0xf]
    %v306 = vld [vmem:[#allocation10 + $0x54] sm:$0xff]
    %v307 = vld [vmem:[#allocation10 + $0x5c] sm:$0xf]
    %v308 = vld [vmem:[#allocation10 + $0x60] sm:$0xff]
    %v309 = vld [vmem:[#allocation10 + $0x68] sm:$0xf]
    %v310 = vld [vmem:[#allocation10 + $0x6c] sm:$0xff]
    %v311 = vld [vmem:[#allocation10 + $0x74] sm:$0xf]
    %v312 = vld [vmem:[#allocation10 + $0x78] sm:$0xff]
    %v313 = vld [vmem:[#allocation10 + $0x80] sm:$0xf]
    %v314 = vld [vmem:[#allocation10 + $0x84] sm:$0xff]
    %v315 = vld [vmem:[#allocation10 + $0x8c] sm:$0xf]
    %v316 = vld [vmem:[#allocation10 + $0x90] sm:$0xff]
    %v317 = vld [vmem:[#allocation10 + $0x98] sm:$0xf]
    %v318 = vld [vmem:[#allocation10 + $0x9c] sm:$0xff]
    %v319 = vld [vmem:[#allocation10 + $0xa4] sm:$0xf]
    %v320 = vld [vmem:[#allocation10 + $0xa8] sm:$0xff]
    %v321 = vld [vmem:[#allocation10 + $0xb0] sm:$0xf]
    %v322 = vld [vmem:[#allocation10 + $0xb4] sm:$0xff]
    %v323 = vld [vmem:[#allocation10 + $0xbc] sm:$0xf]
    %v324 = vld [vmem:[%s5] sm:$0x7]
    %v326 = vlaneseq
    %v327 = vshrl.u32 %v326, 7
    %v328 = vsub.s32 0, %v327
    %v329 = vrot.slane %v324, %v328
    %v330 = vlaneseq
    %v331 = vshrl.u32 %v330, 7
    %v332 = vsub.s32 1, %v331
    %v333 = vrot.slane %v324, %v332
    %v334 = vlaneseq
    %v335 = vshrl.u32 %v334, 7
    %v336 = vsub.s32 2, %v335
    %v337 = vrot.slane %v324, %v336
    %v373 = vunpack.c.l.b16 %v292
    %v374 = vunpack.c.h.b16 %v292
    %v375 = vunpack.c.l.b16 %v293
    %v376 = vunpack.c.l.b16 %v294
    %v377 = vunpack.c.h.b16 %v294
    %v378 = vunpack.c.l.b16 %v295
    %v379 = vunpack.c.l.b16 %v296
    %v380 = vunpack.c.h.b16 %v296
    %v381 = vunpack.c.l.b16 %v297
    %v382 = vunpack.c.l.b16 %v298
    %v383 = vunpack.c.h.b16 %v298
    %v384 = vunpack.c.l.b16 %v299
    %v385 = vunpack.c.l.b16 %v300
    %v386 = vunpack.c.h.b16 %v300
    %v387 = vunpack.c.l.b16 %v301
    %v388 = vunpack.c.l.b16 %v302
    %v389 = vunpack.c.h.b16 %v302
    %v390 = vunpack.c.l.b16 %v303
    %v391 = vunpack.c.l.b16 %v304
    %v392 = vunpack.c.h.b16 %v304
    %v393 = vunpack.c.l.b16 %v305
    %v394 = vunpack.c.l.b16 %v306
    %v395 = vunpack.c.h.b16 %v306
    %v396 = vunpack.c.l.b16 %v307
    %v397 = vunpack.c.l.b16 %v308
    %v398 = vunpack.c.h.b16 %v308
    %v399 = vunpack.c.l.b16 %v309
    %v400 = vunpack.c.l.b16 %v310
    %v401 = vunpack.c.h.b16 %v310
    %v402 = vunpack.c.l.b16 %v311
    %v403 = vunpack.c.l.b16 %v312
    %v404 = vunpack.c.h.b16 %v312
    %v405 = vunpack.c.l.b16 %v313
    %v406 = vunpack.c.l.b16 %v314
    %v407 = vunpack.c.h.b16 %v314
    %v408 = vunpack.c.l.b16 %v315
    %v409 = vunpack.c.l.b16 %v316
    %v410 = vunpack.c.h.b16 %v316
    %v411 = vunpack.c.l.b16 %v317
    %v412 = vunpack.c.l.b16 %v318
    %v413 = vunpack.c.h.b16 %v318
    %v414 = vunpack.c.l.b16 %v319
    %v415 = vunpack.c.l.b16 %v320
    %v416 = vunpack.c.h.b16 %v320
    %v417 = vunpack.c.l.b16 %v321
    %v418 = vunpack.c.l.b16 %v322
    %v419 = vunpack.c.h.b16 %v322
    %v420 = vunpack.c.l.b16 %v323
    %v421 = vpack.c.b16 %v376, %v373
    %v422 = vpack.c.b16 %v377, %v374
    %v423 = vpack.c.b16 %v378, %v375
    %v424 = vpack.c.b16 %v382, %v379
    %v425 = vpack.c.b16 %v383, %v380
    %v426 = vpack.c.b16 %v384, %v381
    %v427 = vpack.c.b16 %v388, %v385
    %v428 = vpack.c.b16 %v389, %v386
    %v429 = vpack.c.b16 %v390, %v387
    %v430 = vpack.c.b16 %v394, %v391
    %v431 = vpack.c.b16 %v395, %v392
    %v432 = vpack.c.b16 %v396, %v393
    %v433 = vpack.c.b16 %v400, %v397
    %v434 = vpack.c.b16 %v401, %v398
    %v435 = vpack.c.b16 %v402, %v399
    %v436 = vpack.c.b16 %v406, %v403
    %v437 = vpack.c.b16 %v407, %v404
    %v438 = vpack.c.b16 %v408, %v405
    %v439 = vpack.c.b16 %v412, %v409
    %v440 = vpack.c.b16 %v413, %v410
    %v441 = vpack.c.b16 %v414, %v411
    %v442 = vpack.c.b16 %v418, %v415
    %v443 = vpack.c.b16 %v419, %v416
    %v444 = vpack.c.b16 %v420, %v417
    %469 = vmatprep.subr.bf16.mxu0 %v443
    %470 = vmatpush1.bf16.msra.mxu0 %v442
    %471 = vmatprep.subr.bf16.mxu0 %v440
    %472 = vmatpush1.bf16.msra.mxu0 %v439
    %473 = vmatprep.subr.bf16.mxu0 %v437
    %474 = vmatpush1.bf16.msra.mxu0 %v436
    %475 = vmatprep.subr.bf16.mxu0 %v434
    %476 = vmatpush1.bf16.msra.mxu0 %v433
    %477 = vmatprep.subr.bf16.mxu0 %v431
    %478 = vmatpush1.bf16.msra.mxu0 %v430
    %479 = vmatprep.subr.bf16.mxu0 %v428
    %480 = vmatpush1.bf16.msra.mxu0 %v427
    %481 = vmatprep.subr.bf16.mxu0 %v425
    %482 = vmatpush1.bf16.msra.mxu0 %v424
    %483 = vmatprep.subr.bf16.mxu0 %v422
    %484 = vmatpush1.bf16.msra.mxu0 %v421
    %485 = vmatprep.subr.bf16.mxu0 0
    %486 = vmatpush2.bf16.msra.mxu0 0
    %487 = vmatprep.subr.bf16.mxu0 0
    %488 = vmatpush2.bf16.msra.mxu0 0
    %489 = vmatprep.subr.bf16.mxu0 0
    %490 = vmatpush2.bf16.msra.mxu0 0
    %491 = vmatprep.subr.bf16.mxu0 0
    %492 = vmatpush2.bf16.msra.mxu0 0
    %493 = vmatprep.subr.bf16.mxu0 0
    %494 = vmatpush2.bf16.msra.mxu0 0
    %495 = vmatprep.subr.bf16.mxu0 0
    %496 = vmatpush2.bf16.msra.mxu0 0
    %497 = vmatprep.subr.bf16.mxu0 0
    %498 = vmatpush2.bf16.msra.mxu0 0
    %499 = vmatprep.subr.bf16.mxu0 0
    %500 = vmatpush2.bf16.msra.mxu0 0
    %501 = vmatprep.mubr.bf16.mxu0 0
    %502 = vmatmul.mubr.bf16.gmra.mxu0 %v290
    %v503 = vpop.f32.mrf.mxu0
    %v504 = vadd.f32 %v329, %v503
    %v505 = vpop.f32.mrf.mxu0
    %v506 = vadd.f32 %v333, %v505
    %v507 = vpop.f32.mrf.mxu0
    %v508 = vadd.f32 %v329, %v507
    %v509 = vpop.f32.mrf.mxu0
    %v510 = vadd.f32 %v333, %v509
    %511 = vmatprep.mubr.bf16.mxu0 0
    %512 = vmatmul.mubr.bf16.gmra.mxu0 %v291
    %v513 = vpop.f32.mrf.mxu0
    %v514 = vadd.f32 %v329, %v513
    %v515 = vpop.f32.mrf.mxu0
    %v516 = vadd.f32 %v333, %v515
    %v517 = vpop.f32.mrf.mxu0
    %v518 = vadd.f32 %v329, %v517
    %v519 = vpop.f32.mrf.mxu0
    %v520 = vadd.f32 %v333, %v519
    %521 = vdwg.mxu0
    %522 = vmatprep.subr.bf16.mxu0 0
    %523 = vmatpush1.bf16.msra.mxu0 %v444
    %524 = vmatprep.subr.bf16.mxu0 0
    %525 = vmatpush1.bf16.msra.mxu0 %v441
    %526 = vmatprep.subr.bf16.mxu0 0
    %527 = vmatpush1.bf16.msra.mxu0 %v438
    %528 = vmatprep.subr.bf16.mxu0 0
    %529 = vmatpush1.bf16.msra.mxu0 %v435
    %530 = vmatprep.subr.bf16.mxu0 0
    %531 = vmatpush1.bf16.msra.mxu0 %v432
    %532 = vmatprep.subr.bf16.mxu0 0
    %533 = vmatpush1.bf16.msra.mxu0 %v429
    %534 = vmatprep.subr.bf16.mxu0 0
    %535 = vmatpush1.bf16.msra.mxu0 %v426
    %536 = vmatprep.subr.bf16.mxu0 0
    %537 = vmatpush1.bf16.msra.mxu0 %v423
    %538 = vmatprep.subr.bf16.mxu0 0
    %539 = vmatpush2.bf16.msra.mxu0 0
    %540 = vmatprep.subr.bf16.mxu0 0
    %541 = vmatpush2.bf16.msra.mxu0 0
    %542 = vmatprep.subr.bf16.mxu0 0
    %543 = vmatpush2.bf16.msra.mxu0 0
    %544 = vmatprep.subr.bf16.mxu0 0
    %545 = vmatpush2.bf16.msra.mxu0 0
    %546 = vmatprep.subr.bf16.mxu0 0
    %547 = vmatpush2.bf16.msra.mxu0 0
    %548 = vmatprep.subr.bf16.mxu0 0
    %549 = vmatpush2.bf16.msra.mxu0 0
    %550 = vmatprep.subr.bf16.mxu0 0
    %551 = vmatpush2.bf16.msra.mxu0 0
    %552 = vmatprep.subr.bf16.mxu0 0
    %553 = vmatpush2.bf16.msra.mxu0 0
    %554 = vmatprep.mubr.bf16.mxu0 0
    %555 = vmatmul.mubr.bf16.gmra.mxu0 %v290
    %v556 = vpop.f32.mrf.mxu0
    %v557 = vadd.f32 %v337, %v556
    %v558 = vpop.f32.mrf.mxu0
    %v559 = vpop.f32.mrf.mxu0
    %v560 = vadd.f32 %v337, %v559
    %v561 = vpop.f32.mrf.mxu0
    %562 = vmatprep.mubr.bf16.mxu0 0
    %563 = vmatmul.mubr.bf16.gmra.mxu0 %v291
    %v564 = vpop.f32.mrf.mxu0
    %v565 = vadd.f32 %v337, %v564
    %v566 = vpop.f32.mrf.mxu0
    %v567 = vpop.f32.mrf.mxu0
    %v568 = vadd.f32 %v337, %v567
    %v569 = vpop.f32.mrf.mxu0
    %570 = vdwg.mxu0
    %v571 = vpack.c.bf16 %v508, %v504
    %v572 = vpack.c.bf16 %v518, %v514
    %574 = vrot.lane.b32.xlu0 %v571, 96
    %v575 = vpop.permute.xlu0 %574
    %576 = vrot.lane.b32.xlu0 %v571, 64
    %v577 = vpop.permute.xlu0 %576
    %578 = vrot.lane.b32.xlu0 %v571, 32
    %v579 = vpop.permute.xlu0 %578
    %581 = vrot.lane.b32.xlu0 %v572, 96
    %v582 = vpop.permute.xlu0 %581
    %583 = vrot.lane.b32.xlu0 %v572, 64
    %v584 = vpop.permute.xlu0 %583
    %585 = vrot.lane.b32.xlu0 %v572, 32
    %v586 = vpop.permute.xlu0 %585
    %v587 = vpack.c.bf16 %v510, %v506
    %v588 = vpack.c.bf16 %v520, %v516
    %590 = vrot.lane.b32.xlu0 %v587, 96
    %v591 = vpop.permute.xlu0 %590
    %592 = vrot.lane.b32.xlu0 %v587, 64
    %v593 = vpop.permute.xlu0 %592
    %594 = vrot.lane.b32.xlu0 %v587, 32
    %v595 = vpop.permute.xlu0 %594
    %597 = vrot.lane.b32.xlu0 %v588, 96
    %v598 = vpop.permute.xlu0 %597
    %599 = vrot.lane.b32.xlu0 %v588, 64
    %v600 = vpop.permute.xlu0 %599
    %601 = vrot.lane.b32.xlu0 %v588, 32
    %v602 = vpop.permute.xlu0 %601
    %v603 = vpack.c.bf16 %v560, %v557
    %v604 = vpack.c.bf16 %v568, %v565
    %606 = vrot.lane.b32.xlu0 %v603, 96
    %v607 = vpop.permute.xlu0 %606
    %609 = vrot.lane.b32.xlu0 %v603, 64
    %v610 = vpop.permute.xlu0 %609
    %612 = vrot.lane.b32.xlu0 %v603, 32
    %v613 = vpop.permute.xlu0 %612
    %616 = vrot.lane.b32.xlu0 %v604, 96
    %v617 = vpop.permute.xlu0 %616
    %619 = vrot.lane.b32.xlu0 %v604, 64
    %v620 = vpop.permute.xlu0 %619
    %622 = vrot.lane.b32.xlu0 %v604, 32
    %v623 = vpop.permute.xlu0 %622
    %vm625 = vcmask 261120
    %v627 = vsel %vm625, %v571, 0
    %v630 = vsel %vm625, %v587, 0
    %632 = vmatprep.subr.bf16.mxu0 0
    %633 = vmatpush1.bf16.xpose.msra.mxu0 0
    %634 = vmatprep.subr.bf16.mxu0 0
    %635 = vmatpush1.bf16.xpose.msra.mxu0 0
    %636 = vmatprep.subr.bf16.mxu0 0
    %637 = vmatpush1.bf16.xpose.msra.mxu0 0
    %638 = vmatprep.subr.bf16.mxu0 0
    %639 = vmatpush1.bf16.xpose.msra.mxu0 0
    %640 = vmatprep.subr.bf16.mxu0 0
    %641 = vmatpush1.bf16.xpose.msra.mxu0 0
    %642 = vmatprep.subr.bf16.mxu0 0
    %643 = vmatpush1.bf16.xpose.msra.mxu0 0
    %644 = vmatprep.subr.bf16.mxu0 0
    %645 = vmatpush1.bf16.xpose.msra.mxu0 0
    %646 = vmatprep.subr.bf16.mxu0 0
    %647 = vmatpush1.bf16.xpose.msra.mxu0 %v630
    %648 = vmatprep.subr.bf16.mxu0 0
    %649 = vmatpush2.bf16.xpose.msra.mxu0 0
    %650 = vmatprep.subr.bf16.mxu0 0
    %651 = vmatpush2.bf16.xpose.msra.mxu0 0
    %652 = vmatprep.subr.bf16.mxu0 0
    %653 = vmatpush2.bf16.xpose.msra.mxu0 0
    %654 = vmatprep.subr.bf16.mxu0 0
    %655 = vmatpush2.bf16.xpose.msra.mxu0 0
    %656 = vmatprep.subr.bf16.mxu0 0
    %657 = vmatpush2.bf16.xpose.msra.mxu0 0
    %658 = vmatprep.subr.bf16.mxu0 0
    %659 = vmatpush2.bf16.xpose.msra.mxu0 0
    %660 = vmatprep.subr.bf16.mxu0 0
    %661 = vmatpush2.bf16.xpose.msra.mxu0 0
    %662 = vmatprep.subr.bf16.mxu0 0
    %663 = vmatpush2.bf16.xpose.msra.mxu0 0
    %664 = vmatprep.mubr.bf16.mxu0 0
    %665 = vmatmul.mubr.bf16.gmra.mxu0 %v627
    %v666 = vpop.f32.mrf.mxu0
    %v667 = vadd.f32 0.0, %v666
    %v668 = vpop.f32.mrf.mxu0
    %v669 = vpop.f32.mrf.mxu0
    %v670 = vadd.f32 0.0, %v669
    %v671 = vpop.f32.mrf.mxu0
    %672 = vdwg.mxu0
    %v674 = vsel %vm625, %v575, 0
    %v677 = vsel %vm625, %v591, 0
    %679 = vmatprep.subr.bf16.mxu0 0
    %680 = vmatpush1.bf16.xpose.msra.mxu0 0
    %681 = vmatprep.subr.bf16.mxu0 0
    %682 = vmatpush1.bf16.xpose.msra.mxu0 0
    %683 = vmatprep.subr.bf16.mxu0 0
    %684 = vmatpush1.bf16.xpose.msra.mxu0 0
    %685 = vmatprep.subr.bf16.mxu0 0
    %686 = vmatpush1.bf16.xpose.msra.mxu0 0
    %687 = vmatprep.subr.bf16.mxu0 0
    %688 = vmatpush1.bf16.xpose.msra.mxu0 0
    %689 = vmatprep.subr.bf16.mxu0 0
    %690 = vmatpush1.bf16.xpose.msra.mxu0 0
    %691 = vmatprep.subr.bf16.mxu0 0
    %692 = vmatpush1.bf16.xpose.msra.mxu0 0
    %693 = vmatprep.subr.bf16.mxu0 0
    %694 = vmatpush1.bf16.xpose.msra.mxu0 %v677
    %695 = vmatprep.subr.bf16.mxu0 0
    %696 = vmatpush2.bf16.xpose.msra.mxu0 0
    %697 = vmatprep.subr.bf16.mxu0 0
    %698 = vmatpush2.bf16.xpose.msra.mxu0 0
    %699 = vmatprep.subr.bf16.mxu0 0
    %700 = vmatpush2.bf16.xpose.msra.mxu0 0
    %701 = vmatprep.subr.bf16.mxu0 0
    %702 = vmatpush2.bf16.xpose.msra.mxu0 0
    %703 = vmatprep.subr.bf16.mxu0 0
    %704 = vmatpush2.bf16.xpose.msra.mxu0 0
    %705 = vmatprep.subr.bf16.mxu0 0
    %706 = vmatpush2.bf16.xpose.msra.mxu0 0
    %707 = vmatprep.subr.bf16.mxu0 0
    %708 = vmatpush2.bf16.xpose.msra.mxu0 0
    %709 = vmatprep.subr.bf16.mxu0 0
    %710 = vmatpush2.bf16.xpose.msra.mxu0 0
    %711 = vmatprep.mubr.bf16.mxu0 0
    %712 = vmatmul.mubr.bf16.gmra.mxu0 %v674
    %v713 = vpop.f32.mrf.mxu0
    %v714 = vadd.f32 0.0, %v713
    %v715 = vpop.f32.mrf.mxu0
    %v716 = vpop.f32.mrf.mxu0
    %v717 = vadd.f32 0.0, %v716
    %v718 = vpop.f32.mrf.mxu0
    %719 = vdwg.mxu0
    %v721 = vsel %vm625, %v577, 0
    %v724 = vsel %vm625, %v593, 0
    %726 = vmatprep.subr.bf16.mxu0 0
    %727 = vmatpush1.bf16.xpose.msra.mxu0 0
    %728 = vmatprep.subr.bf16.mxu0 0
    %729 = vmatpush1.bf16.xpose.msra.mxu0 0
    %730 = vmatprep.subr.bf16.mxu0 0
    %731 = vmatpush1.bf16.xpose.msra.mxu0 0
    %732 = vmatprep.subr.bf16.mxu0 0
    %733 = vmatpush1.bf16.xpose.msra.mxu0 0
    %734 = vmatprep.subr.bf16.mxu0 0
    %735 = vmatpush1.bf16.xpose.msra.mxu0 0
    %736 = vmatprep.subr.bf16.mxu0 0
    %737 = vmatpush1.bf16.xpose.msra.mxu0 0
    %738 = vmatprep.subr.bf16.mxu0 0
    %739 = vmatpush1.bf16.xpose.msra.mxu0 0
    %740 = vmatprep.subr.bf16.mxu0 0
    %741 = vmatpush1.bf16.xpose.msra.mxu0 %v724
    %742 = vmatprep.subr.bf16.mxu0 0
    %743 = vmatpush2.bf16.xpose.msra.mxu0 0
    %744 = vmatprep.subr.bf16.mxu0 0
    %745 = vmatpush2.bf16.xpose.msra.mxu0 0
    %746 = vmatprep.subr.bf16.mxu0 0
    %747 = vmatpush2.bf16.xpose.msra.mxu0 0
    %748 = vmatprep.subr.bf16.mxu0 0
    %749 = vmatpush2.bf16.xpose.msra.mxu0 0
    %750 = vmatprep.subr.bf16.mxu0 0
    %751 = vmatpush2.bf16.xpose.msra.mxu0 0
    %752 = vmatprep.subr.bf16.mxu0 0
    %753 = vmatpush2.bf16.xpose.msra.mxu0 0
    %754 = vmatprep.subr.bf16.mxu0 0
    %755 = vmatpush2.bf16.xpose.msra.mxu0 0
    %756 = vmatprep.subr.bf16.mxu0 0
    %757 = vmatpush2.bf16.xpose.msra.mxu0 0
    %758 = vmatprep.mubr.bf16.mxu0 0
    %759 = vmatmul.mubr.bf16.gmra.mxu0 %v721
    %v760 = vpop.f32.mrf.mxu0
    %v761 = vadd.f32 0.0, %v760
    %v762 = vpop.f32.mrf.mxu0
    %v763 = vpop.f32.mrf.mxu0
    %v764 = vadd.f32 0.0, %v763
    %v765 = vpop.f32.mrf.mxu0
    %766 = vdwg.mxu0
    %v768 = vsel %vm625, %v579, 0
    %v771 = vsel %vm625, %v595, 0
    %773 = vmatprep.subr.bf16.mxu0 0
    %774 = vmatpush1.bf16.xpose.msra.mxu0 0
    %775 = vmatprep.subr.bf16.mxu0 0
    %776 = vmatpush1.bf16.xpose.msra.mxu0 0
    %777 = vmatprep.subr.bf16.mxu0 0
    %778 = vmatpush1.bf16.xpose.msra.mxu0 0
    %779 = vmatprep.subr.bf16.mxu0 0
    %780 = vmatpush1.bf16.xpose.msra.mxu0 0
    %781 = vmatprep.subr.bf16.mxu0 0
    %782 = vmatpush1.bf16.xpose.msra.mxu0 0
    %783 = vmatprep.subr.bf16.mxu0 0
    %784 = vmatpush1.bf16.xpose.msra.mxu0 0
    %785 = vmatprep.subr.bf16.mxu0 0
    %786 = vmatpush1.bf16.xpose.msra.mxu0 0
    %787 = vmatprep.subr.bf16.mxu0 0
    %788 = vmatpush1.bf16.xpose.msra.mxu0 %v771
    %789 = vmatprep.subr.bf16.mxu0 0
    %790 = vmatpush2.bf16.xpose.msra.mxu0 0
    %791 = vmatprep.subr.bf16.mxu0 0
    %792 = vmatpush2.bf16.xpose.msra.mxu0 0
    %793 = vmatprep.subr.bf16.mxu0 0
    %794 = vmatpush2.bf16.xpose.msra.mxu0 0
    %795 = vmatprep.subr.bf16.mxu0 0
    %796 = vmatpush2.bf16.xpose.msra.mxu0 0
    %797 = vmatprep.subr.bf16.mxu0 0
    %798 = vmatpush2.bf16.xpose.msra.mxu0 0
    %799 = vmatprep.subr.bf16.mxu0 0
    %800 = vmatpush2.bf16.xpose.msra.mxu0 0
    %801 = vmatprep.subr.bf16.mxu0 0
    %802 = vmatpush2.bf16.xpose.msra.mxu0 0
    %803 = vmatprep.subr.bf16.mxu0 0
    %804 = vmatpush2.bf16.xpose.msra.mxu0 0
    %805 = vmatprep.mubr.bf16.mxu0 0
    %806 = vmatmul.mubr.bf16.gmra.mxu0 %v768
    %v807 = vpop.f32.mrf.mxu0
    %v808 = vadd.f32 0.0, %v807
    %v809 = vpop.f32.mrf.mxu0
    %v810 = vpop.f32.mrf.mxu0
    %v811 = vadd.f32 0.0, %v810
    %v812 = vpop.f32.mrf.mxu0
    %813 = vdwg.mxu0
    %v815 = vsel %vm625, %v572, 0
    %v818 = vsel %vm625, %v588, 0
    %820 = vmatprep.subr.bf16.mxu0 0
    %821 = vmatpush1.bf16.xpose.msra.mxu0 0
    %822 = vmatprep.subr.bf16.mxu0 0
    %823 = vmatpush1.bf16.xpose.msra.mxu0 0
    %824 = vmatprep.subr.bf16.mxu0 0
    %825 = vmatpush1.bf16.xpose.msra.mxu0 0
    %826 = vmatprep.subr.bf16.mxu0 0
    %827 = vmatpush1.bf16.xpose.msra.mxu0 0
    %828 = vmatprep.subr.bf16.mxu0 0
    %829 = vmatpush1.bf16.xpose.msra.mxu0 0
    %830 = vmatprep.subr.bf16.mxu0 0
    %831 = vmatpush1.bf16.xpose.msra.mxu0 0
    %832 = vmatprep.subr.bf16.mxu0 0
    %833 = vmatpush1.bf16.xpose.msra.mxu0 0
    %834 = vmatprep.subr.bf16.mxu0 0
    %835 = vmatpush1.bf16.xpose.msra.mxu0 %v818
    %836 = vmatprep.subr.bf16.mxu0 0
    %837 = vmatpush2.bf16.xpose.msra.mxu0 0
    %838 = vmatprep.subr.bf16.mxu0 0
    %839 = vmatpush2.bf16.xpose.msra.mxu0 0
    %840 = vmatprep.subr.bf16.mxu0 0
    %841 = vmatpush2.bf16.xpose.msra.mxu0 0
    %842 = vmatprep.subr.bf16.mxu0 0
    %843 = vmatpush2.bf16.xpose.msra.mxu0 0
    %844 = vmatprep.subr.bf16.mxu0 0
    %845 = vmatpush2.bf16.xpose.msra.mxu0 0
    %846 = vmatprep.subr.bf16.mxu0 0
    %847 = vmatpush2.bf16.xpose.msra.mxu0 0
    %848 = vmatprep.subr.bf16.mxu0 0
    %849 = vmatpush2.bf16.xpose.msra.mxu0 0
    %850 = vmatprep.subr.bf16.mxu0 0
    %851 = vmatpush2.bf16.xpose.msra.mxu0 0
    %852 = vmatprep.mubr.bf16.mxu0 0
    %853 = vmatmul.mubr.bf16.gmra.mxu0 %v815
    %v854 = vpop.f32.mrf.mxu0
    %v855 = vadd.f32 0.0, %v854
    %v856 = vpop.f32.mrf.mxu0
    %v857 = vpop.f32.mrf.mxu0
    %v858 = vadd.f32 0.0, %v857
    %v859 = vpop.f32.mrf.mxu0
    %860 = vdwg.mxu0
    %v862 = vsel %vm625, %v582, 0
    %v865 = vsel %vm625, %v598, 0
    %867 = vmatprep.subr.bf16.mxu0 0
    %868 = vmatpush1.bf16.xpose.msra.mxu0 0
    %869 = vmatprep.subr.bf16.mxu0 0
    %870 = vmatpush1.bf16.xpose.msra.mxu0 0
    %871 = vmatprep.subr.bf16.mxu0 0
    %872 = vmatpush1.bf16.xpose.msra.mxu0 0
    %873 = vmatprep.subr.bf16.mxu0 0
    %874 = vmatpush1.bf16.xpose.msra.mxu0 0
    %875 = vmatprep.subr.bf16.mxu0 0
    %876 = vmatpush1.bf16.xpose.msra.mxu0 0
    %877 = vmatprep.subr.bf16.mxu0 0
    %878 = vmatpush1.bf16.xpose.msra.mxu0 0
    %879 = vmatprep.subr.bf16.mxu0 0
    %880 = vmatpush1.bf16.xpose.msra.mxu0 0
    %881 = vmatprep.subr.bf16.mxu0 0
    %882 = vmatpush1.bf16.xpose.msra.mxu0 %v865
    %883 = vmatprep.subr.bf16.mxu0 0
    %884 = vmatpush2.bf16.xpose.msra.mxu0 0
    %885 = vmatprep.subr.bf16.mxu0 0
    %886 = vmatpush2.bf16.xpose.msra.mxu0 0
    %887 = vmatprep.subr.bf16.mxu0 0
    %888 = vmatpush2.bf16.xpose.msra.mxu0 0
    %889 = vmatprep.subr.bf16.mxu0 0
    %890 = vmatpush2.bf16.xpose.msra.mxu0 0
    %891 = vmatprep.subr.bf16.mxu0 0
    %892 = vmatpush2.bf16.xpose.msra.mxu0 0
    %893 = vmatprep.subr.bf16.mxu0 0
    %894 = vmatpush2.bf16.xpose.msra.mxu0 0
    %895 = vmatprep.subr.bf16.mxu0 0
    %896 = vmatpush2.bf16.xpose.msra.mxu0 0
    %897 = vmatprep.subr.bf16.mxu0 0
    %898 = vmatpush2.bf16.xpose.msra.mxu0 0
    %899 = vmatprep.mubr.bf16.mxu0 0
    %900 = vmatmul.mubr.bf16.gmra.mxu0 %v862
    %v901 = vpop.f32.mrf.mxu0
    %v902 = vadd.f32 0.0, %v901
    %v903 = vpop.f32.mrf.mxu0
    %v904 = vpop.f32.mrf.mxu0
    %v905 = vadd.f32 0.0, %v904
    %v906 = vpop.f32.mrf.mxu0
    %907 = vdwg.mxu0
    %v909 = vsel %vm625, %v584, 0
    %v912 = vsel %vm625, %v600, 0
    %914 = vmatprep.subr.bf16.mxu0 0
    %915 = vmatpush1.bf16.xpose.msra.mxu0 0
    %916 = vmatprep.subr.bf16.mxu0 0
    %917 = vmatpush1.bf16.xpose.msra.mxu0 0
    %918 = vmatprep.subr.bf16.mxu0 0
    %919 = vmatpush1.bf16.xpose.msra.mxu0 0
    %920 = vmatprep.subr.bf16.mxu0 0
    %921 = vmatpush1.bf16.xpose.msra.mxu0 0
    %922 = vmatprep.subr.bf16.mxu0 0
    %923 = vmatpush1.bf16.xpose.msra.mxu0 0
    %924 = vmatprep.subr.bf16.mxu0 0
    %925 = vmatpush1.bf16.xpose.msra.mxu0 0
    %926 = vmatprep.subr.bf16.mxu0 0
    %927 = vmatpush1.bf16.xpose.msra.mxu0 0
    %928 = vmatprep.subr.bf16.mxu0 0
    %929 = vmatpush1.bf16.xpose.msra.mxu0 %v912
    %930 = vmatprep.subr.bf16.mxu0 0
    %931 = vmatpush2.bf16.xpose.msra.mxu0 0
    %932 = vmatprep.subr.bf16.mxu0 0
    %933 = vmatpush2.bf16.xpose.msra.mxu0 0
    %934 = vmatprep.subr.bf16.mxu0 0
    %935 = vmatpush2.bf16.xpose.msra.mxu0 0
    %936 = vmatprep.subr.bf16.mxu0 0
    %937 = vmatpush2.bf16.xpose.msra.mxu0 0
    %938 = vmatprep.subr.bf16.mxu0 0
    %939 = vmatpush2.bf16.xpose.msra.mxu0 0
    %940 = vmatprep.subr.bf16.mxu0 0
    %941 = vmatpush2.bf16.xpose.msra.mxu0 0
    %942 = vmatprep.subr.bf16.mxu0 0
    %943 = vmatpush2.bf16.xpose.msra.mxu0 0
    %944 = vmatprep.subr.bf16.mxu0 0
    %945 = vmatpush2.bf16.xpose.msra.mxu0 0
    %946 = vmatprep.mubr.bf16.mxu0 0
    %947 = vmatmul.mubr.bf16.gmra.mxu0 %v909
    %v948 = vpop.f32.mrf.mxu0
    %v949 = vadd.f32 0.0, %v948
    %v950 = vpop.f32.mrf.mxu0
    %v951 = vpop.f32.mrf.mxu0
    %v952 = vadd.f32 0.0, %v951
    %v953 = vpop.f32.mrf.mxu0
    %954 = vdwg.mxu0
    %v956 = vsel %vm625, %v586, 0
    %v959 = vsel %vm625, %v602, 0
    %961 = vmatprep.subr.bf16.mxu0 0
    %962 = vmatpush1.bf16.xpose.msra.mxu0 0
    %963 = vmatprep.subr.bf16.mxu0 0
    %964 = vmatpush1.bf16.xpose.msra.mxu0 0
    %965 = vmatprep.subr.bf16.mxu0 0
    %966 = vmatpush1.bf16.xpose.msra.mxu0 0
    %967 = vmatprep.subr.bf16.mxu0 0
    %968 = vmatpush1.bf16.xpose.msra.mxu0 0
    %969 = vmatprep.subr.bf16.mxu0 0
    %970 = vmatpush1.bf16.xpose.msra.mxu0 0
    %971 = vmatprep.subr.bf16.mxu0 0
    %972 = vmatpush1.bf16.xpose.msra.mxu0 0
    %973 = vmatprep.subr.bf16.mxu0 0
    %974 = vmatpush1.bf16.xpose.msra.mxu0 0
    %975 = vmatprep.subr.bf16.mxu0 0
    %976 = vmatpush1.bf16.xpose.msra.mxu0 %v959
    %977 = vmatprep.subr.bf16.mxu0 0
    %978 = vmatpush2.bf16.xpose.msra.mxu0 0
    %979 = vmatprep.subr.bf16.mxu0 0
    %980 = vmatpush2.bf16.xpose.msra.mxu0 0
    %981 = vmatprep.subr.bf16.mxu0 0
    %982 = vmatpush2.bf16.xpose.msra.mxu0 0
    %983 = vmatprep.subr.bf16.mxu0 0
    %984 = vmatpush2.bf16.xpose.msra.mxu0 0
    %985 = vmatprep.subr.bf16.mxu0 0
    %986 = vmatpush2.bf16.xpose.msra.mxu0 0
    %987 = vmatprep.subr.bf16.mxu0 0
    %988 = vmatpush2.bf16.xpose.msra.mxu0 0
    %989 = vmatprep.subr.bf16.mxu0 0
    %990 = vmatpush2.bf16.xpose.msra.mxu0 0
    %991 = vmatprep.subr.bf16.mxu0 0
    %992 = vmatpush2.bf16.xpose.msra.mxu0 0
    %993 = vmatprep.mubr.bf16.mxu0 0
    %994 = vmatmul.mubr.bf16.gmra.mxu0 %v956
    %v995 = vpop.f32.mrf.mxu0
    %v996 = vadd.f32 0.0, %v995
    %v997 = vpop.f32.mrf.mxu0
    %v998 = vpop.f32.mrf.mxu0
    %v999 = vadd.f32 0.0, %v998
    %v1000 = vpop.f32.mrf.mxu0
    %1001 = vdwg.mxu0
    %v1002 = vmul.f32 %v667, 0.17677669
    %v1003 = vmul.f32 %v670, 0.17677669
    %v1004 = vmul.f32 %v714, 0.17677669
    %v1005 = vmul.f32 %v717, 0.17677669
    %v1006 = vmul.f32 %v761, 0.17677669
    %v1007 = vmul.f32 %v764, 0.17677669
    %v1008 = vmul.f32 %v808, 0.17677669
    %v1009 = vmul.f32 %v811, 0.17677669
    %v1010 = vmul.f32 %v855, 0.17677669
    %v1011 = vmul.f32 %v858, 0.17677669
    %v1012 = vmul.f32 %v902, 0.17677669
    %v1013 = vmul.f32 %v905, 0.17677669
    %v1014 = vmul.f32 %v949, 0.17677669
    %v1015 = vmul.f32 %v952, 0.17677669
    %v1016 = vmul.f32 %v996, 0.17677669
    %v1017 = vmul.f32 %v999, 0.17677669
    %v1018 = vsel %vm224, -1e+30, %v1002
    %v1019 = vsel %vm225, -1e+30, %v1003
    %v1020 = vsel %vm224, -1e+30, %v1004
    %v1021 = vsel %vm225, -1e+30, %v1005
    %v1022 = vsel %vm224, -1e+30, %v1006
    %v1023 = vsel %vm225, -1e+30, %v1007
    %v1024 = vsel %vm224, -1e+30, %v1008
    %v1025 = vsel %vm225, -1e+30, %v1009
    %v1026 = vsel %vm226, -1e+30, %v1010
    %v1027 = vsel %vm227, -1e+30, %v1011
    %v1028 = vsel %vm226, -1e+30, %v1012
    %v1029 = vsel %vm227, -1e+30, %v1013
    %v1030 = vsel %vm226, -1e+30, %v1014
    %v1031 = vsel %vm227, -1e+30, %v1015
    %v1032 = vsel %vm226, -1e+30, %v1016
    %v1033 = vsel %vm227, -1e+30, %v1017
    %vm1034 = vcmask 130048
    %v1035 = vsel %vm1034, %v1018, -inf
    %1036 = vmax.xlane.f32.xlu0 %v1035
    %v1037 = vpop.xlane.xlu0 %1036
    %v1038 = vsel %vm1034, %v1019, -inf
    %1039 = vmax.xlane.f32.xlu0 %v1038
    %v1040 = vpop.xlane.xlu0 %1039
    %v1041 = vsel %vm1034, %v1020, -inf
    %1042 = vmax.xlane.f32.xlu0 %v1041
    %v1043 = vpop.xlane.xlu0 %1042
    %v1044 = vsel %vm1034, %v1021, -inf
    %1045 = vmax.xlane.f32.xlu0 %v1044
    %v1046 = vpop.xlane.xlu0 %1045
    %v1047 = vsel %vm1034, %v1022, -inf
    %1048 = vmax.xlane.f32.xlu0 %v1047
    %v1049 = vpop.xlane.xlu0 %1048
    %v1050 = vsel %vm1034, %v1023, -inf
    %1051 = vmax.xlane.f32.xlu0 %v1050
    %v1052 = vpop.xlane.xlu0 %1051
    %v1053 = vsel %vm1034, %v1024, -inf
    %1054 = vmax.xlane.f32.xlu0 %v1053
    %v1055 = vpop.xlane.xlu0 %1054
    %v1056 = vsel %vm1034, %v1025, -inf
    %1057 = vmax.xlane.f32.xlu0 %v1056
    %v1058 = vpop.xlane.xlu0 %1057
    %v1059 = vsel %vm1034, %v1026, -inf
    %1060 = vmax.xlane.f32.xlu0 %v1059
    %v1061 = vpop.xlane.xlu0 %1060
    %v1062 = vsel %vm1034, %v1027, -inf
    %1063 = vmax.xlane.f32.xlu0 %v1062
    %v1064 = vpop.xlane.xlu0 %1063
    %v1065 = vsel %vm1034, %v1028, -inf
    %1066 = vmax.xlane.f32.xlu0 %v1065
    %v1067 = vpop.xlane.xlu0 %1066
    %v1068 = vsel %vm1034, %v1029, -inf
    %1069 = vmax.xlane.f32.xlu0 %v1068
    %v1070 = vpop.xlane.xlu0 %1069
    %v1071 = vsel %vm1034, %v1030, -inf
    %1072 = vmax.xlane.f32.xlu0 %v1071
    %v1073 = vpop.xlane.xlu0 %1072
    %v1074 = vsel %vm1034, %v1031, -inf
    %1075 = vmax.xlane.f32.xlu0 %v1074
    %v1076 = vpop.xlane.xlu0 %1075
    %v1077 = vsel %vm1034, %v1032, -inf
    %1078 = vmax.xlane.f32.xlu0 %v1077
    %v1079 = vpop.xlane.xlu0 %1078
    %v1080 = vsel %vm1034, %v1033, -inf
    %1081 = vmax.xlane.f32.xlu0 %v1080
    %v1082 = vpop.xlane.xlu0 %1081
    %v1083 = vsub.f32 %v1018, %v1037
    %v1084 = vsub.f32 %v1019, %v1040
    %v1085 = vsub.f32 %v1020, %v1043
    %v1086 = vsub.f32 %v1021, %v1046
    %v1087 = vsub.f32 %v1022, %v1049
    %v1088 = vsub.f32 %v1023, %v1052
    %v1089 = vsub.f32 %v1024, %v1055
    %v1090 = vsub.f32 %v1025, %v1058
    %v1091 = vsub.f32 %v1026, %v1061
    %v1092 = vsub.f32 %v1027, %v1064
    %v1093 = vsub.f32 %v1028, %v1067
    %v1094 = vsub.f32 %v1029, %v1070
    %v1095 = vsub.f32 %v1030, %v1073
    %v1096 = vsub.f32 %v1031, %v1076
    %v1097 = vsub.f32 %v1032, %v1079
    %v1098 = vsub.f32 %v1033, %v1082
    %v1099 = vmul.f32 %v1083, 1.442695
    %v1100 = vpow.pop %v1099
    %v1101 = vmul.f32 %v1084, 1.442695
    %v1102 = vpow.pop %v1101
    %v1103 = vmul.f32 %v1085, 1.442695
    %v1104 = vpow.pop %v1103
    %v1105 = vmul.f32 %v1086, 1.442695
    %v1106 = vpow.pop %v1105
    %v1107 = vmul.f32 %v1087, 1.442695
    %v1108 = vpow.pop %v1107
    %v1109 = vmul.f32 %v1088, 1.442695
    %v1110 = vpow.pop %v1109
    %v1111 = vmul.f32 %v1089, 1.442695
    %v1112 = vpow.pop %v1111
    %v1113 = vmul.f32 %v1090, 1.442695
    %v1114 = vpow.pop %v1113
    %v1115 = vmul.f32 %v1091, 1.442695
    %v1116 = vpow.pop %v1115
    %v1117 = vmul.f32 %v1092, 1.442695
    %v1118 = vpow.pop %v1117
    %v1119 = vmul.f32 %v1093, 1.442695
    %v1120 = vpow.pop %v1119
    %v1121 = vmul.f32 %v1094, 1.442695
    %v1122 = vpow.pop %v1121
    %v1123 = vmul.f32 %v1095, 1.442695
    %v1124 = vpow.pop %v1123
    %v1125 = vmul.f32 %v1096, 1.442695
    %v1126 = vpow.pop %v1125
    %v1127 = vmul.f32 %v1097, 1.442695
    %v1128 = vpow.pop %v1127
    %v1129 = vmul.f32 %v1098, 1.442695
    %v1130 = vpow.pop %v1129
    %v1131 = vsel %vm1034, %v1100, 0.0
    %1132 = vadd.xlane.f32.xlu0 %v1131
    %v1133 = vpop.xlane.xlu0 %1132
    %v1134 = vsel %vm1034, %v1102, 0.0
    %1135 = vadd.xlane.f32.xlu0 %v1134
    %v1136 = vpop.xlane.xlu0 %1135
    %v1137 = vsel %vm1034, %v1104, 0.0
    %1138 = vadd.xlane.f32.xlu0 %v1137
    %v1139 = vpop.xlane.xlu0 %1138
    %v1140 = vsel %vm1034, %v1106, 0.0
    %1141 = vadd.xlane.f32.xlu0 %v1140
    %v1142 = vpop.xlane.xlu0 %1141
    %v1143 = vsel %vm1034, %v1108, 0.0
    %1144 = vadd.xlane.f32.xlu0 %v1143
    %v1145 = vpop.xlane.xlu0 %1144
    %v1146 = vsel %vm1034, %v1110, 0.0
    %1147 = vadd.xlane.f32.xlu0 %v1146
    %v1148 = vpop.xlane.xlu0 %1147
    %v1149 = vsel %vm1034, %v1112, 0.0
    %1150 = vadd.xlane.f32.xlu0 %v1149
    %v1151 = vpop.xlane.xlu0 %1150
    %v1152 = vsel %vm1034, %v1114, 0.0
    %1153 = vadd.xlane.f32.xlu0 %v1152
    %v1154 = vpop.xlane.xlu0 %1153
    %v1155 = vsel %vm1034, %v1116, 0.0
    %1156 = vadd.xlane.f32.xlu0 %v1155
    %v1157 = vpop.xlane.xlu0 %1156
    %v1158 = vsel %vm1034, %v1118, 0.0
    %1159 = vadd.xlane.f32.xlu0 %v1158
    %v1160 = vpop.xlane.xlu0 %1159
    %v1161 = vsel %vm1034, %v1120, 0.0
    %1162 = vadd.xlane.f32.xlu0 %v1161
    %v1163 = vpop.xlane.xlu0 %1162
    %v1164 = vsel %vm1034, %v1122, 0.0
    %1165 = vadd.xlane.f32.xlu0 %v1164
    %v1166 = vpop.xlane.xlu0 %1165
    %v1167 = vsel %vm1034, %v1124, 0.0
    %1168 = vadd.xlane.f32.xlu0 %v1167
    %v1169 = vpop.xlane.xlu0 %1168
    %v1170 = vsel %vm1034, %v1126, 0.0
    %1171 = vadd.xlane.f32.xlu0 %v1170
    %v1172 = vpop.xlane.xlu0 %1171
    %v1173 = vsel %vm1034, %v1128, 0.0
    %1174 = vadd.xlane.f32.xlu0 %v1173
    %v1175 = vpop.xlane.xlu0 %1174
    %v1176 = vsel %vm1034, %v1130, 0.0
    %1177 = vadd.xlane.f32.xlu0 %v1176
    %v1178 = vpop.xlane.xlu0 %1177
    %v1179 = vrcp.pop %v1133
    %v1180 = vrcp.pop %v1136
    %v1181 = vrcp.pop %v1139
    %v1182 = vrcp.pop %v1142
    %v1183 = vrcp.pop %v1145
    %v1184 = vrcp.pop %v1148
    %v1185 = vrcp.pop %v1151
    %v1186 = vrcp.pop %v1154
    %v1187 = vrcp.pop %v1157
    %v1188 = vrcp.pop %v1160
    %v1189 = vrcp.pop %v1163
    %v1190 = vrcp.pop %v1166
    %v1191 = vrcp.pop %v1169
    %v1192 = vrcp.pop %v1172
    %v1193 = vrcp.pop %v1175
    %v1194 = vrcp.pop %v1178
    %v1195 = vmul.f32 %v1100, %v1179
    %v1196 = vmul.f32 %v1102, %v1180
    %v1197 = vmul.f32 %v1104, %v1181
    %v1198 = vmul.f32 %v1106, %v1182
    %v1199 = vmul.f32 %v1108, %v1183
    %v1200 = vmul.f32 %v1110, %v1184
    %v1201 = vmul.f32 %v1112, %v1185
    %v1202 = vmul.f32 %v1114, %v1186
    %v1203 = vmul.f32 %v1116, %v1187
    %v1204 = vmul.f32 %v1118, %v1188
    %v1205 = vmul.f32 %v1120, %v1189
    %v1206 = vmul.f32 %v1122, %v1190
    %v1207 = vmul.f32 %v1124, %v1191
    %v1208 = vmul.f32 %v1126, %v1192
    %v1209 = vmul.f32 %v1128, %v1193
    %v1210 = vmul.f32 %v1130, %v1194
    %v1211 = vpack.c.bf16 %v1196, %v1195
    %v1212 = vpack.c.bf16 %v1198, %v1197
    %v1213 = vpack.c.bf16 %v1200, %v1199
    %v1214 = vpack.c.bf16 %v1202, %v1201
    %v1215 = vpack.c.bf16 %v1204, %v1203
    %v1216 = vpack.c.bf16 %v1206, %v1205
    %v1217 = vpack.c.bf16 %v1208, %v1207
    %v1218 = vpack.c.bf16 %v1210, %v1209
    %v1220 = vsel %vm1034, %v1211, 0
    %1222 = vmatprep.subr.bf16.mxu0 0
    %1223 = vmatpush1.bf16.msra.mxu0 0
    %1224 = vmatprep.subr.bf16.mxu0 0
    %1225 = vmatpush1.bf16.msra.mxu0 0
    %1226 = vmatprep.subr.bf16.mxu0 0
    %1227 = vmatpush1.bf16.msra.mxu0 0
    %1228 = vmatprep.subr.bf16.mxu0 0
    %1229 = vmatpush1.bf16.msra.mxu0 0
    %1230 = vmatprep.subr.bf16.mxu0 0
    %1231 = vmatpush1.bf16.msra.mxu0 0
    %1232 = vmatprep.subr.bf16.mxu0 0
    %1233 = vmatpush1.bf16.msra.mxu0 0
    %1234 = vmatprep.subr.bf16.mxu0 0
    %1235 = vmatpush1.bf16.msra.mxu0 0
    %1236 = vmatprep.subr.bf16.mxu0 0
    %1237 = vmatpush1.bf16.msra.mxu0 %v603
    %1238 = vmatprep.subr.bf16.mxu0 0
    %1239 = vmatpush2.bf16.msra.mxu0 0
    %1240 = vmatprep.subr.bf16.mxu0 0
    %1241 = vmatpush2.bf16.msra.mxu0 0
    %1242 = vmatprep.subr.bf16.mxu0 0
    %1243 = vmatpush2.bf16.msra.mxu0 0
    %1244 = vmatprep.subr.bf16.mxu0 0
    %1245 = vmatpush2.bf16.msra.mxu0 0
    %1246 = vmatprep.subr.bf16.mxu0 0
    %1247 = vmatpush2.bf16.msra.mxu0 0
    %1248 = vmatprep.subr.bf16.mxu0 0
    %1249 = vmatpush2.bf16.msra.mxu0 0
    %1250 = vmatprep.subr.bf16.mxu0 0
    %1251 = vmatpush2.bf16.msra.mxu0 0
    %1252 = vmatprep.subr.bf16.mxu0 0
    %1253 = vmatpush2.bf16.msra.mxu0 0
    %1254 = vmatprep.mubr.bf16.mxu0 0
    %1255 = vmatmul.mubr.bf16.gmra.mxu0 %v1220
    %v1256 = vpop.f32.mrf.mxu0
    %v1257 = vadd.f32 0.0, %v1256
    %v1258 = vpop.f32.mrf.mxu0
    %v1259 = vpop.f32.mrf.mxu0
    %v1260 = vadd.f32 0.0, %v1259
    %v1261 = vpop.f32.mrf.mxu0
    %1262 = vdwg.mxu0
    %v1264 = vsel %vm1034, %v1212, 0
    %1266 = vmatprep.subr.bf16.mxu0 0
    %1267 = vmatpush1.bf16.msra.mxu0 0
    %1268 = vmatprep.subr.bf16.mxu0 0
    %1269 = vmatpush1.bf16.msra.mxu0 0
    %1270 = vmatprep.subr.bf16.mxu0 0
    %1271 = vmatpush1.bf16.msra.mxu0 0
    %1272 = vmatprep.subr.bf16.mxu0 0
    %1273 = vmatpush1.bf16.msra.mxu0 0
    %1274 = vmatprep.subr.bf16.mxu0 0
    %1275 = vmatpush1.bf16.msra.mxu0 0
    %1276 = vmatprep.subr.bf16.mxu0 0
    %1277 = vmatpush1.bf16.msra.mxu0 0
    %1278 = vmatprep.subr.bf16.mxu0 0
    %1279 = vmatpush1.bf16.msra.mxu0 0
    %1280 = vmatprep.subr.bf16.mxu0 0
    %1281 = vmatpush1.bf16.msra.mxu0 %v607
    %1282 = vmatprep.subr.bf16.mxu0 0
    %1283 = vmatpush2.bf16.msra.mxu0 0
    %1284 = vmatprep.subr.bf16.mxu0 0
    %1285 = vmatpush2.bf16.msra.mxu0 0
    %1286 = vmatprep.subr.bf16.mxu0 0
    %1287 = vmatpush2.bf16.msra.mxu0 0
    %1288 = vmatprep.subr.bf16.mxu0 0
    %1289 = vmatpush2.bf16.msra.mxu0 0
    %1290 = vmatprep.subr.bf16.mxu0 0
    %1291 = vmatpush2.bf16.msra.mxu0 0
    %1292 = vmatprep.subr.bf16.mxu0 0
    %1293 = vmatpush2.bf16.msra.mxu0 0
    %1294 = vmatprep.subr.bf16.mxu0 0
    %1295 = vmatpush2.bf16.msra.mxu0 0
    %1296 = vmatprep.subr.bf16.mxu0 0
    %1297 = vmatpush2.bf16.msra.mxu0 0
    %1298 = vmatprep.mubr.bf16.mxu0 0
    %1299 = vmatmul.mubr.bf16.gmra.mxu0 %v1264
    %v1300 = vpop.f32.mrf.mxu0
    %v1301 = vadd.f32 0.0, %v1300
    %v1302 = vpop.f32.mrf.mxu0
    %v1303 = vpop.f32.mrf.mxu0
    %v1304 = vadd.f32 0.0, %v1303
    %v1305 = vpop.f32.mrf.mxu0
    %1306 = vdwg.mxu0
    %v1308 = vsel %vm1034, %v1213, 0
    %1310 = vmatprep.subr.bf16.mxu0 0
    %1311 = vmatpush1.bf16.msra.mxu0 0
    %1312 = vmatprep.subr.bf16.mxu0 0
    %1313 = vmatpush1.bf16.msra.mxu0 0
    %1314 = vmatprep.subr.bf16.mxu0 0
    %1315 = vmatpush1.bf16.msra.mxu0 0
    %1316 = vmatprep.subr.bf16.mxu0 0
    %1317 = vmatpush1.bf16.msra.mxu0 0
    %1318 = vmatprep.subr.bf16.mxu0 0
    %1319 = vmatpush1.bf16.msra.mxu0 0
    %1320 = vmatprep.subr.bf16.mxu0 0
    %1321 = vmatpush1.bf16.msra.mxu0 0
    %1322 = vmatprep.subr.bf16.mxu0 0
    %1323 = vmatpush1.bf16.msra.mxu0 0
    %1324 = vmatprep.subr.bf16.mxu0 0
    %1325 = vmatpush1.bf16.msra.mxu0 %v610
    %1326 = vmatprep.subr.bf16.mxu0 0
    %1327 = vmatpush2.bf16.msra.mxu0 0
    %1328 = vmatprep.subr.bf16.mxu0 0
    %1329 = vmatpush2.bf16.msra.mxu0 0
    %1330 = vmatprep.subr.bf16.mxu0 0
    %1331 = vmatpush2.bf16.msra.mxu0 0
    %1332 = vmatprep.subr.bf16.mxu0 0
    %1333 = vmatpush2.bf16.msra.mxu0 0
    %1334 = vmatprep.subr.bf16.mxu0 0
    %1335 = vmatpush2.bf16.msra.mxu0 0
    %1336 = vmatprep.subr.bf16.mxu0 0
    %1337 = vmatpush2.bf16.msra.mxu0 0
    %1338 = vmatprep.subr.bf16.mxu0 0
    %1339 = vmatpush2.bf16.msra.mxu0 0
    %1340 = vmatprep.subr.bf16.mxu0 0
    %1341 = vmatpush2.bf16.msra.mxu0 0
    %1342 = vmatprep.mubr.bf16.mxu0 0
    %1343 = vmatmul.mubr.bf16.gmra.mxu0 %v1308
    %v1344 = vpop.f32.mrf.mxu0
    %v1345 = vadd.f32 0.0, %v1344
    %v1346 = vpop.f32.mrf.mxu0
    %v1347 = vpop.f32.mrf.mxu0
    %v1348 = vadd.f32 0.0, %v1347
    %v1349 = vpop.f32.mrf.mxu0
    %1350 = vdwg.mxu0
    %v1352 = vsel %vm1034, %v1214, 0
    %1354 = vmatprep.subr.bf16.mxu0 0
    %1355 = vmatpush1.bf16.msra.mxu0 0
    %1356 = vmatprep.subr.bf16.mxu0 0
    %1357 = vmatpush1.bf16.msra.mxu0 0
    %1358 = vmatprep.subr.bf16.mxu0 0
    %1359 = vmatpush1.bf16.msra.mxu0 0
    %1360 = vmatprep.subr.bf16.mxu0 0
    %1361 = vmatpush1.bf16.msra.mxu0 0
    %1362 = vmatprep.subr.bf16.mxu0 0
    %1363 = vmatpush1.bf16.msra.mxu0 0
    %1364 = vmatprep.subr.bf16.mxu0 0
    %1365 = vmatpush1.bf16.msra.mxu0 0
    %1366 = vmatprep.subr.bf16.mxu0 0
    %1367 = vmatpush1.bf16.msra.mxu0 0
    %1368 = vmatprep.subr.bf16.mxu0 0
    %1369 = vmatpush1.bf16.msra.mxu0 %v613
    %1370 = vmatprep.subr.bf16.mxu0 0
    %1371 = vmatpush2.bf16.msra.mxu0 0
    %1372 = vmatprep.subr.bf16.mxu0 0
    %1373 = vmatpush2.bf16.msra.mxu0 0
    %1374 = vmatprep.subr.bf16.mxu0 0
    %1375 = vmatpush2.bf16.msra.mxu0 0
    %1376 = vmatprep.subr.bf16.mxu0 0
    %1377 = vmatpush2.bf16.msra.mxu0 0
    %1378 = vmatprep.subr.bf16.mxu0 0
    %1379 = vmatpush2.bf16.msra.mxu0 0
    %1380 = vmatprep.subr.bf16.mxu0 0
    %1381 = vmatpush2.bf16.msra.mxu0 0
    %1382 = vmatprep.subr.bf16.mxu0 0
    %1383 = vmatpush2.bf16.msra.mxu0 0
    %1384 = vmatprep.subr.bf16.mxu0 0
    %1385 = vmatpush2.bf16.msra.mxu0 0
    %1386 = vmatprep.mubr.bf16.mxu0 0
    %1387 = vmatmul.mubr.bf16.gmra.mxu0 %v1352
    %v1388 = vpop.f32.mrf.mxu0
    %v1389 = vadd.f32 0.0, %v1388
    %v1390 = vpop.f32.mrf.mxu0
    %v1391 = vpop.f32.mrf.mxu0
    %v1392 = vadd.f32 0.0, %v1391
    %v1393 = vpop.f32.mrf.mxu0
    %1394 = vdwg.mxu0
    %v1396 = vsel %vm1034, %v1215, 0
    %1398 = vmatprep.subr.bf16.mxu0 0
    %1399 = vmatpush1.bf16.msra.mxu0 0
    %1400 = vmatprep.subr.bf16.mxu0 0
    %1401 = vmatpush1.bf16.msra.mxu0 0
    %1402 = vmatprep.subr.bf16.mxu0 0
    %1403 = vmatpush1.bf16.msra.mxu0 0
    %1404 = vmatprep.subr.bf16.mxu0 0
    %1405 = vmatpush1.bf16.msra.mxu0 0
    %1406 = vmatprep.subr.bf16.mxu0 0
    %1407 = vmatpush1.bf16.msra.mxu0 0
    %1408 = vmatprep.subr.bf16.mxu0 0
    %1409 = vmatpush1.bf16.msra.mxu0 0
    %1410 = vmatprep.subr.bf16.mxu0 0
    %1411 = vmatpush1.bf16.msra.mxu0 0
    %1412 = vmatprep.subr.bf16.mxu0 0
    %1413 = vmatpush1.bf16.msra.mxu0 %v604
    %1414 = vmatprep.subr.bf16.mxu0 0
    %1415 = vmatpush2.bf16.msra.mxu0 0
    %1416 = vmatprep.subr.bf16.mxu0 0
    %1417 = vmatpush2.bf16.msra.mxu0 0
    %1418 = vmatprep.subr.bf16.mxu0 0
    %1419 = vmatpush2.bf16.msra.mxu0 0
    %1420 = vmatprep.subr.bf16.mxu0 0
    %1421 = vmatpush2.bf16.msra.mxu0 0
    %1422 = vmatprep.subr.bf16.mxu0 0
    %1423 = vmatpush2.bf16.msra.mxu0 0
    %1424 = vmatprep.subr.bf16.mxu0 0
    %1425 = vmatpush2.bf16.msra.mxu0 0
    %1426 = vmatprep.subr.bf16.mxu0 0
    %1427 = vmatpush2.bf16.msra.mxu0 0
    %1428 = vmatprep.subr.bf16.mxu0 0
    %1429 = vmatpush2.bf16.msra.mxu0 0
    %1430 = vmatprep.mubr.bf16.mxu0 0
    %1431 = vmatmul.mubr.bf16.gmra.mxu0 %v1396
    %v1432 = vpop.f32.mrf.mxu0
    %v1433 = vadd.f32 0.0, %v1432
    %v1434 = vpop.f32.mrf.mxu0
    %v1435 = vpop.f32.mrf.mxu0
    %v1436 = vadd.f32 0.0, %v1435
    %v1437 = vpop.f32.mrf.mxu0
    %1438 = vdwg.mxu0
    %v1440 = vsel %vm1034, %v1216, 0
    %1442 = vmatprep.subr.bf16.mxu0 0
    %1443 = vmatpush1.bf16.msra.mxu0 0
    %1444 = vmatprep.subr.bf16.mxu0 0
    %1445 = vmatpush1.bf16.msra.mxu0 0
    %1446 = vmatprep.subr.bf16.mxu0 0
    %1447 = vmatpush1.bf16.msra.mxu0 0
    %1448 = vmatprep.subr.bf16.mxu0 0
    %1449 = vmatpush1.bf16.msra.mxu0 0
    %1450 = vmatprep.subr.bf16.mxu0 0
    %1451 = vmatpush1.bf16.msra.mxu0 0
    %1452 = vmatprep.subr.bf16.mxu0 0
    %1453 = vmatpush1.bf16.msra.mxu0 0
    %1454 = vmatprep.subr.bf16.mxu0 0
    %1455 = vmatpush1.bf16.msra.mxu0 0
    %1456 = vmatprep.subr.bf16.mxu0 0
    %1457 = vmatpush1.bf16.msra.mxu0 %v617
    %1458 = vmatprep.subr.bf16.mxu0 0
    %1459 = vmatpush2.bf16.msra.mxu0 0
    %1460 = vmatprep.subr.bf16.mxu0 0
    %1461 = vmatpush2.bf16.msra.mxu0 0
    %1462 = vmatprep.subr.bf16.mxu0 0
    %1463 = vmatpush2.bf16.msra.mxu0 0
    %1464 = vmatprep.subr.bf16.mxu0 0
    %1465 = vmatpush2.bf16.msra.mxu0 0
    %1466 = vmatprep.subr.bf16.mxu0 0
    %1467 = vmatpush2.bf16.msra.mxu0 0
    %1468 = vmatprep.subr.bf16.mxu0 0
    %1469 = vmatpush2.bf16.msra.mxu0 0
    %1470 = vmatprep.subr.bf16.mxu0 0
    %1471 = vmatpush2.bf16.msra.mxu0 0
    %1472 = vmatprep.subr.bf16.mxu0 0
    %1473 = vmatpush2.bf16.msra.mxu0 0
    %1474 = vmatprep.mubr.bf16.mxu0 0
    %1475 = vmatmul.mubr.bf16.gmra.mxu0 %v1440
    %v1476 = vpop.f32.mrf.mxu0
    %v1477 = vadd.f32 0.0, %v1476
    %v1478 = vpop.f32.mrf.mxu0
    %v1479 = vpop.f32.mrf.mxu0
    %v1480 = vadd.f32 0.0, %v1479
    %v1481 = vpop.f32.mrf.mxu0
    %1482 = vdwg.mxu0
    %v1484 = vsel %vm1034, %v1217, 0
    %1486 = vmatprep.subr.bf16.mxu0 0
    %1487 = vmatpush1.bf16.msra.mxu0 0
    %1488 = vmatprep.subr.bf16.mxu0 0
    %1489 = vmatpush1.bf16.msra.mxu0 0
    %1490 = vmatprep.subr.bf16.mxu0 0
    %1491 = vmatpush1.bf16.msra.mxu0 0
    %1492 = vmatprep.subr.bf16.mxu0 0
    %1493 = vmatpush1.bf16.msra.mxu0 0
    %1494 = vmatprep.subr.bf16.mxu0 0
    %1495 = vmatpush1.bf16.msra.mxu0 0
    %1496 = vmatprep.subr.bf16.mxu0 0
    %1497 = vmatpush1.bf16.msra.mxu0 0
    %1498 = vmatprep.subr.bf16.mxu0 0
    %1499 = vmatpush1.bf16.msra.mxu0 0
    %1500 = vmatprep.subr.bf16.mxu0 0
    %1501 = vmatpush1.bf16.msra.mxu0 %v620
    %1502 = vmatprep.subr.bf16.mxu0 0
    %1503 = vmatpush2.bf16.msra.mxu0 0
    %1504 = vmatprep.subr.bf16.mxu0 0
    %1505 = vmatpush2.bf16.msra.mxu0 0
    %1506 = vmatprep.subr.bf16.mxu0 0
    %1507 = vmatpush2.bf16.msra.mxu0 0
    %1508 = vmatprep.subr.bf16.mxu0 0
    %1509 = vmatpush2.bf16.msra.mxu0 0
    %1510 = vmatprep.subr.bf16.mxu0 0
    %1511 = vmatpush2.bf16.msra.mxu0 0
    %1512 = vmatprep.subr.bf16.mxu0 0
    %1513 = vmatpush2.bf16.msra.mxu0 0
    %1514 = vmatprep.subr.bf16.mxu0 0
    %1515 = vmatpush2.bf16.msra.mxu0 0
    %1516 = vmatprep.subr.bf16.mxu0 0
    %1517 = vmatpush2.bf16.msra.mxu0 0
    %1518 = vmatprep.mubr.bf16.mxu0 0
    %1519 = vmatmul.mubr.bf16.gmra.mxu0 %v1484
    %v1520 = vpop.f32.mrf.mxu0
    %v1521 = vadd.f32 0.0, %v1520
    %v1522 = vpop.f32.mrf.mxu0
    %v1523 = vpop.f32.mrf.mxu0
    %v1524 = vadd.f32 0.0, %v1523
    %v1525 = vpop.f32.mrf.mxu0
    %1526 = vdwg.mxu0
    %v1528 = vsel %vm1034, %v1218, 0
    %1530 = vmatprep.subr.bf16.mxu0 0
    %1531 = vmatpush1.bf16.msra.mxu0 0
    %1532 = vmatprep.subr.bf16.mxu0 0
    %1533 = vmatpush1.bf16.msra.mxu0 0
    %1534 = vmatprep.subr.bf16.mxu0 0
    %1535 = vmatpush1.bf16.msra.mxu0 0
    %1536 = vmatprep.subr.bf16.mxu0 0
    %1537 = vmatpush1.bf16.msra.mxu0 0
    %1538 = vmatprep.subr.bf16.mxu0 0
    %1539 = vmatpush1.bf16.msra.mxu0 0
    %1540 = vmatprep.subr.bf16.mxu0 0
    %1541 = vmatpush1.bf16.msra.mxu0 0
    %1542 = vmatprep.subr.bf16.mxu0 0
    %1543 = vmatpush1.bf16.msra.mxu0 0
    %1544 = vmatprep.subr.bf16.mxu0 0
    %1545 = vmatpush1.bf16.msra.mxu0 %v623
    %1546 = vmatprep.subr.bf16.mxu0 0
    %1547 = vmatpush2.bf16.msra.mxu0 0
    %1548 = vmatprep.subr.bf16.mxu0 0
    %1549 = vmatpush2.bf16.msra.mxu0 0
    %1550 = vmatprep.subr.bf16.mxu0 0
    %1551 = vmatpush2.bf16.msra.mxu0 0
    %1552 = vmatprep.subr.bf16.mxu0 0
    %1553 = vmatpush2.bf16.msra.mxu0 0
    %1554 = vmatprep.subr.bf16.mxu0 0
    %1555 = vmatpush2.bf16.msra.mxu0 0
    %1556 = vmatprep.subr.bf16.mxu0 0
    %1557 = vmatpush2.bf16.msra.mxu0 0
    %1558 = vmatprep.subr.bf16.mxu0 0
    %1559 = vmatpush2.bf16.msra.mxu0 0
    %1560 = vmatprep.subr.bf16.mxu0 0
    %1561 = vmatpush2.bf16.msra.mxu0 0
    %1562 = vmatprep.mubr.bf16.mxu0 0
    %1563 = vmatmul.mubr.bf16.gmra.mxu0 %v1528
    %v1564 = vpop.f32.mrf.mxu0
    %v1565 = vadd.f32 0.0, %v1564
    %v1566 = vpop.f32.mrf.mxu0
    %v1567 = vpop.f32.mrf.mxu0
    %v1568 = vadd.f32 0.0, %v1567
    %v1569 = vpop.f32.mrf.mxu0
    %1570 = vdwg.mxu0
    %1573 = vrot.lane.b32.xlu0 %v1301, 32
    %v1574 = vpop.permute.xlu0 %1573
    %1575 = vrot.lane.b32.xlu0 %v1304, 32
    %v1576 = vpop.permute.xlu0 %1575
    %1581 = vrot.lane.b32.xlu0 %v1345, 64
    %v1582 = vpop.permute.xlu0 %1581
    %1583 = vrot.lane.b32.xlu0 %v1348, 64
    %v1584 = vpop.permute.xlu0 %1583
    %1589 = vrot.lane.b32.xlu0 %v1389, 96
    %v1590 = vpop.permute.xlu0 %1589
    %1591 = vrot.lane.b32.xlu0 %v1392, 96
    %v1592 = vpop.permute.xlu0 %1591
    %v1595 = vsel %vm625, %v1257, %v1574
    %v1596 = vsel %vm625, %v1260, %v1576
    %vm1597 = vcmask 523264
    %v1598 = vsel %vm1597, %v1595, %v1582
    %v1599 = vsel %vm1597, %v1596, %v1584
    %vm1600 = vcmask 785408
    %v1601 = vsel %vm1600, %v1598, %v1590
    %v1602 = vsel %vm1600, %v1599, %v1592
    %1605 = vrot.lane.b32.xlu0 %v1477, 32
    %v1606 = vpop.permute.xlu0 %1605
    %1607 = vrot.lane.b32.xlu0 %v1480, 32
    %v1608 = vpop.permute.xlu0 %1607
    %1613 = vrot.lane.b32.xlu0 %v1521, 64
    %v1614 = vpop.permute.xlu0 %1613
    %1615 = vrot.lane.b32.xlu0 %v1524, 64
    %v1616 = vpop.permute.xlu0 %1615
    %1621 = vrot.lane.b32.xlu0 %v1565, 96
    %v1622 = vpop.permute.xlu0 %1621
    %1623 = vrot.lane.b32.xlu0 %v1568, 96
    %v1624 = vpop.permute.xlu0 %1623
    %v1627 = vsel %vm625, %v1433, %v1606
    %v1628 = vsel %vm625, %v1436, %v1608
    %v1629 = vsel %vm1597, %v1627, %v1614
    %v1630 = vsel %vm1597, %v1628, %v1616
    %v1631 = vsel %vm1600, %v1629, %v1622
    %v1632 = vsel %vm1600, %v1630, %v1624
    %v1633 = vpack.c.bf16 %v1602, %v1601
    %v1634 = vpack.c.bf16 %v1632, %v1631
    %v1635 = vld [vmem:[#allocation11] sm:$0xf]
    %v1636 = vld [vmem:[#allocation11 + $0x4] sm:$0xf]
    %v1637 = vld [vmem:[#allocation11 + $0x8] sm:$0xf]
    %v1638 = vld [vmem:[#allocation11 + $0xc] sm:$0xf]
    %v1639 = vld [vmem:[#allocation11 + $0x10] sm:$0xf]
    %v1640 = vld [vmem:[#allocation11 + $0x14] sm:$0xf]
    %v1641 = vld [vmem:[#allocation11 + $0x18] sm:$0xf]
    %v1642 = vld [vmem:[#allocation11 + $0x1c] sm:$0xf]
    %v1643 = vld [vmem:[#allocation11 + $0x20] sm:$0xf]
    %v1644 = vld [vmem:[#allocation11 + $0x24] sm:$0xf]
    %v1645 = vld [vmem:[#allocation11 + $0x28] sm:$0xf]
    %v1646 = vld [vmem:[#allocation11 + $0x2c] sm:$0xf]
    %v1647 = vld [vmem:[#allocation11 + $0x30] sm:$0xf]
    %v1648 = vld [vmem:[#allocation11 + $0x34] sm:$0xf]
    %v1649 = vld [vmem:[#allocation11 + $0x38] sm:$0xf]
    %v1650 = vld [vmem:[#allocation11 + $0x3c] sm:$0xf]
    %v1651 = vld [vmem:[%s7] sm:$0x1]
    %v1653 = vlaneseq
    %v1654 = vshrl.u32 %v1653, 7
    %v1655 = vsub.s32 0, %v1654
    %v1656 = vrot.slane %v1651, %v1655
    %v1674 = vunpack.c.l.b16 %v1635
    %v1675 = vunpack.c.l.b16 %v1636
    %v1676 = vunpack.c.l.b16 %v1637
    %v1677 = vunpack.c.l.b16 %v1638
    %v1678 = vunpack.c.l.b16 %v1639
    %v1679 = vunpack.c.l.b16 %v1640
    %v1680 = vunpack.c.l.b16 %v1641
    %v1681 = vunpack.c.l.b16 %v1642
    %v1682 = vunpack.c.l.b16 %v1643
    %v1683 = vunpack.c.l.b16 %v1644
    %v1684 = vunpack.c.l.b16 %v1645
    %v1685 = vunpack.c.l.b16 %v1646
    %v1686 = vunpack.c.l.b16 %v1647
    %v1687 = vunpack.c.l.b16 %v1648
    %v1688 = vunpack.c.l.b16 %v1649
    %v1689 = vunpack.c.l.b16 %v1650
    %v1690 = vpack.c.b16 %v1675, %v1674
    %v1691 = vpack.c.b16 %v1677, %v1676
    %v1692 = vpack.c.b16 %v1679, %v1678
    %v1693 = vpack.c.b16 %v1681, %v1680
    %v1694 = vpack.c.b16 %v1683, %v1682
    %v1695 = vpack.c.b16 %v1685, %v1684
    %v1696 = vpack.c.b16 %v1687, %v1686
    %v1697 = vpack.c.b16 %v1689, %v1688
    %1706 = vmatprep.subr.bf16.mxu0 0
    %1707 = vmatpush1.bf16.msra.mxu0 %v1697
    %1708 = vmatprep.subr.bf16.mxu0 0
    %1709 = vmatpush1.bf16.msra.mxu0 %v1696
    %1710 = vmatprep.subr.bf16.mxu0 0
    %1711 = vmatpush1.bf16.msra.mxu0 %v1695
    %1712 = vmatprep.subr.bf16.mxu0 0
    %1713 = vmatpush1.bf16.msra.mxu0 %v1694
    %1714 = vmatprep.subr.bf16.mxu0 0
    %1715 = vmatpush1.bf16.msra.mxu0 %v1693
    %1716 = vmatprep.subr.bf16.mxu0 0
    %1717 = vmatpush1.bf16.msra.mxu0 %v1692
    %1718 = vmatprep.subr.bf16.mxu0 0
    %1719 = vmatpush1.bf16.msra.mxu0 %v1691
    %1720 = vmatprep.subr.bf16.mxu0 0
    %1721 = vmatpush1.bf16.msra.mxu0 %v1690
    %1722 = vmatprep.subr.bf16.mxu0 0
    %1723 = vmatpush2.bf16.msra.mxu0 0
    %1724 = vmatprep.subr.bf16.mxu0 0
    %1725 = vmatpush2.bf16.msra.mxu0 0
    %1726 = vmatprep.subr.bf16.mxu0 0
    %1727 = vmatpush2.bf16.msra.mxu0 0
    %1728 = vmatprep.subr.bf16.mxu0 0
    %1729 = vmatpush2.bf16.msra.mxu0 0
    %1730 = vmatprep.subr.bf16.mxu0 0
    %1731 = vmatpush2.bf16.msra.mxu0 0
    %1732 = vmatprep.subr.bf16.mxu0 0
    %1733 = vmatpush2.bf16.msra.mxu0 0
    %1734 = vmatprep.subr.bf16.mxu0 0
    %1735 = vmatpush2.bf16.msra.mxu0 0
    %1736 = vmatprep.subr.bf16.mxu0 0
    %1737 = vmatpush2.bf16.msra.mxu0 0
    %1738 = vmatprep.mubr.bf16.mxu0 0
    %1739 = vmatmul.mubr.bf16.gmra.mxu0 %v1633
    %v1740 = vpop.f32.mrf.mxu0
    %v1741 = vadd.f32 %v1656, %v1740
    %v1742 = vpop.f32.mrf.mxu0
    %v1743 = vpop.f32.mrf.mxu0
    %v1744 = vadd.f32 %v1656, %v1743
    %v1745 = vpop.f32.mrf.mxu0
    %1746 = vmatprep.mubr.bf16.mxu0 0
    %1747 = vmatmul.mubr.bf16.gmra.mxu0 %v1634
    %v1748 = vpop.f32.mrf.mxu0
    %v1749 = vadd.f32 %v1656, %v1748
    %v1750 = vpop.f32.mrf.mxu0
    %v1751 = vpop.f32.mrf.mxu0
    %v1752 = vadd.f32 %v1656, %v1751
    %v1753 = vpop.f32.mrf.mxu0
    %1754 = vdwg.mxu0
    %v1755 = vadd.f32 %v208, %v1741
    %v1756 = vadd.f32 %v209, %v1744
    %v1757 = vadd.f32 %v210, %v1749
    %v1758 = vadd.f32 %v211, %v1752
    %1759 = vadd.xlane.f32.xlu0 %v1755
    %v1760 = vpop.xlane.xlu0 %1759
    %1761 = vadd.xlane.f32.xlu0 %v1756
    %v1762 = vpop.xlane.xlu0 %1761
    %1763 = vadd.xlane.f32.xlu0 %v1757
    %v1764 = vpop.xlane.xlu0 %1763
    %1765 = vadd.xlane.f32.xlu0 %v1758
    %v1766 = vpop.xlane.xlu0 %1765
    %v1767 = vmul.f32 %v1760, %v237
    %v1768 = vmul.f32 %v1762, %v237
    %v1769 = vmul.f32 %v1764, %v237
    %v1770 = vmul.f32 %v1766, %v237
    %v1771 = vsub.f32 %v1755, %v1767
    %v1772 = vsub.f32 %v1756, %v1768
    %v1773 = vsub.f32 %v1757, %v1769
    %v1774 = vsub.f32 %v1758, %v1770
    %v1775 = vmul.f32 %v1771, %v1771
    %v1776 = vmul.f32 %v1772, %v1772
    %v1777 = vmul.f32 %v1773, %v1773
    %v1778 = vmul.f32 %v1774, %v1774
    %1779 = vadd.xlane.f32.xlu0 %v1775
    %v1780 = vpop.xlane.xlu0 %1779
    %1781 = vadd.xlane.f32.xlu0 %v1776
    %v1782 = vpop.xlane.xlu0 %1781
    %1783 = vadd.xlane.f32.xlu0 %v1777
    %v1784 = vpop.xlane.xlu0 %1783
    %1785 = vadd.xlane.f32.xlu0 %v1778
    %v1786 = vpop.xlane.xlu0 %1785
    %v1787 = vmul.f32 %v1780, %v237
    %v1788 = vmul.f32 %v1782, %v237
    %v1789 = vmul.f32 %v1784, %v237
    %v1790 = vmul.f32 %v1786, %v237
    %v1791 = vadd.f32 %v1787, 1e-05
    %v1792 = vadd.f32 %v1788, 1e-05
    %v1793 = vadd.f32 %v1789, 1e-05
    %v1794 = vadd.f32 %v1790, 1e-05
    %v1795 = vrsqrt.pop %v1791
    %v1796 = vrsqrt.pop %v1792
    %v1797 = vrsqrt.pop %v1793
    %v1798 = vrsqrt.pop %v1794
    %v1799 = vmul.f32 %v1771, %v1795
    %v1800 = vmul.f32 %v1772, %v1796
    %v1801 = vmul.f32 %v1773, %v1797
    %v1802 = vmul.f32 %v1774, %v1798
    %v1803 = vlaneseq
    %v1804 = vshrl.u32 %v1803, 7
    %v1805 = vsub.s32 2, %v1804
    %v1806 = vrot.slane %v228, %v1805
    %v1807 = vmul.f32 %v1799, %v1806
    %v1808 = vmul.f32 %v1800, %v1806
    %v1809 = vmul.f32 %v1801, %v1806
    %v1810 = vmul.f32 %v1802, %v1806
    %v1811 = vlaneseq
    %v1812 = vshrl.u32 %v1811, 7
    %v1813 = vsub.s32 3, %v1812
    %v1814 = vrot.slane %v228, %v1813
    %v1815 = vadd.f32 %v1807, %v1814
    %v1816 = vadd.f32 %v1808, %v1814
    %v1817 = vadd.f32 %v1809, %v1814
    %v1818 = vadd.f32 %v1810, %v1814
    %1819 = vadd.xlane.f32.xlu0 %v212
    %v1820 = vpop.xlane.xlu0 %1819
    %1821 = vadd.xlane.f32.xlu0 %v213
    %v1822 = vpop.xlane.xlu0 %1821
    %1823 = vadd.xlane.f32.xlu0 %v214
    %v1824 = vpop.xlane.xlu0 %1823
    %1825 = vadd.xlane.f32.xlu0 %v215
    %v1826 = vpop.xlane.xlu0 %1825
    %v1827 = vmul.f32 %v1820, %v237
    %v1828 = vmul.f32 %v1822, %v237
    %v1829 = vmul.f32 %v1824, %v237
    %v1830 = vmul.f32 %v1826, %v237
    %v1831 = vsub.f32 %v212, %v1827
    %v1832 = vsub.f32 %v213, %v1828
    %v1833 = vsub.f32 %v214, %v1829
    %v1834 = vsub.f32 %v215, %v1830
    %v1835 = vmul.f32 %v1831, %v1831
    %v1836 = vmul.f32 %v1832, %v1832
    %v1837 = vmul.f32 %v1833, %v1833
    %v1838 = vmul.f32 %v1834, %v1834
    %1839 = vadd.xlane.f32.xlu0 %v1835
    %v1840 = vpop.xlane.xlu0 %1839
    %1841 = vadd.xlane.f32.xlu0 %v1836
    %v1842 = vpop.xlane.xlu0 %1841
    %1843 = vadd.xlane.f32.xlu0 %v1837
    %v1844 = vpop.xlane.xlu0 %1843
    %1845 = vadd.xlane.f32.xlu0 %v1838
    %v1846 = vpop.xlane.xlu0 %1845
    %v1847 = vmul.f32 %v1840, %v237
    %v1848 = vmul.f32 %v1842, %v237
    %v1849 = vmul.f32 %v1844, %v237
    %v1850 = vmul.f32 %v1846, %v237
    %v1851 = vadd.f32 %v1847, 1e-05
    %v1852 = vadd.f32 %v1848, 1e-05
    %v1853 = vadd.f32 %v1849, 1e-05
    %v1854 = vadd.f32 %v1850, 1e-05
    %v1855 = vrsqrt.pop %v1851
    %v1856 = vrsqrt.pop %v1852
    %v1857 = vrsqrt.pop %v1853
    %v1858 = vrsqrt.pop %v1854
    %v1859 = vmul.f32 %v1831, %v1855
    %v1860 = vmul.f32 %v1832, %v1856
    %v1861 = vmul.f32 %v1833, %v1857
    %v1862 = vmul.f32 %v1834, %v1858
    %v1863 = vmul.f32 %v1859, %v1806
    %v1864 = vmul.f32 %v1860, %v1806
    %v1865 = vmul.f32 %v1861, %v1806
    %v1866 = vmul.f32 %v1862, %v1806
    %v1867 = vadd.f32 %v1863, %v1814
    %v1868 = vadd.f32 %v1864, %v1814
    %v1869 = vadd.f32 %v1865, %v1814
    %v1870 = vadd.f32 %v1866, %v1814
    %v1871 = vpack.c.bf16 %v1816, %v1815
    %v1872 = vpack.c.bf16 %v1818, %v1817
    %v1873 = vld [vmem:[#allocation13] sm:$0xf]
    %v1874 = vld [vmem:[#allocation13 + $0x4] sm:$0xf]
    %v1875 = vld [vmem:[#allocation13 + $0x8] sm:$0xf]
    %v1876 = vld [vmem:[#allocation13 + $0xc] sm:$0xf]
    %v1877 = vld [vmem:[#allocation13 + $0x10] sm:$0xf]
    %v1878 = vld [vmem:[#allocation13 + $0x14] sm:$0xf]
    %v1879 = vld [vmem:[#allocation13 + $0x18] sm:$0xf]
    %v1880 = vld [vmem:[#allocation13 + $0x1c] sm:$0xf]
    %v1881 = vld [vmem:[#allocation13 + $0x20] sm:$0xf]
    %v1882 = vld [vmem:[#allocation13 + $0x24] sm:$0xf]
    %v1883 = vld [vmem:[#allocation13 + $0x28] sm:$0xf]
    %v1884 = vld [vmem:[#allocation13 + $0x2c] sm:$0xf]
    %v1885 = vld [vmem:[#allocation13 + $0x30] sm:$0xf]
    %v1886 = vld [vmem:[#allocation13 + $0x34] sm:$0xf]
    %v1887 = vld [vmem:[#allocation13 + $0x38] sm:$0xf]
    %v1888 = vld [vmem:[#allocation13 + $0x3c] sm:$0xf]
    %v1889 = vld [vmem:[%s9] sm:$0x1]
    %v1891 = vlaneseq
    %v1892 = vshrl.u32 %v1891, 7
    %v1893 = vsub.s32 0, %v1892
    %v1894 = vrot.slane %v1889, %v1893
    %v1912 = vunpack.c.l.b16 %v1873
    %v1913 = vunpack.c.l.b16 %v1874
    %v1914 = vunpack.c.l.b16 %v1875
    %v1915 = vunpack.c.l.b16 %v1876
    %v1916 = vunpack.c.l.b16 %v1877
    %v1917 = vunpack.c.l.b16 %v1878
    %v1918 = vunpack.c.l.b16 %v1879
    %v1919 = vunpack.c.l.b16 %v1880
    %v1920 = vunpack.c.l.b16 %v1881
    %v1921 = vunpack.c.l.b16 %v1882
    %v1922 = vunpack.c.l.b16 %v1883
    %v1923 = vunpack.c.l.b16 %v1884
    %v1924 = vunpack.c.l.b16 %v1885
    %v1925 = vunpack.c.l.b16 %v1886
    %v1926 = vunpack.c.l.b16 %v1887
    %v1927 = vunpack.c.l.b16 %v1888
    %v1928 = vpack.c.b16 %v1913, %v1912
    %v1929 = vpack.c.b16 %v1915, %v1914
    %v1930 = vpack.c.b16 %v1917, %v1916
    %v1931 = vpack.c.b16 %v1919, %v1918
    %v1932 = vpack.c.b16 %v1921, %v1920
    %v1933 = vpack.c.b16 %v1923, %v1922
    %v1934 = vpack.c.b16 %v1925, %v1924
    %v1935 = vpack.c.b16 %v1927, %v1926
    %1944 = vmatprep.subr.bf16.mxu0 0
    %1945 = vmatpush1.bf16.msra.mxu0 %v1935
    %1946 = vmatprep.subr.bf16.mxu0 0
    %1947 = vmatpush1.bf16.msra.mxu0 %v1934
    %1948 = vmatprep.subr.bf16.mxu0 0
    %1949 = vmatpush1.bf16.msra.mxu0 %v1933
    %1950 = vmatprep.subr.bf16.mxu0 0
    %1951 = vmatpush1.bf16.msra.mxu0 %v1932
    %1952 = vmatprep.subr.bf16.mxu0 0
    %1953 = vmatpush1.bf16.msra.mxu0 %v1931
    %1954 = vmatprep.subr.bf16.mxu0 0
    %1955 = vmatpush1.bf16.msra.mxu0 %v1930
    %1956 = vmatprep.subr.bf16.mxu0 0
    %1957 = vmatpush1.bf16.msra.mxu0 %v1929
    %1958 = vmatprep.subr.bf16.mxu0 0
    %1959 = vmatpush1.bf16.msra.mxu0 %v1928
    %1960 = vmatprep.subr.bf16.mxu0 0
    %1961 = vmatpush2.bf16.msra.mxu0 0
    %1962 = vmatprep.subr.bf16.mxu0 0
    %1963 = vmatpush2.bf16.msra.mxu0 0
    %1964 = vmatprep.subr.bf16.mxu0 0
    %1965 = vmatpush2.bf16.msra.mxu0 0
    %1966 = vmatprep.subr.bf16.mxu0 0
    %1967 = vmatpush2.bf16.msra.mxu0 0
    %1968 = vmatprep.subr.bf16.mxu0 0
    %1969 = vmatpush2.bf16.msra.mxu0 0
    %1970 = vmatprep.subr.bf16.mxu0 0
    %1971 = vmatpush2.bf16.msra.mxu0 0
    %1972 = vmatprep.subr.bf16.mxu0 0
    %1973 = vmatpush2.bf16.msra.mxu0 0
    %1974 = vmatprep.subr.bf16.mxu0 0
    %1975 = vmatpush2.bf16.msra.mxu0 0
    %1976 = vmatprep.mubr.bf16.mxu0 0
    %1977 = vmatmul.mubr.bf16.gmra.mxu0 %v1871
    %v1978 = vpop.f32.mrf.mxu0
    %v1979 = vadd.f32 %v1894, %v1978
    %v1980 = vpop.f32.mrf.mxu0
    %v1981 = vpop.f32.mrf.mxu0
    %v1982 = vadd.f32 %v1894, %v1981
    %v1983 = vpop.f32.mrf.mxu0
    %1984 = vmatprep.mubr.bf16.mxu0 0
    %1985 = vmatmul.mubr.bf16.gmra.mxu0 %v1872
    %v1986 = vpop.f32.mrf.mxu0
    %v1987 = vadd.f32 %v1894, %v1986
    %v1988 = vpop.f32.mrf.mxu0
    %v1989 = vpop.f32.mrf.mxu0
    %v1990 = vadd.f32 %v1894, %v1989
    %v1991 = vpop.f32.mrf.mxu0
    %1992 = vdwg.mxu0
    %v1993 = vpack.c.bf16 %v1868, %v1867
    %v1994 = vpack.c.bf16 %v1870, %v1869
    %v1995 = vld [vmem:[#allocation14] sm:$0xff]
    %v1996 = vld [vmem:[#allocation14 + $0x8] sm:$0xff]
    %v1997 = vld [vmem:[#allocation14 + $0x10] sm:$0xff]
    %v1998 = vld [vmem:[#allocation14 + $0x18] sm:$0xff]
    %v1999 = vld [vmem:[#allocation14 + $0x20] sm:$0xff]
    %v2000 = vld [vmem:[#allocation14 + $0x28] sm:$0xff]
    %v2001 = vld [vmem:[#allocation14 + $0x30] sm:$0xff]
    %v2002 = vld [vmem:[#allocation14 + $0x38] sm:$0xff]
    %v2003 = vld [vmem:[#allocation14 + $0x40] sm:$0xff]
    %v2004 = vld [vmem:[#allocation14 + $0x48] sm:$0xff]
    %v2005 = vld [vmem:[#allocation14 + $0x50] sm:$0xff]
    %v2006 = vld [vmem:[#allocation14 + $0x58] sm:$0xff]
    %v2007 = vld [vmem:[#allocation14 + $0x60] sm:$0xff]
    %v2008 = vld [vmem:[#allocation14 + $0x68] sm:$0xff]
    %v2009 = vld [vmem:[#allocation14 + $0x70] sm:$0xff]
    %v2010 = vld [vmem:[#allocation14 + $0x78] sm:$0xff]
    %v2011 = vld [vmem:[%s11] sm:$0x3]
    %v2013 = vlaneseq
    %v2014 = vshrl.u32 %v2013, 7
    %v2015 = vsub.s32 0, %v2014
    %v2016 = vrot.slane %v2011, %v2015
    %v2017 = vlaneseq
    %v2018 = vshrl.u32 %v2017, 7
    %v2019 = vsub.s32 1, %v2018
    %v2020 = vrot.slane %v2011, %v2019
    %v2039 = vunpack.c.l.b16 %v1995
    %v2040 = vunpack.c.h.b16 %v1995
    %v2041 = vunpack.c.l.b16 %v1996
    %v2042 = vunpack.c.h.b16 %v1996
    %v2043 = vunpack.c.l.b16 %v1997
    %v2044 = vunpack.c.h.b16 %v1997
    %v2045 = vunpack.c.l.b16 %v1998
    %v2046 = vunpack.c.h.b16 %v1998
    %v2047 = vunpack.c.l.b16 %v1999
    %v2048 = vunpack.c.h.b16 %v1999
    %v2049 = vunpack.c.l.b16 %v2000
    %v2050 = vunpack.c.h.b16 %v2000
    %v2051 = vunpack.c.l.b16 %v2001
    %v2052 = vunpack.c.h.b16 %v2001
    %v2053 = vunpack.c.l.b16 %v2002
    %v2054 = vunpack.c.h.b16 %v2002
    %v2055 = vunpack.c.l.b16 %v2003
    %v2056 = vunpack.c.h.b16 %v2003
    %v2057 = vunpack.c.l.b16 %v2004
    %v2058 = vunpack.c.h.b16 %v2004
    %v2059 = vunpack.c.l.b16 %v2005
    %v2060 = vunpack.c.h.b16 %v2005
    %v2061 = vunpack.c.l.b16 %v2006
    %v2062 = vunpack.c.h.b16 %v2006
    %v2063 = vunpack.c.l.b16 %v2007
    %v2064 = vunpack.c.h.b16 %v2007
    %v2065 = vunpack.c.l.b16 %v2008
    %v2066 = vunpack.c.h.b16 %v2008
    %v2067 = vunpack.c.l.b16 %v2009
    %v2068 = vunpack.c.h.b16 %v2009
    %v2069 = vunpack.c.l.b16 %v2010
    %v2070 = vunpack.c.h.b16 %v2010
    %v2071 = vpack.c.b16 %v2041, %v2039
    %v2072 = vpack.c.b16 %v2042, %v2040
    %v2073 = vpack.c.b16 %v2045, %v2043
    %v2074 = vpack.c.b16 %v2046, %v2044
    %v2075 = vpack.c.b16 %v2049, %v2047
    %v2076 = vpack.c.b16 %v2050, %v2048
    %v2077 = vpack.c.b16 %v2053, %v2051
    %v2078 = vpack.c.b16 %v2054, %v2052
    %v2079 = vpack.c.b16 %v2057, %v2055
    %v2080 = vpack.c.b16 %v2058, %v2056
    %v2081 = vpack.c.b16 %v2061, %v2059
    %v2082 = vpack.c.b16 %v2062, %v2060
    %v2083 = vpack.c.b16 %v2065, %v2063
    %v2084 = vpack.c.b16 %v2066, %v2064
    %v2085 = vpack.c.b16 %v2069, %v2067
    %v2086 = vpack.c.b16 %v2070, %v2068
    %2103 = vmatprep.subr.bf16.mxu0 %v2086
    %2104 = vmatpush1.bf16.msra.mxu0 %v2085
    %2105 = vmatprep.subr.bf16.mxu0 %v2084
    %2106 = vmatpush1.bf16.msra.mxu0 %v2083
    %2107 = vmatprep.subr.bf16.mxu0 %v2082
    %2108 = vmatpush1.bf16.msra.mxu0 %v2081
    %2109 = vmatprep.subr.bf16.mxu0 %v2080
    %2110 = vmatpush1.bf16.msra.mxu0 %v2079
    %2111 = vmatprep.subr.bf16.mxu0 %v2078
    %2112 = vmatpush1.bf16.msra.mxu0 %v2077
    %2113 = vmatprep.subr.bf16.mxu0 %v2076
    %2114 = vmatpush1.bf16.msra.mxu0 %v2075
    %2115 = vmatprep.subr.bf16.mxu0 %v2074
    %2116 = vmatpush1.bf16.msra.mxu0 %v2073
    %2117 = vmatprep.subr.bf16.mxu0 %v2072
    %2118 = vmatpush1.bf16.msra.mxu0 %v2071
    %2119 = vmatprep.subr.bf16.mxu0 0
    %2120 = vmatpush2.bf16.msra.mxu0 0
    %2121 = vmatprep.subr.bf16.mxu0 0
    %2122 = vmatpush2.bf16.msra.mxu0 0
    %2123 = vmatprep.subr.bf16.mxu0 0
    %2124 = vmatpush2.bf16.msra.mxu0 0
    %2125 = vmatprep.subr.bf16.mxu0 0
    %2126 = vmatpush2.bf16.msra.mxu0 0
    %2127 = vmatprep.subr.bf16.mxu0 0
    %2128 = vmatpush2.bf16.msra.mxu0 0
    %2129 = vmatprep.subr.bf16.mxu0 0
    %2130 = vmatpush2.bf16.msra.mxu0 0
    %2131 = vmatprep.subr.bf16.mxu0 0
    %2132 = vmatpush2.bf16.msra.mxu0 0
    %2133 = vmatprep.subr.bf16.mxu0 0
    %2134 = vmatpush2.bf16.msra.mxu0 0
    %2135 = vmatprep.mubr.bf16.mxu0 0
    %2136 = vmatmul.mubr.bf16.gmra.mxu0 %v1993
    %v2137 = vpop.f32.mrf.mxu0
    %v2138 = vadd.f32 %v2016, %v2137
    %v2139 = vpop.f32.mrf.mxu0
    %v2140 = vadd.f32 %v2020, %v2139
    %v2141 = vpop.f32.mrf.mxu0
    %v2142 = vadd.f32 %v2016, %v2141
    %v2143 = vpop.f32.mrf.mxu0
    %v2144 = vadd.f32 %v2020, %v2143
    %2145 = vmatprep.mubr.bf16.mxu0 0
    %2146 = vmatmul.mubr.bf16.gmra.mxu0 %v1994
    %v2147 = vpop.f32.mrf.mxu0
    %v2148 = vadd.f32 %v2016, %v2147
    %v2149 = vpop.f32.mrf.mxu0
    %v2150 = vadd.f32 %v2020, %v2149
    %v2151 = vpop.f32.mrf.mxu0
    %v2152 = vadd.f32 %v2016, %v2151
    %v2153 = vpop.f32.mrf.mxu0
    %v2154 = vadd.f32 %v2020, %v2153
    %2155 = vdwg.mxu0
    %v2156 = vpack.c.bf16 %v1982, %v1979
    %v2157 = vpack.c.bf16 %v1990, %v1987
    %2159 = vrot.lane.b32.xlu0 %v2156, 96
    %v2160 = vpop.permute.xlu0 %2159
    %2161 = vrot.lane.b32.xlu0 %v2156, 64
    %v2162 = vpop.permute.xlu0 %2161
    %2163 = vrot.lane.b32.xlu0 %v2156, 32
    %v2164 = vpop.permute.xlu0 %2163
    %2166 = vrot.lane.b32.xlu0 %v2157, 96
    %v2167 = vpop.permute.xlu0 %2166
    %2168 = vrot.lane.b32.xlu0 %v2157, 64
    %v2169 = vpop.permute.xlu0 %2168
    %2170 = vrot.lane.b32.xlu0 %v2157, 32
    %v2171 = vpop.permute.xlu0 %2170
    %v2172 = vpack.c.bf16 %v2142, %v2138
    %v2173 = vpack.c.bf16 %v2152, %v2148
    %2175 = vrot.lane.b32.xlu0 %v2172, 96
    %v2176 = vpop.permute.xlu0 %2175
    %2177 = vrot.lane.b32.xlu0 %v2172, 64
    %v2178 = vpop.permute.xlu0 %2177
    %2179 = vrot.lane.b32.xlu0 %v2172, 32
    %v2180 = vpop.permute.xlu0 %2179
    %2182 = vrot.lane.b32.xlu0 %v2173, 96
    %v2183 = vpop.permute.xlu0 %2182
    %2184 = vrot.lane.b32.xlu0 %v2173, 64
    %v2185 = vpop.permute.xlu0 %2184
    %2186 = vrot.lane.b32.xlu0 %v2173, 32
    %v2187 = vpop.permute.xlu0 %2186
    %v2188 = vpack.c.bf16 %v2144, %v2140
    %v2189 = vpack.c.bf16 %v2154, %v2150
    %2191 = vrot.lane.b32.xlu0 %v2188, 96
    %v2192 = vpop.permute.xlu0 %2191
    %2194 = vrot.lane.b32.xlu0 %v2188, 64
    %v2195 = vpop.permute.xlu0 %2194
    %2197 = vrot.lane.b32.xlu0 %v2188, 32
    %v2198 = vpop.permute.xlu0 %2197
    %2201 = vrot.lane.b32.xlu0 %v2189, 96
    %v2202 = vpop.permute.xlu0 %2201
    %2204 = vrot.lane.b32.xlu0 %v2189, 64
    %v2205 = vpop.permute.xlu0 %2204
    %2207 = vrot.lane.b32.xlu0 %v2189, 32
    %v2208 = vpop.permute.xlu0 %2207
    %v2211 = vsel %vm625, %v2156, 0
    %v2214 = vsel %vm625, %v2172, 0
    %2216 = vmatprep.subr.bf16.mxu0 0
    %2217 = vmatpush1.bf16.xpose.msra.mxu0 0
    %2218 = vmatprep.subr.bf16.mxu0 0
    %2219 = vmatpush1.bf16.xpose.msra.mxu0 0
    %2220 = vmatprep.subr.bf16.mxu0 0
    %2221 = vmatpush1.bf16.xpose.msra.mxu0 0
    %2222 = vmatprep.subr.bf16.mxu0 0
    %2223 = vmatpush1.bf16.xpose.msra.mxu0 0
    %2224 = vmatprep.subr.bf16.mxu0 0
    %2225 = vmatpush1.bf16.xpose.msra.mxu0 0
    %2226 = vmatprep.subr.bf16.mxu0 0
    %2227 = vmatpush1.bf16.xpose.msra.mxu0 0
    %2228 = vmatprep.subr.bf16.mxu0 0
    %2229 = vmatpush1.bf16.xpose.msra.mxu0 0
    %2230 = vmatprep.subr.bf16.mxu0 0
    %2231 = vmatpush1.bf16.xpose.msra.mxu0 %v2214
    %2232 = vmatprep.subr.bf16.mxu0 0
    %2233 = vmatpush2.bf16.xpose.msra.mxu0 0
    %2234 = vmatprep.subr.bf16.mxu0 0
    %2235 = vmatpush2.bf16.xpose.msra.mxu0 0
    %2236 = vmatprep.subr.bf16.mxu0 0
    %2237 = vmatpush2.bf16.xpose.msra.mxu0 0
    %2238 = vmatprep.subr.bf16.mxu0 0
    %2239 = vmatpush2.bf16.xpose.msra.mxu0 0
    %2240 = vmatprep.subr.bf16.mxu0 0
    %2241 = vmatpush2.bf16.xpose.msra.mxu0 0
    %2242 = vmatprep.subr.bf16.mxu0 0
    %2243 = vmatpush2.bf16.xpose.msra.mxu0 0
    %2244 = vmatprep.subr.bf16.mxu0 0
    %2245 = vmatpush2.bf16.xpose.msra.mxu0 0
    %2246 = vmatprep.subr.bf16.mxu0 0
    %2247 = vmatpush2.bf16.xpose.msra.mxu0 0
    %2248 = vmatprep.mubr.bf16.mxu0 0
    %2249 = vmatmul.mubr.bf16.gmra.mxu0 %v2211
    %v2250 = vpop.f32.mrf.mxu0
    %v2251 = vadd.f32 0.0, %v2250
    %v2252 = vpop.f32.mrf.mxu0
    %v2253 = vpop.f32.mrf.mxu0
    %v2254 = vadd.f32 0.0, %v2253
    %v2255 = vpop.f32.mrf.mxu0
    %2256 = vdwg.mxu0
    %v2258 = vsel %vm625, %v2160, 0
    %v2261 = vsel %vm625, %v2176, 0
    %2263 = vmatprep.subr.bf16.mxu0 0
    %2264 = vmatpush1.bf16.xpose.msra.mxu0 0
    %2265 = vmatprep.subr.bf16.mxu0 0
    %2266 = vmatpush1.bf16.xpose.msra.mxu0 0
    %2267 = vmatprep.subr.bf16.mxu0 0
    %2268 = vmatpush1.bf16.xpose.msra.mxu0 0
    %2269 = vmatprep.subr.bf16.mxu0 0
    %2270 = vmatpush1.bf16.xpose.msra.mxu0 0
    %2271 = vmatprep.subr.bf16.mxu0 0
    %2272 = vmatpush1.bf16.xpose.msra.mxu0 0
    %2273 = vmatprep.subr.bf16.mxu0 0
    %2274 = vmatpush1.bf16.xpose.msra.mxu0 0
    %2275 = vmatprep.subr.bf16.mxu0 0
    %2276 = vmatpush1.bf16.xpose.msra.mxu0 0
    %2277 = vmatprep.subr.bf16.mxu0 0
    %2278 = vmatpush1.bf16.xpose.msra.mxu0 %v2261
    %2279 = vmatprep.subr.bf16.mxu0 0
    %2280 = vmatpush2.bf16.xpose.msra.mxu0 0
    %2281 = vmatprep.subr.bf16.mxu0 0
    %2282 = vmatpush2.bf16.xpose.msra.mxu0 0
    %2283 = vmatprep.subr.bf16.mxu0 0
    %2284 = vmatpush2.bf16.xpose.msra.mxu0 0
    %2285 = vmatprep.subr.bf16.mxu0 0
    %2286 = vmatpush2.bf16.xpose.msra.mxu0 0
    %2287 = vmatprep.subr.bf16.mxu0 0
    %2288 = vmatpush2.bf16.xpose.msra.mxu0 0
    %2289 = vmatprep.subr.bf16.mxu0 0
    %2290 = vmatpush2.bf16.xpose.msra.mxu0 0
    %2291 = vmatprep.subr.bf16.mxu0 0
    %2292 = vmatpush2.bf16.xpose.msra.mxu0 0
    %2293 = vmatprep.subr.bf16.mxu0 0
    %2294 = vmatpush2.bf16.xpose.msra.mxu0 0
    %2295 = vmatprep.mubr.bf16.mxu0 0
    %2296 = vmatmul.mubr.bf16.gmra.mxu0 %v2258
    %v2297 = vpop.f32.mrf.mxu0
    %v2298 = vadd.f32 0.0, %v2297
    %v2299 = vpop.f32.mrf.mxu0
    %v2300 = vpop.f32.mrf.mxu0
    %v2301 = vadd.f32 0.0, %v2300
    %v2302 = vpop.f32.mrf.mxu0
    %2303 = vdwg.mxu0
    %v2305 = vsel %vm625, %v2162, 0
    %v2308 = vsel %vm625, %v2178, 0
    %2310 = vmatprep.subr.bf16.mxu0 0
    %2311 = vmatpush1.bf16.xpose.msra.mxu0 0
    %2312 = vmatprep.subr.bf16.mxu0 0
    %2313 = vmatpush1.bf16.xpose.msra.mxu0 0
    %2314 = vmatprep.subr.bf16.mxu0 0
    %2315 = vmatpush1.bf16.xpose.msra.mxu0 0
    %2316 = vmatprep.subr.bf16.mxu0 0
    %2317 = vmatpush1.bf16.xpose.msra.mxu0 0
    %2318 = vmatprep.subr.bf16.mxu0 0
    %2319 = vmatpush1.bf16.xpose.msra.mxu0 0
    %2320 = vmatprep.subr.bf16.mxu0 0
    %2321 = vmatpush1.bf16.xpose.msra.mxu0 0
    %2322 = vmatprep.subr.bf16.mxu0 0
    %2323 = vmatpush1.bf16.xpose.msra.mxu0 0
    %2324 = vmatprep.subr.bf16.mxu0 0
    %2325 = vmatpush1.bf16.xpose.msra.mxu0 %v2308
    %2326 = vmatprep.subr.bf16.mxu0 0
    %2327 = vmatpush2.bf16.xpose.msra.mxu0 0
    %2328 = vmatprep.subr.bf16.mxu0 0
    %2329 = vmatpush2.bf16.xpose.msra.mxu0 0
    %2330 = vmatprep.subr.bf16.mxu0 0
    %2331 = vmatpush2.bf16.xpose.msra.mxu0 0
    %2332 = vmatprep.subr.bf16.mxu0 0
    %2333 = vmatpush2.bf16.xpose.msra.mxu0 0
    %2334 = vmatprep.subr.bf16.mxu0 0
    %2335 = vmatpush2.bf16.xpose.msra.mxu0 0
    %2336 = vmatprep.subr.bf16.mxu0 0
    %2337 = vmatpush2.bf16.xpose.msra.mxu0 0
    %2338 = vmatprep.subr.bf16.mxu0 0
    %2339 = vmatpush2.bf16.xpose.msra.mxu0 0
    %2340 = vmatprep.subr.bf16.mxu0 0
    %2341 = vmatpush2.bf16.xpose.msra.mxu0 0
    %2342 = vmatprep.mubr.bf16.mxu0 0
    %2343 = vmatmul.mubr.bf16.gmra.mxu0 %v2305
    %v2344 = vpop.f32.mrf.mxu0
    %v2345 = vadd.f32 0.0, %v2344
    %v2346 = vpop.f32.mrf.mxu0
    %v2347 = vpop.f32.mrf.mxu0
    %v2348 = vadd.f32 0.0, %v2347
    %v2349 = vpop.f32.mrf.mxu0
    %2350 = vdwg.mxu0
    %v2352 = vsel %vm625, %v2164, 0
    %v2355 = vsel %vm625, %v2180, 0
    %2357 = vmatprep.subr.bf16.mxu0 0
    %2358 = vmatpush1.bf16.xpose.msra.mxu0 0
    %2359 = vmatprep.subr.bf16.mxu0 0
    %2360 = vmatpush1.bf16.xpose.msra.mxu0 0
    %2361 = vmatprep.subr.bf16.mxu0 0
    %2362 = vmatpush1.bf16.xpose.msra.mxu0 0
    %2363 = vmatprep.subr.bf16.mxu0 0
    %2364 = vmatpush1.bf16.xpose.msra.mxu0 0
    %2365 = vmatprep.subr.bf16.mxu0 0
    %2366 = vmatpush1.bf16.xpose.msra.mxu0 0
    %2367 = vmatprep.subr.bf16.mxu0 0
    %2368 = vmatpush1.bf16.xpose.msra.mxu0 0
    %2369 = vmatprep.subr.bf16.mxu0 0
    %2370 = vmatpush1.bf16.xpose.msra.mxu0 0
    %2371 = vmatprep.subr.bf16.mxu0 0
    %2372 = vmatpush1.bf16.xpose.msra.mxu0 %v2355
    %2373 = vmatprep.subr.bf16.mxu0 0
    %2374 = vmatpush2.bf16.xpose.msra.mxu0 0
    %2375 = vmatprep.subr.bf16.mxu0 0
    %2376 = vmatpush2.bf16.xpose.msra.mxu0 0
    %2377 = vmatprep.subr.bf16.mxu0 0
    %2378 = vmatpush2.bf16.xpose.msra.mxu0 0
    %2379 = vmatprep.subr.bf16.mxu0 0
    %2380 = vmatpush2.bf16.xpose.msra.mxu0 0
    %2381 = vmatprep.subr.bf16.mxu0 0
    %2382 = vmatpush2.bf16.xpose.msra.mxu0 0
    %2383 = vmatprep.subr.bf16.mxu0 0
    %2384 = vmatpush2.bf16.xpose.msra.mxu0 0
    %2385 = vmatprep.subr.bf16.mxu0 0
    %2386 = vmatpush2.bf16.xpose.msra.mxu0 0
    %2387 = vmatprep.subr.bf16.mxu0 0
    %2388 = vmatpush2.bf16.xpose.msra.mxu0 0
    %2389 = vmatprep.mubr.bf16.mxu0 0
    %2390 = vmatmul.mubr.bf16.gmra.mxu0 %v2352
    %v2391 = vpop.f32.mrf.mxu0
    %v2392 = vadd.f32 0.0, %v2391
    %v2393 = vpop.f32.mrf.mxu0
    %v2394 = vpop.f32.mrf.mxu0
    %v2395 = vadd.f32 0.0, %v2394
    %v2396 = vpop.f32.mrf.mxu0
    %2397 = vdwg.mxu0
    %v2399 = vsel %vm625, %v2157, 0
    %v2402 = vsel %vm625, %v2173, 0
    %2404 = vmatprep.subr.bf16.mxu0 0
    %2405 = vmatpush1.bf16.xpose.msra.mxu0 0
    %2406 = vmatprep.subr.bf16.mxu0 0
    %2407 = vmatpush1.bf16.xpose.msra.mxu0 0
    %2408 = vmatprep.subr.bf16.mxu0 0
    %2409 = vmatpush1.bf16.xpose.msra.mxu0 0
    %2410 = vmatprep.subr.bf16.mxu0 0
    %2411 = vmatpush1.bf16.xpose.msra.mxu0 0
    %2412 = vmatprep.subr.bf16.mxu0 0
    %2413 = vmatpush1.bf16.xpose.msra.mxu0 0
    %2414 = vmatprep.subr.bf16.mxu0 0
    %2415 = vmatpush1.bf16.xpose.msra.mxu0 0
    %2416 = vmatprep.subr.bf16.mxu0 0
    %2417 = vmatpush1.bf16.xpose.msra.mxu0 0
    %2418 = vmatprep.subr.bf16.mxu0 0
    %2419 = vmatpush1.bf16.xpose.msra.mxu0 %v2402
    %2420 = vmatprep.subr.bf16.mxu0 0
    %2421 = vmatpush2.bf16.xpose.msra.mxu0 0
    %2422 = vmatprep.subr.bf16.mxu0 0
    %2423 = vmatpush2.bf16.xpose.msra.mxu0 0
    %2424 = vmatprep.subr.bf16.mxu0 0
    %2425 = vmatpush2.bf16.xpose.msra.mxu0 0
    %2426 = vmatprep.subr.bf16.mxu0 0
    %2427 = vmatpush2.bf16.xpose.msra.mxu0 0
    %2428 = vmatprep.subr.bf16.mxu0 0
    %2429 = vmatpush2.bf16.xpose.msra.mxu0 0
    %2430 = vmatprep.subr.bf16.mxu0 0
    %2431 = vmatpush2.bf16.xpose.msra.mxu0 0
    %2432 = vmatprep.subr.bf16.mxu0 0
    %2433 = vmatpush2.bf16.xpose.msra.mxu0 0
    %2434 = vmatprep.subr.bf16.mxu0 0
    %2435 = vmatpush2.bf16.xpose.msra.mxu0 0
    %2436 = vmatprep.mubr.bf16.mxu0 0
    %2437 = vmatmul.mubr.bf16.gmra.mxu0 %v2399
    %v2438 = vpop.f32.mrf.mxu0
    %v2439 = vadd.f32 0.0, %v2438
    %v2440 = vpop.f32.mrf.mxu0
    %v2441 = vpop.f32.mrf.mxu0
    %v2442 = vadd.f32 0.0, %v2441
    %v2443 = vpop.f32.mrf.mxu0
    %2444 = vdwg.mxu0
    %v2446 = vsel %vm625, %v2167, 0
    %v2449 = vsel %vm625, %v2183, 0
    %2451 = vmatprep.subr.bf16.mxu0 0
    %2452 = vmatpush1.bf16.xpose.msra.mxu0 0
    %2453 = vmatprep.subr.bf16.mxu0 0
    %2454 = vmatpush1.bf16.xpose.msra.mxu0 0
    %2455 = vmatprep.subr.bf16.mxu0 0
    %2456 = vmatpush1.bf16.xpose.msra.mxu0 0
    %2457 = vmatprep.subr.bf16.mxu0 0
    %2458 = vmatpush1.bf16.xpose.msra.mxu0 0
    %2459 = vmatprep.subr.bf16.mxu0 0
    %2460 = vmatpush1.bf16.xpose.msra.mxu0 0
    %2461 = vmatprep.subr.bf16.mxu0 0
    %2462 = vmatpush1.bf16.xpose.msra.mxu0 0
    %2463 = vmatprep.subr.bf16.mxu0 0
    %2464 = vmatpush1.bf16.xpose.msra.mxu0 0
    %2465 = vmatprep.subr.bf16.mxu0 0
    %2466 = vmatpush1.bf16.xpose.msra.mxu0 %v2449
    %2467 = vmatprep.subr.bf16.mxu0 0
    %2468 = vmatpush2.bf16.xpose.msra.mxu0 0
    %2469 = vmatprep.subr.bf16.mxu0 0
    %2470 = vmatpush2.bf16.xpose.msra.mxu0 0
    %2471 = vmatprep.subr.bf16.mxu0 0
    %2472 = vmatpush2.bf16.xpose.msra.mxu0 0
    %2473 = vmatprep.subr.bf16.mxu0 0
    %2474 = vmatpush2.bf16.xpose.msra.mxu0 0
    %2475 = vmatprep.subr.bf16.mxu0 0
    %2476 = vmatpush2.bf16.xpose.msra.mxu0 0
    %2477 = vmatprep.subr.bf16.mxu0 0
    %2478 = vmatpush2.bf16.xpose.msra.mxu0 0
    %2479 = vmatprep.subr.bf16.mxu0 0
    %2480 = vmatpush2.bf16.xpose.msra.mxu0 0
    %2481 = vmatprep.subr.bf16.mxu0 0
    %2482 = vmatpush2.bf16.xpose.msra.mxu0 0
    %2483 = vmatprep.mubr.bf16.mxu0 0
    %2484 = vmatmul.mubr.bf16.gmra.mxu0 %v2446
    %v2485 = vpop.f32.mrf.mxu0
    %v2486 = vadd.f32 0.0, %v2485
    %v2487 = vpop.f32.mrf.mxu0
    %v2488 = vpop.f32.mrf.mxu0
    %v2489 = vadd.f32 0.0, %v2488
    %v2490 = vpop.f32.mrf.mxu0
    %2491 = vdwg.mxu0
    %v2493 = vsel %vm625, %v2169, 0
    %v2496 = vsel %vm625, %v2185, 0
    %2498 = vmatprep.subr.bf16.mxu0 0
    %2499 = vmatpush1.bf16.xpose.msra.mxu0 0
    %2500 = vmatprep.subr.bf16.mxu0 0
    %2501 = vmatpush1.bf16.xpose.msra.mxu0 0
    %2502 = vmatprep.subr.bf16.mxu0 0
    %2503 = vmatpush1.bf16.xpose.msra.mxu0 0
    %2504 = vmatprep.subr.bf16.mxu0 0
    %2505 = vmatpush1.bf16.xpose.msra.mxu0 0
    %2506 = vmatprep.subr.bf16.mxu0 0
    %2507 = vmatpush1.bf16.xpose.msra.mxu0 0
    %2508 = vmatprep.subr.bf16.mxu0 0
    %2509 = vmatpush1.bf16.xpose.msra.mxu0 0
    %2510 = vmatprep.subr.bf16.mxu0 0
    %2511 = vmatpush1.bf16.xpose.msra.mxu0 0
    %2512 = vmatprep.subr.bf16.mxu0 0
    %2513 = vmatpush1.bf16.xpose.msra.mxu0 %v2496
    %2514 = vmatprep.subr.bf16.mxu0 0
    %2515 = vmatpush2.bf16.xpose.msra.mxu0 0
    %2516 = vmatprep.subr.bf16.mxu0 0
    %2517 = vmatpush2.bf16.xpose.msra.mxu0 0
    %2518 = vmatprep.subr.bf16.mxu0 0
    %2519 = vmatpush2.bf16.xpose.msra.mxu0 0
    %2520 = vmatprep.subr.bf16.mxu0 0
    %2521 = vmatpush2.bf16.xpose.msra.mxu0 0
    %2522 = vmatprep.subr.bf16.mxu0 0
    %2523 = vmatpush2.bf16.xpose.msra.mxu0 0
    %2524 = vmatprep.subr.bf16.mxu0 0
    %2525 = vmatpush2.bf16.xpose.msra.mxu0 0
    %2526 = vmatprep.subr.bf16.mxu0 0
    %2527 = vmatpush2.bf16.xpose.msra.mxu0 0
    %2528 = vmatprep.subr.bf16.mxu0 0
    %2529 = vmatpush2.bf16.xpose.msra.mxu0 0
    %2530 = vmatprep.mubr.bf16.mxu0 0
    %2531 = vmatmul.mubr.bf16.gmra.mxu0 %v2493
    %v2532 = vpop.f32.mrf.mxu0
    %v2533 = vadd.f32 0.0, %v2532
    %v2534 = vpop.f32.mrf.mxu0
    %v2535 = vpop.f32.mrf.mxu0
    %v2536 = vadd.f32 0.0, %v2535
    %v2537 = vpop.f32.mrf.mxu0
    %2538 = vdwg.mxu0
    %v2540 = vsel %vm625, %v2171, 0
    %v2543 = vsel %vm625, %v2187, 0
    %2545 = vmatprep.subr.bf16.mxu0 0
    %2546 = vmatpush1.bf16.xpose.msra.mxu0 0
    %2547 = vmatprep.subr.bf16.mxu0 0
    %2548 = vmatpush1.bf16.xpose.msra.mxu0 0
    %2549 = vmatprep.subr.bf16.mxu0 0
    %2550 = vmatpush1.bf16.xpose.msra.mxu0 0
    %2551 = vmatprep.subr.bf16.mxu0 0
    %2552 = vmatpush1.bf16.xpose.msra.mxu0 0
    %2553 = vmatprep.subr.bf16.mxu0 0
    %2554 = vmatpush1.bf16.xpose.msra.mxu0 0
    %2555 = vmatprep.subr.bf16.mxu0 0
    %2556 = vmatpush1.bf16.xpose.msra.mxu0 0
    %2557 = vmatprep.subr.bf16.mxu0 0
    %2558 = vmatpush1.bf16.xpose.msra.mxu0 0
    %2559 = vmatprep.subr.bf16.mxu0 0
    %2560 = vmatpush1.bf16.xpose.msra.mxu0 %v2543
    %2561 = vmatprep.subr.bf16.mxu0 0
    %2562 = vmatpush2.bf16.xpose.msra.mxu0 0
    %2563 = vmatprep.subr.bf16.mxu0 0
    %2564 = vmatpush2.bf16.xpose.msra.mxu0 0
    %2565 = vmatprep.subr.bf16.mxu0 0
    %2566 = vmatpush2.bf16.xpose.msra.mxu0 0
    %2567 = vmatprep.subr.bf16.mxu0 0
    %2568 = vmatpush2.bf16.xpose.msra.mxu0 0
    %2569 = vmatprep.subr.bf16.mxu0 0
    %2570 = vmatpush2.bf16.xpose.msra.mxu0 0
    %2571 = vmatprep.subr.bf16.mxu0 0
    %2572 = vmatpush2.bf16.xpose.msra.mxu0 0
    %2573 = vmatprep.subr.bf16.mxu0 0
    %2574 = vmatpush2.bf16.xpose.msra.mxu0 0
    %2575 = vmatprep.subr.bf16.mxu0 0
    %2576 = vmatpush2.bf16.xpose.msra.mxu0 0
    %2577 = vmatprep.mubr.bf16.mxu0 0
    %2578 = vmatmul.mubr.bf16.gmra.mxu0 %v2540
    %v2579 = vpop.f32.mrf.mxu0
    %v2580 = vadd.f32 0.0, %v2579
    %v2581 = vpop.f32.mrf.mxu0
    %v2582 = vpop.f32.mrf.mxu0
    %v2583 = vadd.f32 0.0, %v2582
    %v2584 = vpop.f32.mrf.mxu0
    %2585 = vdwg.mxu0
    %v2586 = vmul.f32 %v2251, 0.17677669
    %v2587 = vmul.f32 %v2254, 0.17677669
    %v2588 = vmul.f32 %v2298, 0.17677669
    %v2589 = vmul.f32 %v2301, 0.17677669
    %v2590 = vmul.f32 %v2345, 0.17677669
    %v2591 = vmul.f32 %v2348, 0.17677669
    %v2592 = vmul.f32 %v2392, 0.17677669
    %v2593 = vmul.f32 %v2395, 0.17677669
    %v2594 = vmul.f32 %v2439, 0.17677669
    %v2595 = vmul.f32 %v2442, 0.17677669
    %v2596 = vmul.f32 %v2486, 0.17677669
    %v2597 = vmul.f32 %v2489, 0.17677669
    %v2598 = vmul.f32 %v2533, 0.17677669
    %v2599 = vmul.f32 %v2536, 0.17677669
    %v2600 = vmul.f32 %v2580, 0.17677669
    %v2601 = vmul.f32 %v2583, 0.17677669
    %v2602 = vsel %vm1034, %v2586, -inf
    %2603 = vmax.xlane.f32.xlu0 %v2602
    %v2604 = vpop.xlane.xlu0 %2603
    %v2605 = vsel %vm1034, %v2587, -inf
    %2606 = vmax.xlane.f32.xlu0 %v2605
    %v2607 = vpop.xlane.xlu0 %2606
    %v2608 = vsel %vm1034, %v2588, -inf
    %2609 = vmax.xlane.f32.xlu0 %v2608
    %v2610 = vpop.xlane.xlu0 %2609
    %v2611 = vsel %vm1034, %v2589, -inf
    %2612 = vmax.xlane.f32.xlu0 %v2611
    %v2613 = vpop.xlane.xlu0 %2612
    %v2614 = vsel %vm1034, %v2590, -inf
    %2615 = vmax.xlane.f32.xlu0 %v2614
    %v2616 = vpop.xlane.xlu0 %2615
    %v2617 = vsel %vm1034, %v2591, -inf
    %2618 = vmax.xlane.f32.xlu0 %v2617
    %v2619 = vpop.xlane.xlu0 %2618
    %v2620 = vsel %vm1034, %v2592, -inf
    %2621 = vmax.xlane.f32.xlu0 %v2620
    %v2622 = vpop.xlane.xlu0 %2621
    %v2623 = vsel %vm1034, %v2593, -inf
    %2624 = vmax.xlane.f32.xlu0 %v2623
    %v2625 = vpop.xlane.xlu0 %2624
    %v2626 = vsel %vm1034, %v2594, -inf
    %2627 = vmax.xlane.f32.xlu0 %v2626
    %v2628 = vpop.xlane.xlu0 %2627
    %v2629 = vsel %vm1034, %v2595, -inf
    %2630 = vmax.xlane.f32.xlu0 %v2629
    %v2631 = vpop.xlane.xlu0 %2630
    %v2632 = vsel %vm1034, %v2596, -inf
    %2633 = vmax.xlane.f32.xlu0 %v2632
    %v2634 = vpop.xlane.xlu0 %2633
    %v2635 = vsel %vm1034, %v2597, -inf
    %2636 = vmax.xlane.f32.xlu0 %v2635
    %v2637 = vpop.xlane.xlu0 %2636
    %v2638 = vsel %vm1034, %v2598, -inf
    %2639 = vmax.xlane.f32.xlu0 %v2638
    %v2640 = vpop.xlane.xlu0 %2639
    %v2641 = vsel %vm1034, %v2599, -inf
    %2642 = vmax.xlane.f32.xlu0 %v2641
    %v2643 = vpop.xlane.xlu0 %2642
    %v2644 = vsel %vm1034, %v2600, -inf
    %2645 = vmax.xlane.f32.xlu0 %v2644
    %v2646 = vpop.xlane.xlu0 %2645
    %v2647 = vsel %vm1034, %v2601, -inf
    %2648 = vmax.xlane.f32.xlu0 %v2647
    %v2649 = vpop.xlane.xlu0 %2648
    %v2650 = vsub.f32 %v2586, %v2604
    %v2651 = vsub.f32 %v2587, %v2607
    %v2652 = vsub.f32 %v2588, %v2610
    %v2653 = vsub.f32 %v2589, %v2613
    %v2654 = vsub.f32 %v2590, %v2616
    %v2655 = vsub.f32 %v2591, %v2619
    %v2656 = vsub.f32 %v2592, %v2622
    %v2657 = vsub.f32 %v2593, %v2625
    %v2658 = vsub.f32 %v2594, %v2628
    %v2659 = vsub.f32 %v2595, %v2631
    %v2660 = vsub.f32 %v2596, %v2634
    %v2661 = vsub.f32 %v2597, %v2637
    %v2662 = vsub.f32 %v2598, %v2640
    %v2663 = vsub.f32 %v2599, %v2643
    %v2664 = vsub.f32 %v2600, %v2646
    %v2665 = vsub.f32 %v2601, %v2649
    %v2666 = vmul.f32 %v2650, 1.442695
    %v2667 = vpow.pop %v2666
    %v2668 = vmul.f32 %v2651, 1.442695
    %v2669 = vpow.pop %v2668
    %v2670 = vmul.f32 %v2652, 1.442695
    %v2671 = vpow.pop %v2670
    %v2672 = vmul.f32 %v2653, 1.442695
    %v2673 = vpow.pop %v2672
    %v2674 = vmul.f32 %v2654, 1.442695
    %v2675 = vpow.pop %v2674
    %v2676 = vmul.f32 %v2655, 1.442695
    %v2677 = vpow.pop %v2676
    %v2678 = vmul.f32 %v2656, 1.442695
    %v2679 = vpow.pop %v2678
    %v2680 = vmul.f32 %v2657, 1.442695
    %v2681 = vpow.pop %v2680
    %v2682 = vmul.f32 %v2658, 1.442695
    %v2683 = vpow.pop %v2682
    %v2684 = vmul.f32 %v2659, 1.442695
    %v2685 = vpow.pop %v2684
    %v2686 = vmul.f32 %v2660, 1.442695
    %v2687 = vpow.pop %v2686
    %v2688 = vmul.f32 %v2661, 1.442695
    %v2689 = vpow.pop %v2688
    %v2690 = vmul.f32 %v2662, 1.442695
    %v2691 = vpow.pop %v2690
    %v2692 = vmul.f32 %v2663, 1.442695
    %v2693 = vpow.pop %v2692
    %v2694 = vmul.f32 %v2664, 1.442695
    %v2695 = vpow.pop %v2694
    %v2696 = vmul.f32 %v2665, 1.442695
    %v2697 = vpow.pop %v2696
    %v2698 = vsel %vm1034, %v2667, 0.0
    %2699 = vadd.xlane.f32.xlu0 %v2698
    %v2700 = vpop.xlane.xlu0 %2699
    %v2701 = vsel %vm1034, %v2669, 0.0
    %2702 = vadd.xlane.f32.xlu0 %v2701
    %v2703 = vpop.xlane.xlu0 %2702
    %v2704 = vsel %vm1034, %v2671, 0.0
    %2705 = vadd.xlane.f32.xlu0 %v2704
    %v2706 = vpop.xlane.xlu0 %2705
    %v2707 = vsel %vm1034, %v2673, 0.0
    %2708 = vadd.xlane.f32.xlu0 %v2707
    %v2709 = vpop.xlane.xlu0 %2708
    %v2710 = vsel %vm1034, %v2675, 0.0
    %2711 = vadd.xlane.f32.xlu0 %v2710
    %v2712 = vpop.xlane.xlu0 %2711
    %v2713 = vsel %vm1034, %v2677, 0.0
    %2714 = vadd.xlane.f32.xlu0 %v2713
    %v2715 = vpop.xlane.xlu0 %2714
    %v2716 = vsel %vm1034, %v2679, 0.0
    %2717 = vadd.xlane.f32.xlu0 %v2716
    %v2718 = vpop.xlane.xlu0 %2717
    %v2719 = vsel %vm1034, %v2681, 0.0
    %2720 = vadd.xlane.f32.xlu0 %v2719
    %v2721 = vpop.xlane.xlu0 %2720
    %v2722 = vsel %vm1034, %v2683, 0.0
    %2723 = vadd.xlane.f32.xlu0 %v2722
    %v2724 = vpop.xlane.xlu0 %2723
    %v2725 = vsel %vm1034, %v2685, 0.0
    %2726 = vadd.xlane.f32.xlu0 %v2725
    %v2727 = vpop.xlane.xlu0 %2726
    %v2728 = vsel %vm1034, %v2687, 0.0
    %2729 = vadd.xlane.f32.xlu0 %v2728
    %v2730 = vpop.xlane.xlu0 %2729
    %v2731 = vsel %vm1034, %v2689, 0.0
    %2732 = vadd.xlane.f32.xlu0 %v2731
    %v2733 = vpop.xlane.xlu0 %2732
    %v2734 = vsel %vm1034, %v2691, 0.0
    %2735 = vadd.xlane.f32.xlu0 %v2734
    %v2736 = vpop.xlane.xlu0 %2735
    %v2737 = vsel %vm1034, %v2693, 0.0
    %2738 = vadd.xlane.f32.xlu0 %v2737
    %v2739 = vpop.xlane.xlu0 %2738
    %v2740 = vsel %vm1034, %v2695, 0.0
    %2741 = vadd.xlane.f32.xlu0 %v2740
    %v2742 = vpop.xlane.xlu0 %2741
    %v2743 = vsel %vm1034, %v2697, 0.0
    %2744 = vadd.xlane.f32.xlu0 %v2743
    %v2745 = vpop.xlane.xlu0 %2744
    %v2746 = vrcp.pop %v2700
    %v2747 = vrcp.pop %v2703
    %v2748 = vrcp.pop %v2706
    %v2749 = vrcp.pop %v2709
    %v2750 = vrcp.pop %v2712
    %v2751 = vrcp.pop %v2715
    %v2752 = vrcp.pop %v2718
    %v2753 = vrcp.pop %v2721
    %v2754 = vrcp.pop %v2724
    %v2755 = vrcp.pop %v2727
    %v2756 = vrcp.pop %v2730
    %v2757 = vrcp.pop %v2733
    %v2758 = vrcp.pop %v2736
    %v2759 = vrcp.pop %v2739
    %v2760 = vrcp.pop %v2742
    %v2761 = vrcp.pop %v2745
    %v2762 = vmul.f32 %v2667, %v2746
    %v2763 = vmul.f32 %v2669, %v2747
    %v2764 = vmul.f32 %v2671, %v2748
    %v2765 = vmul.f32 %v2673, %v2749
    %v2766 = vmul.f32 %v2675, %v2750
    %v2767 = vmul.f32 %v2677, %v2751
    %v2768 = vmul.f32 %v2679, %v2752
    %v2769 = vmul.f32 %v2681, %v2753
    %v2770 = vmul.f32 %v2683, %v2754
    %v2771 = vmul.f32 %v2685, %v2755
    %v2772 = vmul.f32 %v2687, %v2756
    %v2773 = vmul.f32 %v2689, %v2757
    %v2774 = vmul.f32 %v2691, %v2758
    %v2775 = vmul.f32 %v2693, %v2759
    %v2776 = vmul.f32 %v2695, %v2760
    %v2777 = vmul.f32 %v2697, %v2761
    %v2778 = vpack.c.bf16 %v2763, %v2762
    %v2779 = vpack.c.bf16 %v2765, %v2764
    %v2780 = vpack.c.bf16 %v2767, %v2766
    %v2781 = vpack.c.bf16 %v2769, %v2768
    %v2782 = vpack.c.bf16 %v2771, %v2770
    %v2783 = vpack.c.bf16 %v2773, %v2772
    %v2784 = vpack.c.bf16 %v2775, %v2774
    %v2785 = vpack.c.bf16 %v2777, %v2776
    %v2787 = vsel %vm1034, %v2778, 0
    %2789 = vmatprep.subr.bf16.mxu0 0
    %2790 = vmatpush1.bf16.msra.mxu0 0
    %2791 = vmatprep.subr.bf16.mxu0 0
    %2792 = vmatpush1.bf16.msra.mxu0 0
    %2793 = vmatprep.subr.bf16.mxu0 0
    %2794 = vmatpush1.bf16.msra.mxu0 0
    %2795 = vmatprep.subr.bf16.mxu0 0
    %2796 = vmatpush1.bf16.msra.mxu0 0
    %2797 = vmatprep.subr.bf16.mxu0 0
    %2798 = vmatpush1.bf16.msra.mxu0 0
    %2799 = vmatprep.subr.bf16.mxu0 0
    %2800 = vmatpush1.bf16.msra.mxu0 0
    %2801 = vmatprep.subr.bf16.mxu0 0
    %2802 = vmatpush1.bf16.msra.mxu0 0
    %2803 = vmatprep.subr.bf16.mxu0 0
    %2804 = vmatpush1.bf16.msra.mxu0 %v2188
    %2805 = vmatprep.subr.bf16.mxu0 0
    %2806 = vmatpush2.bf16.msra.mxu0 0
    %2807 = vmatprep.subr.bf16.mxu0 0
    %2808 = vmatpush2.bf16.msra.mxu0 0
    %2809 = vmatprep.subr.bf16.mxu0 0
    %2810 = vmatpush2.bf16.msra.mxu0 0
    %2811 = vmatprep.subr.bf16.mxu0 0
    %2812 = vmatpush2.bf16.msra.mxu0 0
    %2813 = vmatprep.subr.bf16.mxu0 0
    %2814 = vmatpush2.bf16.msra.mxu0 0
    %2815 = vmatprep.subr.bf16.mxu0 0
    %2816 = vmatpush2.bf16.msra.mxu0 0
    %2817 = vmatprep.subr.bf16.mxu0 0
    %2818 = vmatpush2.bf16.msra.mxu0 0
    %2819 = vmatprep.subr.bf16.mxu0 0
    %2820 = vmatpush2.bf16.msra.mxu0 0
    %2821 = vmatprep.mubr.bf16.mxu0 0
    %2822 = vmatmul.mubr.bf16.gmra.mxu0 %v2787
    %v2823 = vpop.f32.mrf.mxu0
    %v2824 = vadd.f32 0.0, %v2823
    %v2825 = vpop.f32.mrf.mxu0
    %v2826 = vpop.f32.mrf.mxu0
    %v2827 = vadd.f32 0.0, %v2826
    %v2828 = vpop.f32.mrf.mxu0
    %2829 = vdwg.mxu0
    %v2831 = vsel %vm1034, %v2779, 0
    %2833 = vmatprep.subr.bf16.mxu0 0
    %2834 = vmatpush1.bf16.msra.mxu0 0
    %2835 = vmatprep.subr.bf16.mxu0 0
    %2836 = vmatpush1.bf16.msra.mxu0 0
    %2837 = vmatprep.subr.bf16.mxu0 0
    %2838 = vmatpush1.bf16.msra.mxu0 0
    %2839 = vmatprep.subr.bf16.mxu0 0
    %2840 = vmatpush1.bf16.msra.mxu0 0
    %2841 = vmatprep.subr.bf16.mxu0 0
    %2842 = vmatpush1.bf16.msra.mxu0 0
    %2843 = vmatprep.subr.bf16.mxu0 0
    %2844 = vmatpush1.bf16.msra.mxu0 0
    %2845 = vmatprep.subr.bf16.mxu0 0
    %2846 = vmatpush1.bf16.msra.mxu0 0
    %2847 = vmatprep.subr.bf16.mxu0 0
    %2848 = vmatpush1.bf16.msra.mxu0 %v2192
    %2849 = vmatprep.subr.bf16.mxu0 0
    %2850 = vmatpush2.bf16.msra.mxu0 0
    %2851 = vmatprep.subr.bf16.mxu0 0
    %2852 = vmatpush2.bf16.msra.mxu0 0
    %2853 = vmatprep.subr.bf16.mxu0 0
    %2854 = vmatpush2.bf16.msra.mxu0 0
    %2855 = vmatprep.subr.bf16.mxu0 0
    %2856 = vmatpush2.bf16.msra.mxu0 0
    %2857 = vmatprep.subr.bf16.mxu0 0
    %2858 = vmatpush2.bf16.msra.mxu0 0
    %2859 = vmatprep.subr.bf16.mxu0 0
    %2860 = vmatpush2.bf16.msra.mxu0 0
    %2861 = vmatprep.subr.bf16.mxu0 0
    %2862 = vmatpush2.bf16.msra.mxu0 0
    %2863 = vmatprep.subr.bf16.mxu0 0
    %2864 = vmatpush2.bf16.msra.mxu0 0
    %2865 = vmatprep.mubr.bf16.mxu0 0
    %2866 = vmatmul.mubr.bf16.gmra.mxu0 %v2831
    %v2867 = vpop.f32.mrf.mxu0
    %v2868 = vadd.f32 0.0, %v2867
    %v2869 = vpop.f32.mrf.mxu0
    %v2870 = vpop.f32.mrf.mxu0
    %v2871 = vadd.f32 0.0, %v2870
    %v2872 = vpop.f32.mrf.mxu0
    %2873 = vdwg.mxu0
    %v2875 = vsel %vm1034, %v2780, 0
    %2877 = vmatprep.subr.bf16.mxu0 0
    %2878 = vmatpush1.bf16.msra.mxu0 0
    %2879 = vmatprep.subr.bf16.mxu0 0
    %2880 = vmatpush1.bf16.msra.mxu0 0
    %2881 = vmatprep.subr.bf16.mxu0 0
    %2882 = vmatpush1.bf16.msra.mxu0 0
    %2883 = vmatprep.subr.bf16.mxu0 0
    %2884 = vmatpush1.bf16.msra.mxu0 0
    %2885 = vmatprep.subr.bf16.mxu0 0
    %2886 = vmatpush1.bf16.msra.mxu0 0
    %2887 = vmatprep.subr.bf16.mxu0 0
    %2888 = vmatpush1.bf16.msra.mxu0 0
    %2889 = vmatprep.subr.bf16.mxu0 0
    %2890 = vmatpush1.bf16.msra.mxu0 0
    %2891 = vmatprep.subr.bf16.mxu0 0
    %2892 = vmatpush1.bf16.msra.mxu0 %v2195
    %2893 = vmatprep.subr.bf16.mxu0 0
    %2894 = vmatpush2.bf16.msra.mxu0 0
    %2895 = vmatprep.subr.bf16.mxu0 0
    %2896 = vmatpush2.bf16.msra.mxu0 0
    %2897 = vmatprep.subr.bf16.mxu0 0
    %2898 = vmatpush2.bf16.msra.mxu0 0
    %2899 = vmatprep.subr.bf16.mxu0 0
    %2900 = vmatpush2.bf16.msra.mxu0 0
    %2901 = vmatprep.subr.bf16.mxu0 0
    %2902 = vmatpush2.bf16.msra.mxu0 0
    %2903 = vmatprep.subr.bf16.mxu0 0
    %2904 = vmatpush2.bf16.msra.mxu0 0
    %2905 = vmatprep.subr.bf16.mxu0 0
    %2906 = vmatpush2.bf16.msra.mxu0 0
    %2907 = vmatprep.subr.bf16.mxu0 0
    %2908 = vmatpush2.bf16.msra.mxu0 0
    %2909 = vmatprep.mubr.bf16.mxu0 0
    %2910 = vmatmul.mubr.bf16.gmra.mxu0 %v2875
    %v2911 = vpop.f32.mrf.mxu0
    %v2912 = vadd.f32 0.0, %v2911
    %v2913 = vpop.f32.mrf.mxu0
    %v2914 = vpop.f32.mrf.mxu0
    %v2915 = vadd.f32 0.0, %v2914
    %v2916 = vpop.f32.mrf.mxu0
    %2917 = vdwg.mxu0
    %v2919 = vsel %vm1034, %v2781, 0
    %2921 = vmatprep.subr.bf16.mxu0 0
    %2922 = vmatpush1.bf16.msra.mxu0 0
    %2923 = vmatprep.subr.bf16.mxu0 0
    %2924 = vmatpush1.bf16.msra.mxu0 0
    %2925 = vmatprep.subr.bf16.mxu0 0
    %2926 = vmatpush1.bf16.msra.mxu0 0
    %2927 = vmatprep.subr.bf16.mxu0 0
    %2928 = vmatpush1.bf16.msra.mxu0 0
    %2929 = vmatprep.subr.bf16.mxu0 0
    %2930 = vmatpush1.bf16.msra.mxu0 0
    %2931 = vmatprep.subr.bf16.mxu0 0
    %2932 = vmatpush1.bf16.msra.mxu0 0
    %2933 = vmatprep.subr.bf16.mxu0 0
    %2934 = vmatpush1.bf16.msra.mxu0 0
    %2935 = vmatprep.subr.bf16.mxu0 0
    %2936 = vmatpush1.bf16.msra.mxu0 %v2198
    %2937 = vmatprep.subr.bf16.mxu0 0
    %2938 = vmatpush2.bf16.msra.mxu0 0
    %2939 = vmatprep.subr.bf16.mxu0 0
    %2940 = vmatpush2.bf16.msra.mxu0 0
    %2941 = vmatprep.subr.bf16.mxu0 0
    %2942 = vmatpush2.bf16.msra.mxu0 0
    %2943 = vmatprep.subr.bf16.mxu0 0
    %2944 = vmatpush2.bf16.msra.mxu0 0
    %2945 = vmatprep.subr.bf16.mxu0 0
    %2946 = vmatpush2.bf16.msra.mxu0 0
    %2947 = vmatprep.subr.bf16.mxu0 0
    %2948 = vmatpush2.bf16.msra.mxu0 0
    %2949 = vmatprep.subr.bf16.mxu0 0
    %2950 = vmatpush2.bf16.msra.mxu0 0
    %2951 = vmatprep.subr.bf16.mxu0 0
    %2952 = vmatpush2.bf16.msra.mxu0 0
    %2953 = vmatprep.mubr.bf16.mxu0 0
    %2954 = vmatmul.mubr.bf16.gmra.mxu0 %v2919
    %v2955 = vpop.f32.mrf.mxu0
    %v2956 = vadd.f32 0.0, %v2955
    %v2957 = vpop.f32.mrf.mxu0
    %v2958 = vpop.f32.mrf.mxu0
    %v2959 = vadd.f32 0.0, %v2958
    %v2960 = vpop.f32.mrf.mxu0
    %2961 = vdwg.mxu0
    %v2963 = vsel %vm1034, %v2782, 0
    %2965 = vmatprep.subr.bf16.mxu0 0
    %2966 = vmatpush1.bf16.msra.mxu0 0
    %2967 = vmatprep.subr.bf16.mxu0 0
    %2968 = vmatpush1.bf16.msra.mxu0 0
    %2969 = vmatprep.subr.bf16.mxu0 0
    %2970 = vmatpush1.bf16.msra.mxu0 0
    %2971 = vmatprep.subr.bf16.mxu0 0
    %2972 = vmatpush1.bf16.msra.mxu0 0
    %2973 = vmatprep.subr.bf16.mxu0 0
    %2974 = vmatpush1.bf16.msra.mxu0 0
    %2975 = vmatprep.subr.bf16.mxu0 0
    %2976 = vmatpush1.bf16.msra.mxu0 0
    %2977 = vmatprep.subr.bf16.mxu0 0
    %2978 = vmatpush1.bf16.msra.mxu0 0
    %2979 = vmatprep.subr.bf16.mxu0 0
    %2980 = vmatpush1.bf16.msra.mxu0 %v2189
    %2981 = vmatprep.subr.bf16.mxu0 0
    %2982 = vmatpush2.bf16.msra.mxu0 0
    %2983 = vmatprep.subr.bf16.mxu0 0
    %2984 = vmatpush2.bf16.msra.mxu0 0
    %2985 = vmatprep.subr.bf16.mxu0 0
    %2986 = vmatpush2.bf16.msra.mxu0 0
    %2987 = vmatprep.subr.bf16.mxu0 0
    %2988 = vmatpush2.bf16.msra.mxu0 0
    %2989 = vmatprep.subr.bf16.mxu0 0
    %2990 = vmatpush2.bf16.msra.mxu0 0
    %2991 = vmatprep.subr.bf16.mxu0 0
    %2992 = vmatpush2.bf16.msra.mxu0 0
    %2993 = vmatprep.subr.bf16.mxu0 0
    %2994 = vmatpush2.bf16.msra.mxu0 0
    %2995 = vmatprep.subr.bf16.mxu0 0
    %2996 = vmatpush2.bf16.msra.mxu0 0
    %2997 = vmatprep.mubr.bf16.mxu0 0
    %2998 = vmatmul.mubr.bf16.gmra.mxu0 %v2963
    %v2999 = vpop.f32.mrf.mxu0
    %v3000 = vadd.f32 0.0, %v2999
    %v3001 = vpop.f32.mrf.mxu0
    %v3002 = vpop.f32.mrf.mxu0
    %v3003 = vadd.f32 0.0, %v3002
    %v3004 = vpop.f32.mrf.mxu0
    %3005 = vdwg.mxu0
    %v3007 = vsel %vm1034, %v2783, 0
    %3009 = vmatprep.subr.bf16.mxu0 0
    %3010 = vmatpush1.bf16.msra.mxu0 0
    %3011 = vmatprep.subr.bf16.mxu0 0
    %3012 = vmatpush1.bf16.msra.mxu0 0
    %3013 = vmatprep.subr.bf16.mxu0 0
    %3014 = vmatpush1.bf16.msra.mxu0 0
    %3015 = vmatprep.subr.bf16.mxu0 0
    %3016 = vmatpush1.bf16.msra.mxu0 0
    %3017 = vmatprep.subr.bf16.mxu0 0
    %3018 = vmatpush1.bf16.msra.mxu0 0
    %3019 = vmatprep.subr.bf16.mxu0 0
    %3020 = vmatpush1.bf16.msra.mxu0 0
    %3021 = vmatprep.subr.bf16.mxu0 0
    %3022 = vmatpush1.bf16.msra.mxu0 0
    %3023 = vmatprep.subr.bf16.mxu0 0
    %3024 = vmatpush1.bf16.msra.mxu0 %v2202
    %3025 = vmatprep.subr.bf16.mxu0 0
    %3026 = vmatpush2.bf16.msra.mxu0 0
    %3027 = vmatprep.subr.bf16.mxu0 0
    %3028 = vmatpush2.bf16.msra.mxu0 0
    %3029 = vmatprep.subr.bf16.mxu0 0
    %3030 = vmatpush2.bf16.msra.mxu0 0
    %3031 = vmatprep.subr.bf16.mxu0 0
    %3032 = vmatpush2.bf16.msra.mxu0 0
    %3033 = vmatprep.subr.bf16.mxu0 0
    %3034 = vmatpush2.bf16.msra.mxu0 0
    %3035 = vmatprep.subr.bf16.mxu0 0
    %3036 = vmatpush2.bf16.msra.mxu0 0
    %3037 = vmatprep.subr.bf16.mxu0 0
    %3038 = vmatpush2.bf16.msra.mxu0 0
    %3039 = vmatprep.subr.bf16.mxu0 0
    %3040 = vmatpush2.bf16.msra.mxu0 0
    %3041 = vmatprep.mubr.bf16.mxu0 0
    %3042 = vmatmul.mubr.bf16.gmra.mxu0 %v3007
    %v3043 = vpop.f32.mrf.mxu0
    %v3044 = vadd.f32 0.0, %v3043
    %v3045 = vpop.f32.mrf.mxu0
    %v3046 = vpop.f32.mrf.mxu0
    %v3047 = vadd.f32 0.0, %v3046
    %v3048 = vpop.f32.mrf.mxu0
    %3049 = vdwg.mxu0
    %v3051 = vsel %vm1034, %v2784, 0
    %3053 = vmatprep.subr.bf16.mxu0 0
    %3054 = vmatpush1.bf16.msra.mxu0 0
    %3055 = vmatprep.subr.bf16.mxu0 0
    %3056 = vmatpush1.bf16.msra.mxu0 0
    %3057 = vmatprep.subr.bf16.mxu0 0
    %3058 = vmatpush1.bf16.msra.mxu0 0
    %3059 = vmatprep.subr.bf16.mxu0 0
    %3060 = vmatpush1.bf16.msra.mxu0 0
    %3061 = vmatprep.subr.bf16.mxu0 0
    %3062 = vmatpush1.bf16.msra.mxu0 0
    %3063 = vmatprep.subr.bf16.mxu0 0
    %3064 = vmatpush1.bf16.msra.mxu0 0
    %3065 = vmatprep.subr.bf16.mxu0 0
    %3066 = vmatpush1.bf16.msra.mxu0 0
    %3067 = vmatprep.subr.bf16.mxu0 0
    %3068 = vmatpush1.bf16.msra.mxu0 %v2205
    %3069 = vmatprep.subr.bf16.mxu0 0
    %3070 = vmatpush2.bf16.msra.mxu0 0
    %3071 = vmatprep.subr.bf16.mxu0 0
    %3072 = vmatpush2.bf16.msra.mxu0 0
    %3073 = vmatprep.subr.bf16.mxu0 0
    %3074 = vmatpush2.bf16.msra.mxu0 0
    %3075 = vmatprep.subr.bf16.mxu0 0
    %3076 = vmatpush2.bf16.msra.mxu0 0
    %3077 = vmatprep.subr.bf16.mxu0 0
    %3078 = vmatpush2.bf16.msra.mxu0 0
    %3079 = vmatprep.subr.bf16.mxu0 0
    %3080 = vmatpush2.bf16.msra.mxu0 0
    %3081 = vmatprep.subr.bf16.mxu0 0
    %3082 = vmatpush2.bf16.msra.mxu0 0
    %3083 = vmatprep.subr.bf16.mxu0 0
    %3084 = vmatpush2.bf16.msra.mxu0 0
    %3085 = vmatprep.mubr.bf16.mxu0 0
    %3086 = vmatmul.mubr.bf16.gmra.mxu0 %v3051
    %v3087 = vpop.f32.mrf.mxu0
    %v3088 = vadd.f32 0.0, %v3087
    %v3089 = vpop.f32.mrf.mxu0
    %v3090 = vpop.f32.mrf.mxu0
    %v3091 = vadd.f32 0.0, %v3090
    %v3092 = vpop.f32.mrf.mxu0
    %3093 = vdwg.mxu0
    %v3095 = vsel %vm1034, %v2785, 0
    %3097 = vmatprep.subr.bf16.mxu0 0
    %3098 = vmatpush1.bf16.msra.mxu0 0
    %3099 = vmatprep.subr.bf16.mxu0 0
    %3100 = vmatpush1.bf16.msra.mxu0 0
    %3101 = vmatprep.subr.bf16.mxu0 0
    %3102 = vmatpush1.bf16.msra.mxu0 0
    %3103 = vmatprep.subr.bf16.mxu0 0
    %3104 = vmatpush1.bf16.msra.mxu0 0
    %3105 = vmatprep.subr.bf16.mxu0 0
    %3106 = vmatpush1.bf16.msra.mxu0 0
    %3107 = vmatprep.subr.bf16.mxu0 0
    %3108 = vmatpush1.bf16.msra.mxu0 0
    %3109 = vmatprep.subr.bf16.mxu0 0
    %3110 = vmatpush1.bf16.msra.mxu0 0
    %3111 = vmatprep.subr.bf16.mxu0 0
    %3112 = vmatpush1.bf16.msra.mxu0 %v2208
    %3113 = vmatprep.subr.bf16.mxu0 0
    %3114 = vmatpush2.bf16.msra.mxu0 0
    %3115 = vmatprep.subr.bf16.mxu0 0
    %3116 = vmatpush2.bf16.msra.mxu0 0
    %3117 = vmatprep.subr.bf16.mxu0 0
    %3118 = vmatpush2.bf16.msra.mxu0 0
    %3119 = vmatprep.subr.bf16.mxu0 0
    %3120 = vmatpush2.bf16.msra.mxu0 0
    %3121 = vmatprep.subr.bf16.mxu0 0
    %3122 = vmatpush2.bf16.msra.mxu0 0
    %3123 = vmatprep.subr.bf16.mxu0 0
    %3124 = vmatpush2.bf16.msra.mxu0 0
    %3125 = vmatprep.subr.bf16.mxu0 0
    %3126 = vmatpush2.bf16.msra.mxu0 0
    %3127 = vmatprep.subr.bf16.mxu0 0
    %3128 = vmatpush2.bf16.msra.mxu0 0
    %3129 = vmatprep.mubr.bf16.mxu0 0
    %3130 = vmatmul.mubr.bf16.gmra.mxu0 %v3095
    %v3131 = vpop.f32.mrf.mxu0
    %v3132 = vadd.f32 0.0, %v3131
    %v3133 = vpop.f32.mrf.mxu0
    %v3134 = vpop.f32.mrf.mxu0
    %v3135 = vadd.f32 0.0, %v3134
    %v3136 = vpop.f32.mrf.mxu0
    %3137 = vdwg.mxu0
    %3140 = vrot.lane.b32.xlu0 %v2868, 32
    %v3141 = vpop.permute.xlu0 %3140
    %3142 = vrot.lane.b32.xlu0 %v2871, 32
    %v3143 = vpop.permute.xlu0 %3142
    %3148 = vrot.lane.b32.xlu0 %v2912, 64
    %v3149 = vpop.permute.xlu0 %3148
    %3150 = vrot.lane.b32.xlu0 %v2915, 64
    %v3151 = vpop.permute.xlu0 %3150
    %3156 = vrot.lane.b32.xlu0 %v2956, 96
    %v3157 = vpop.permute.xlu0 %3156
    %3158 = vrot.lane.b32.xlu0 %v2959, 96
    %v3159 = vpop.permute.xlu0 %3158
    %v3162 = vsel %vm625, %v2824, %v3141
    %v3163 = vsel %vm625, %v2827, %v3143
    %v3164 = vsel %vm1597, %v3162, %v3149
    %v3165 = vsel %vm1597, %v3163, %v3151
    %v3166 = vsel %vm1600, %v3164, %v3157
    %v3167 = vsel %vm1600, %v3165, %v3159
    %3170 = vrot.lane.b32.xlu0 %v3044, 32
    %v3171 = vpop.permute.xlu0 %3170
    %3172 = vrot.lane.b32.xlu0 %v3047, 32
    %v3173 = vpop.permute.xlu0 %3172
    %3178 = vrot.lane.b32.xlu0 %v3088, 64
    %v3179 = vpop.permute.xlu0 %3178
    %3180 = vrot.lane.b32.xlu0 %v3091, 64
    %v3181 = vpop.permute.xlu0 %3180
    %3186 = vrot.lane.b32.xlu0 %v3132, 96
    %v3187 = vpop.permute.xlu0 %3186
    %3188 = vrot.lane.b32.xlu0 %v3135, 96
    %v3189 = vpop.permute.xlu0 %3188
    %v3192 = vsel %vm625, %v3000, %v3171
    %v3193 = vsel %vm625, %v3003, %v3173
    %v3194 = vsel %vm1597, %v3192, %v3179
    %v3195 = vsel %vm1597, %v3193, %v3181
    %v3196 = vsel %vm1600, %v3194, %v3187
    %v3197 = vsel %vm1600, %v3195, %v3189
    %v3198 = vpack.c.bf16 %v3167, %v3166
    %v3199 = vpack.c.bf16 %v3197, %v3196
    %v3200 = vld [vmem:[#allocation16] sm:$0xf]
    %v3201 = vld [vmem:[#allocation16 + $0x4] sm:$0xf]
    %v3202 = vld [vmem:[#allocation16 + $0x8] sm:$0xf]
    %v3203 = vld [vmem:[#allocation16 + $0xc] sm:$0xf]
    %v3204 = vld [vmem:[#allocation16 + $0x10] sm:$0xf]
    %v3205 = vld [vmem:[#allocation16 + $0x14] sm:$0xf]
    %v3206 = vld [vmem:[#allocation16 + $0x18] sm:$0xf]
    %v3207 = vld [vmem:[#allocation16 + $0x1c] sm:$0xf]
    %v3208 = vld [vmem:[#allocation16 + $0x20] sm:$0xf]
    %v3209 = vld [vmem:[#allocation16 + $0x24] sm:$0xf]
    %v3210 = vld [vmem:[#allocation16 + $0x28] sm:$0xf]
    %v3211 = vld [vmem:[#allocation16 + $0x2c] sm:$0xf]
    %v3212 = vld [vmem:[#allocation16 + $0x30] sm:$0xf]
    %v3213 = vld [vmem:[#allocation16 + $0x34] sm:$0xf]
    %v3214 = vld [vmem:[#allocation16 + $0x38] sm:$0xf]
    %v3215 = vld [vmem:[#allocation16 + $0x3c] sm:$0xf]
    %v3216 = vld [vmem:[%s13] sm:$0x1]
    %v3218 = vlaneseq
    %v3219 = vshrl.u32 %v3218, 7
    %v3220 = vsub.s32 0, %v3219
    %v3221 = vrot.slane %v3216, %v3220
    %v3239 = vunpack.c.l.b16 %v3200
    %v3240 = vunpack.c.l.b16 %v3201
    %v3241 = vunpack.c.l.b16 %v3202
    %v3242 = vunpack.c.l.b16 %v3203
    %v3243 = vunpack.c.l.b16 %v3204
    %v3244 = vunpack.c.l.b16 %v3205
    %v3245 = vunpack.c.l.b16 %v3206
    %v3246 = vunpack.c.l.b16 %v3207
    %v3247 = vunpack.c.l.b16 %v3208
    %v3248 = vunpack.c.l.b16 %v3209
    %v3249 = vunpack.c.l.b16 %v3210
    %v3250 = vunpack.c.l.b16 %v3211
    %v3251 = vunpack.c.l.b16 %v3212
    %v3252 = vunpack.c.l.b16 %v3213
    %v3253 = vunpack.c.l.b16 %v3214
    %v3254 = vunpack.c.l.b16 %v3215
    %v3255 = vpack.c.b16 %v3240, %v3239
    %v3256 = vpack.c.b16 %v3242, %v3241
    %v3257 = vpack.c.b16 %v3244, %v3243
    %v3258 = vpack.c.b16 %v3246, %v3245
    %v3259 = vpack.c.b16 %v3248, %v3247
    %v3260 = vpack.c.b16 %v3250, %v3249
    %v3261 = vpack.c.b16 %v3252, %v3251
    %v3262 = vpack.c.b16 %v3254, %v3253
    %3271 = vmatprep.subr.bf16.mxu0 0
    %3272 = vmatpush1.bf16.msra.mxu0 %v3262
    %3273 = vmatprep.subr.bf16.mxu0 0
    %3274 = vmatpush1.bf16.msra.mxu0 %v3261
    %3275 = vmatprep.subr.bf16.mxu0 0
    %3276 = vmatpush1.bf16.msra.mxu0 %v3260
    %3277 = vmatprep.subr.bf16.mxu0 0
    %3278 = vmatpush1.bf16.msra.mxu0 %v3259
    %3279 = vmatprep.subr.bf16.mxu0 0
    %3280 = vmatpush1.bf16.msra.mxu0 %v3258
    %3281 = vmatprep.subr.bf16.mxu0 0
    %3282 = vmatpush1.bf16.msra.mxu0 %v3257
    %3283 = vmatprep.subr.bf16.mxu0 0
    %3284 = vmatpush1.bf16.msra.mxu0 %v3256
    %3285 = vmatprep.subr.bf16.mxu0 0
    %3286 = vmatpush1.bf16.msra.mxu0 %v3255
    %3287 = vmatprep.subr.bf16.mxu0 0
    %3288 = vmatpush2.bf16.msra.mxu0 0
    %3289 = vmatprep.subr.bf16.mxu0 0
    %3290 = vmatpush2.bf16.msra.mxu0 0
    %3291 = vmatprep.subr.bf16.mxu0 0
    %3292 = vmatpush2.bf16.msra.mxu0 0
    %3293 = vmatprep.subr.bf16.mxu0 0
    %3294 = vmatpush2.bf16.msra.mxu0 0
    %3295 = vmatprep.subr.bf16.mxu0 0
    %3296 = vmatpush2.bf16.msra.mxu0 0
    %3297 = vmatprep.subr.bf16.mxu0 0
    %3298 = vmatpush2.bf16.msra.mxu0 0
    %3299 = vmatprep.subr.bf16.mxu0 0
    %3300 = vmatpush2.bf16.msra.mxu0 0
    %3301 = vmatprep.subr.bf16.mxu0 0
    %3302 = vmatpush2.bf16.msra.mxu0 0
    %3303 = vmatprep.mubr.bf16.mxu0 0
    %3304 = vmatmul.mubr.bf16.gmra.mxu0 %v3198
    %v3305 = vpop.f32.mrf.mxu0
    %v3306 = vadd.f32 %v3221, %v3305
    %v3307 = vpop.f32.mrf.mxu0
    %v3308 = vpop.f32.mrf.mxu0
    %v3309 = vadd.f32 %v3221, %v3308
    %v3310 = vpop.f32.mrf.mxu0
    %3311 = vmatprep.mubr.bf16.mxu0 0
    %3312 = vmatmul.mubr.bf16.gmra.mxu0 %v3199
    %v3313 = vpop.f32.mrf.mxu0
    %v3314 = vadd.f32 %v3221, %v3313
    %v3315 = vpop.f32.mrf.mxu0
    %v3316 = vpop.f32.mrf.mxu0
    %v3317 = vadd.f32 %v3221, %v3316
    %v3318 = vpop.f32.mrf.mxu0
    %3319 = vdwg.mxu0
    %v3320 = vadd.f32 %v1755, %v3306
    %v3321 = vadd.f32 %v1756, %v3309
    %v3322 = vadd.f32 %v1757, %v3314
    %v3323 = vadd.f32 %v1758, %v3317
    %3324 = vadd.xlane.f32.xlu0 %v3320
    %v3325 = vpop.xlane.xlu0 %3324
    %3326 = vadd.xlane.f32.xlu0 %v3321
    %v3327 = vpop.xlane.xlu0 %3326
    %3328 = vadd.xlane.f32.xlu0 %v3322
    %v3329 = vpop.xlane.xlu0 %3328
    %3330 = vadd.xlane.f32.xlu0 %v3323
    %v3331 = vpop.xlane.xlu0 %3330
    %v3332 = vmul.f32 %v3325, %v237
    %v3333 = vmul.f32 %v3327, %v237
    %v3334 = vmul.f32 %v3329, %v237
    %v3335 = vmul.f32 %v3331, %v237
    %v3336 = vsub.f32 %v3320, %v3332
    %v3337 = vsub.f32 %v3321, %v3333
    %v3338 = vsub.f32 %v3322, %v3334
    %v3339 = vsub.f32 %v3323, %v3335
    %v3340 = vmul.f32 %v3336, %v3336
    %v3341 = vmul.f32 %v3337, %v3337
    %v3342 = vmul.f32 %v3338, %v3338
    %v3343 = vmul.f32 %v3339, %v3339
    %3344 = vadd.xlane.f32.xlu0 %v3340
    %v3345 = vpop.xlane.xlu0 %3344
    %3346 = vadd.xlane.f32.xlu0 %v3341
    %v3347 = vpop.xlane.xlu0 %3346
    %3348 = vadd.xlane.f32.xlu0 %v3342
    %v3349 = vpop.xlane.xlu0 %3348
    %3350 = vadd.xlane.f32.xlu0 %v3343
    %v3351 = vpop.xlane.xlu0 %3350
    %v3352 = vmul.f32 %v3345, %v237
    %v3353 = vmul.f32 %v3347, %v237
    %v3354 = vmul.f32 %v3349, %v237
    %v3355 = vmul.f32 %v3351, %v237
    %v3356 = vadd.f32 %v3352, 1e-05
    %v3357 = vadd.f32 %v3353, 1e-05
    %v3358 = vadd.f32 %v3354, 1e-05
    %v3359 = vadd.f32 %v3355, 1e-05
    %v3360 = vrsqrt.pop %v3356
    %v3361 = vrsqrt.pop %v3357
    %v3362 = vrsqrt.pop %v3358
    %v3363 = vrsqrt.pop %v3359
    %v3364 = vmul.f32 %v3336, %v3360
    %v3365 = vmul.f32 %v3337, %v3361
    %v3366 = vmul.f32 %v3338, %v3362
    %v3367 = vmul.f32 %v3339, %v3363
    %v3368 = vlaneseq
    %v3369 = vshrl.u32 %v3368, 7
    %v3370 = vsub.s32 4, %v3369
    %v3371 = vrot.slane %v228, %v3370
    %v3372 = vmul.f32 %v3364, %v3371
    %v3373 = vmul.f32 %v3365, %v3371
    %v3374 = vmul.f32 %v3366, %v3371
    %v3375 = vmul.f32 %v3367, %v3371
    %v3376 = vlaneseq
    %v3377 = vshrl.u32 %v3376, 7
    %v3378 = vsub.s32 5, %v3377
    %v3379 = vrot.slane %v228, %v3378
    %v3380 = vadd.f32 %v3372, %v3379
    %v3381 = vadd.f32 %v3373, %v3379
    %v3382 = vadd.f32 %v3374, %v3379
    %v3383 = vadd.f32 %v3375, %v3379
    %v3384 = vpack.c.bf16 %v3381, %v3380
    %v3385 = vpack.c.bf16 %v3383, %v3382
    %v3386 = vld [vmem:[#allocation17] sm:$0xff]
    %v3387 = vld [vmem:[#allocation17 + $0x8] sm:$0xff]
    %v3388 = vld [vmem:[#allocation17 + $0x10] sm:$0xff]
    %v3389 = vld [vmem:[#allocation17 + $0x18] sm:$0xff]
    %v3390 = vld [vmem:[#allocation17 + $0x20] sm:$0xff]
    %v3391 = vld [vmem:[#allocation17 + $0x28] sm:$0xff]
    %v3392 = vld [vmem:[#allocation17 + $0x30] sm:$0xff]
    %v3393 = vld [vmem:[#allocation17 + $0x38] sm:$0xff]
    %v3394 = vld [vmem:[#allocation17 + $0x40] sm:$0xff]
    %v3395 = vld [vmem:[#allocation17 + $0x48] sm:$0xff]
    %v3396 = vld [vmem:[#allocation17 + $0x50] sm:$0xff]
    %v3397 = vld [vmem:[#allocation17 + $0x58] sm:$0xff]
    %v3398 = vld [vmem:[#allocation17 + $0x60] sm:$0xff]
    %v3399 = vld [vmem:[#allocation17 + $0x68] sm:$0xff]
    %v3400 = vld [vmem:[#allocation17 + $0x70] sm:$0xff]
    %v3401 = vld [vmem:[#allocation17 + $0x78] sm:$0xff]
    %v3402 = vld [vmem:[%s15] sm:$0x3]
    %v3404 = vlaneseq
    %v3405 = vshrl.u32 %v3404, 7
    %v3406 = vsub.s32 0, %v3405
    %v3407 = vrot.slane %v3402, %v3406
    %v3408 = vlaneseq
    %v3409 = vshrl.u32 %v3408, 7
    %v3410 = vsub.s32 1, %v3409
    %v3411 = vrot.slane %v3402, %v3410
    %v3430 = vunpack.c.l.b16 %v3386
    %v3431 = vunpack.c.h.b16 %v3386
    %v3432 = vunpack.c.l.b16 %v3387
    %v3433 = vunpack.c.h.b16 %v3387
    %v3434 = vunpack.c.l.b16 %v3388
    %v3435 = vunpack.c.h.b16 %v3388
    %v3436 = vunpack.c.l.b16 %v3389
    %v3437 = vunpack.c.h.b16 %v3389
    %v3438 = vunpack.c.l.b16 %v3390
    %v3439 = vunpack.c.h.b16 %v3390
    %v3440 = vunpack.c.l.b16 %v3391
    %v3441 = vunpack.c.h.b16 %v3391
    %v3442 = vunpack.c.l.b16 %v3392
    %v3443 = vunpack.c.h.b16 %v3392
    %v3444 = vunpack.c.l.b16 %v3393
    %v3445 = vunpack.c.h.b16 %v3393
    %v3446 = vunpack.c.l.b16 %v3394
    %v3447 = vunpack.c.h.b16 %v3394
    %v3448 = vunpack.c.l.b16 %v3395
    %v3449 = vunpack.c.h.b16 %v3395
    %v3450 = vunpack.c.l.b16 %v3396
    %v3451 = vunpack.c.h.b16 %v3396
    %v3452 = vunpack.c.l.b16 %v3397
    %v3453 = vunpack.c.h.b16 %v3397
    %v3454 = vunpack.c.l.b16 %v3398
    %v3455 = vunpack.c.h.b16 %v3398
    %v3456 = vunpack.c.l.b16 %v3399
    %v3457 = vunpack.c.h.b16 %v3399
    %v3458 = vunpack.c.l.b16 %v3400
    %v3459 = vunpack.c.h.b16 %v3400
    %v3460 = vunpack.c.l.b16 %v3401
    %v3461 = vunpack.c.h.b16 %v3401
    %v3462 = vpack.c.b16 %v3432, %v3430
    %v3463 = vpack.c.b16 %v3433, %v3431
    %v3464 = vpack.c.b16 %v3436, %v3434
    %v3465 = vpack.c.b16 %v3437, %v3435
    %v3466 = vpack.c.b16 %v3440, %v3438
    %v3467 = vpack.c.b16 %v3441, %v3439
    %v3468 = vpack.c.b16 %v3444, %v3442
    %v3469 = vpack.c.b16 %v3445, %v3443
    %v3470 = vpack.c.b16 %v3448, %v3446
    %v3471 = vpack.c.b16 %v3449, %v3447
    %v3472 = vpack.c.b16 %v3452, %v3450
    %v3473 = vpack.c.b16 %v3453, %v3451
    %v3474 = vpack.c.b16 %v3456, %v3454
    %v3475 = vpack.c.b16 %v3457, %v3455
    %v3476 = vpack.c.b16 %v3460, %v3458
    %v3477 = vpack.c.b16 %v3461, %v3459
    %3494 = vmatprep.subr.bf16.mxu0 %v3477
    %3495 = vmatpush1.bf16.msra.mxu0 %v3476
    %3496 = vmatprep.subr.bf16.mxu0 %v3475
    %3497 = vmatpush1.bf16.msra.mxu0 %v3474
    %3498 = vmatprep.subr.bf16.mxu0 %v3473
    %3499 = vmatpush1.bf16.msra.mxu0 %v3472
    %3500 = vmatprep.subr.bf16.mxu0 %v3471
    %3501 = vmatpush1.bf16.msra.mxu0 %v3470
    %3502 = vmatprep.subr.bf16.mxu0 %v3469
    %3503 = vmatpush1.bf16.msra.mxu0 %v3468
    %3504 = vmatprep.subr.bf16.mxu0 %v3467
    %3505 = vmatpush1.bf16.msra.mxu0 %v3466
    %3506 = vmatprep.subr.bf16.mxu0 %v3465
    %3507 = vmatpush1.bf16.msra.mxu0 %v3464
    %3508 = vmatprep.subr.bf16.mxu0 %v3463
    %3509 = vmatpush1.bf16.msra.mxu0 %v3462
    %3510 = vmatprep.subr.bf16.mxu0 0
    %3511 = vmatpush2.bf16.msra.mxu0 0
    %3512 = vmatprep.subr.bf16.mxu0 0
    %3513 = vmatpush2.bf16.msra.mxu0 0
    %3514 = vmatprep.subr.bf16.mxu0 0
    %3515 = vmatpush2.bf16.msra.mxu0 0
    %3516 = vmatprep.subr.bf16.mxu0 0
    %3517 = vmatpush2.bf16.msra.mxu0 0
    %3518 = vmatprep.subr.bf16.mxu0 0
    %3519 = vmatpush2.bf16.msra.mxu0 0
    %3520 = vmatprep.subr.bf16.mxu0 0
    %3521 = vmatpush2.bf16.msra.mxu0 0
    %3522 = vmatprep.subr.bf16.mxu0 0
    %3523 = vmatpush2.bf16.msra.mxu0 0
    %3524 = vmatprep.subr.bf16.mxu0 0
    %3525 = vmatpush2.bf16.msra.mxu0 0
    %3526 = vmatprep.mubr.bf16.mxu0 0
    %3527 = vmatmul.mubr.bf16.gmra.mxu0 %v3384
    %v3528 = vpop.f32.mrf.mxu0
    %v3529 = vadd.f32 %v3407, %v3528
    %v3530 = vpop.f32.mrf.mxu0
    %v3531 = vadd.f32 %v3411, %v3530
    %v3532 = vpop.f32.mrf.mxu0
    %v3533 = vadd.f32 %v3407, %v3532
    %v3534 = vpop.f32.mrf.mxu0
    %v3535 = vadd.f32 %v3411, %v3534
    %3536 = vmatprep.mubr.bf16.mxu0 0
    %3537 = vmatmul.mubr.bf16.gmra.mxu0 %v3385
    %v3538 = vpop.f32.mrf.mxu0
    %v3539 = vadd.f32 %v3407, %v3538
    %v3540 = vpop.f32.mrf.mxu0
    %v3541 = vadd.f32 %v3411, %v3540
    %v3542 = vpop.f32.mrf.mxu0
    %v3543 = vadd.f32 %v3407, %v3542
    %v3544 = vpop.f32.mrf.mxu0
    %v3545 = vadd.f32 %v3411, %v3544
    %3546 = vdwg.mxu0
    %v3547 = vmax.f32 %v3529, 0.0
    %v3548 = vmax.f32 %v3531, 0.0
    %v3549 = vmax.f32 %v3533, 0.0
    %v3550 = vmax.f32 %v3535, 0.0
    %v3551 = vmax.f32 %v3539, 0.0
    %v3552 = vmax.f32 %v3541, 0.0
    %v3553 = vmax.f32 %v3543, 0.0
    %v3554 = vmax.f32 %v3545, 0.0
    %v3555 = vpack.c.bf16 %v3549, %v3547
    %v3556 = vpack.c.bf16 %v3550, %v3548
    %v3557 = vpack.c.bf16 %v3553, %v3551
    %v3558 = vpack.c.bf16 %v3554, %v3552
    %v3559 = vld [vmem:[#allocation19] sm:$0xf]
    %v3560 = vld [vmem:[#allocation19 + $0x4] sm:$0xf]
    %v3561 = vld [vmem:[#allocation19 + $0x8] sm:$0xf]
    %v3562 = vld [vmem:[#allocation19 + $0xc] sm:$0xf]
    %v3563 = vld [vmem:[#allocation19 + $0x10] sm:$0xf]
    %v3564 = vld [vmem:[#allocation19 + $0x14] sm:$0xf]
    %v3565 = vld [vmem:[#allocation19 + $0x18] sm:$0xf]
    %v3566 = vld [vmem:[#allocation19 + $0x1c] sm:$0xf]
    %v3567 = vld [vmem:[#allocation19 + $0x20] sm:$0xf]
    %v3568 = vld [vmem:[#allocation19 + $0x24] sm:$0xf]
    %v3569 = vld [vmem:[#allocation19 + $0x28] sm:$0xf]
    %v3570 = vld [vmem:[#allocation19 + $0x2c] sm:$0xf]
    %v3571 = vld [vmem:[#allocation19 + $0x30] sm:$0xf]
    %v3572 = vld [vmem:[#allocation19 + $0x34] sm:$0xf]
    %v3573 = vld [vmem:[#allocation19 + $0x38] sm:$0xf]
    %v3574 = vld [vmem:[#allocation19 + $0x3c] sm:$0xf]
    %v3575 = vld [vmem:[#allocation19 + $0x40] sm:$0xf]
    %v3576 = vld [vmem:[#allocation19 + $0x44] sm:$0xf]
    %v3577 = vld [vmem:[#allocation19 + $0x48] sm:$0xf]
    %v3578 = vld [vmem:[#allocation19 + $0x4c] sm:$0xf]
    %v3579 = vld [vmem:[#allocation19 + $0x50] sm:$0xf]
    %v3580 = vld [vmem:[#allocation19 + $0x54] sm:$0xf]
    %v3581 = vld [vmem:[#allocation19 + $0x58] sm:$0xf]
    %v3582 = vld [vmem:[#allocation19 + $0x5c] sm:$0xf]
    %v3583 = vld [vmem:[#allocation19 + $0x60] sm:$0xf]
    %v3584 = vld [vmem:[#allocation19 + $0x64] sm:$0xf]
    %v3585 = vld [vmem:[#allocation19 + $0x68] sm:$0xf]
    %v3586 = vld [vmem:[#allocation19 + $0x6c] sm:$0xf]
    %v3587 = vld [vmem:[#allocation19 + $0x70] sm:$0xf]
    %v3588 = vld [vmem:[#allocation19 + $0x74] sm:$0xf]
    %v3589 = vld [vmem:[#allocation19 + $0x78] sm:$0xf]
    %v3590 = vld [vmem:[#allocation19 + $0x7c] sm:$0xf]
    %v3591 = vld [vmem:[%s17] sm:$0x1]
    %v3593 = vlaneseq
    %v3594 = vshrl.u32 %v3593, 7
    %v3595 = vsub.s32 0, %v3594
    %v3596 = vrot.slane %v3591, %v3595
    %v3630 = vunpack.c.l.b16 %v3559
    %v3631 = vunpack.c.l.b16 %v3560
    %v3632 = vunpack.c.l.b16 %v3561
    %v3633 = vunpack.c.l.b16 %v3562
    %v3634 = vunpack.c.l.b16 %v3563
    %v3635 = vunpack.c.l.b16 %v3564
    %v3636 = vunpack.c.l.b16 %v3565
    %v3637 = vunpack.c.l.b16 %v3566
    %v3638 = vunpack.c.l.b16 %v3567
    %v3639 = vunpack.c.l.b16 %v3568
    %v3640 = vunpack.c.l.b16 %v3569
    %v3641 = vunpack.c.l.b16 %v3570
    %v3642 = vunpack.c.l.b16 %v3571
    %v3643 = vunpack.c.l.b16 %v3572
    %v3644 = vunpack.c.l.b16 %v3573
    %v3645 = vunpack.c.l.b16 %v3574
    %v3646 = vunpack.c.l.b16 %v3575
    %v3647 = vunpack.c.l.b16 %v3576
    %v3648 = vunpack.c.l.b16 %v3577
    %v3649 = vunpack.c.l.b16 %v3578
    %v3650 = vunpack.c.l.b16 %v3579
    %v3651 = vunpack.c.l.b16 %v3580
    %v3652 = vunpack.c.l.b16 %v3581
    %v3653 = vunpack.c.l.b16 %v3582
    %v3654 = vunpack.c.l.b16 %v3583
    %v3655 = vunpack.c.l.b16 %v3584
    %v3656 = vunpack.c.l.b16 %v3585
    %v3657 = vunpack.c.l.b16 %v3586
    %v3658 = vunpack.c.l.b16 %v3587
    %v3659 = vunpack.c.l.b16 %v3588
    %v3660 = vunpack.c.l.b16 %v3589
    %v3661 = vunpack.c.l.b16 %v3590
    %v3662 = vpack.c.b16 %v3631, %v3630
    %v3663 = vpack.c.b16 %v3633, %v3632
    %v3664 = vpack.c.b16 %v3635, %v3634
    %v3665 = vpack.c.b16 %v3637, %v3636
    %v3666 = vpack.c.b16 %v3639, %v3638
    %v3667 = vpack.c.b16 %v3641, %v3640
    %v3668 = vpack.c.b16 %v3643, %v3642
    %v3669 = vpack.c.b16 %v3645, %v3644
    %v3670 = vpack.c.b16 %v3647, %v3646
    %v3671 = vpack.c.b16 %v3649, %v3648
    %v3672 = vpack.c.b16 %v3651, %v3650
    %v3673 = vpack.c.b16 %v3653, %v3652
    %v3674 = vpack.c.b16 %v3655, %v3654
    %v3675 = vpack.c.b16 %v3657, %v3656
    %v3676 = vpack.c.b16 %v3659, %v3658
    %v3677 = vpack.c.b16 %v3661, %v3660
    %3694 = vmatprep.subr.bf16.mxu0 0
    %3695 = vmatpush1.bf16.msra.mxu0 %v3669
    %3696 = vmatprep.subr.bf16.mxu0 0
    %3697 = vmatpush1.bf16.msra.mxu0 %v3668
    %3698 = vmatprep.subr.bf16.mxu0 0
    %3699 = vmatpush1.bf16.msra.mxu0 %v3667
    %3700 = vmatprep.subr.bf16.mxu0 0
    %3701 = vmatpush1.bf16.msra.mxu0 %v3666
    %3702 = vmatprep.subr.bf16.mxu0 0
    %3703 = vmatpush1.bf16.msra.mxu0 %v3665
    %3704 = vmatprep.subr.bf16.mxu0 0
    %3705 = vmatpush1.bf16.msra.mxu0 %v3664
    %3706 = vmatprep.subr.bf16.mxu0 0
    %3707 = vmatpush1.bf16.msra.mxu0 %v3663
    %3708 = vmatprep.subr.bf16.mxu0 0
    %3709 = vmatpush1.bf16.msra.mxu0 %v3662
    %3710 = vmatprep.subr.bf16.mxu0 0
    %3711 = vmatpush2.bf16.msra.mxu0 %v3677
    %3712 = vmatprep.subr.bf16.mxu0 0
    %3713 = vmatpush2.bf16.msra.mxu0 %v3676
    %3714 = vmatprep.subr.bf16.mxu0 0
    %3715 = vmatpush2.bf16.msra.mxu0 %v3675
    %3716 = vmatprep.subr.bf16.mxu0 0
    %3717 = vmatpush2.bf16.msra.mxu0 %v3674
    %3718 = vmatprep.subr.bf16.mxu0 0
    %3719 = vmatpush2.bf16.msra.mxu0 %v3673
    %3720 = vmatprep.subr.bf16.mxu0 0
    %3721 = vmatpush2.bf16.msra.mxu0 %v3672
    %3722 = vmatprep.subr.bf16.mxu0 0
    %3723 = vmatpush2.bf16.msra.mxu0 %v3671
    %3724 = vmatprep.subr.bf16.mxu0 0
    %3725 = vmatpush2.bf16.msra.mxu0 %v3670
    %3726 = vmatprep.mubr.bf16.mxu0 %v3556
    %3727 = vmatmul.mubr.bf16.gmra.mxu0 %v3555
    %v3728 = vpop.f32.mrf.mxu0
    %v3729 = vadd.f32 %v3596, %v3728
    %v3730 = vpop.f32.mrf.mxu0
    %v3731 = vpop.f32.mrf.mxu0
    %v3732 = vadd.f32 %v3596, %v3731
    %v3733 = vpop.f32.mrf.mxu0
    %3734 = vmatprep.mubr.bf16.mxu0 %v3558
    %3735 = vmatmul.mubr.bf16.gmra.mxu0 %v3557
    %v3736 = vpop.f32.mrf.mxu0
    %v3737 = vadd.f32 %v3596, %v3736
    %v3738 = vpop.f32.mrf.mxu0
    %v3739 = vpop.f32.mrf.mxu0
    %v3740 = vadd.f32 %v3596, %v3739
    %v3741 = vpop.f32.mrf.mxu0
    %3742 = vdwg.mxu0
    %v3743 = vadd.f32 %v3320, %v3729
    %v3744 = vadd.f32 %v3321, %v3732
    %v3745 = vadd.f32 %v3322, %v3737
    %v3746 = vadd.f32 %v3323, %v3740
    %3747 = vst [vmem:[#allocation20] sm:$0xff] %v3743
    %3748 = vst [vmem:[#allocation20 + $0x8] sm:$0xff] %v3744
    %3749 = vst [vmem:[#allocation20 + $0x10] sm:$0xff] %v3745
    %3750 = vst [vmem:[#allocation20 + $0x18] sm:$0xff] %v3746
    // Predicated region
    $region118: #{tpu_custom_call.1} parent=1 // pred_check
      _
    $region119: #{tpu_custom_call.1} parent=1 // pred_check_branch
      %3752 = sbr.rel (0) target = $region121
    $region120: #{tpu_custom_call.1} parent=1 // pred_region
      %s3754 = ssub.s32 512, 512
      %3755 = vsyncadd [#allocation4], %s3754
      %s3756 = sshll.u32 [#allocation20], 4
      %s3757 = int_to_ptr.vmem [resolvable:$true] %s3756
      %3762 = dma.vmem_to_hbm [thread:$0]  %s3757, 512, %s18, [#allocation4], 128, 128, 8
    $region121: #{tpu_custom_call.1} parent=1 // pred_fallthru
      _
    // Predicated region
    $region122: #{tpu_custom_call.1} parent=1 // pred_check
      _
    $region123: #{tpu_custom_call.1} parent=1 // pred_check_branch
      %3764 = sbr.rel (0) target = $region125
    $region124: #{tpu_custom_call.1} parent=1 // pred_region
      %3765 = dma.done [#allocation4], 512
    $region125: #{tpu_custom_call.1} parent=1 // pred_fallthru
      _
    %3766 = vsyncpa [#allocation3], 1
    %3767 = vsyncpa [#allocation6], 1
    %3768 = vsyncpa [#allocation9], 1
    %3769 = vsyncpa [#allocation12], 1
    %3770 = vsyncpa [#allocation15], 1
    %3771 = vsyncpa [#allocation18], 1
    %3772 = vsyncpa [#allocation4], 1

</llo_original>
